<compile_context>
chip_gen: v7x
topology: tpu7x:2x2x1
jax: 0.10.0
libtpu: 0.0.40
codegen_flags: <defaults>
</compile_context>

<pallas_src>
import functools

import jax
import jax.numpy as jnp
from jax import lax
from jax.experimental import pallas as pl
from jax.experimental.pallas import tpu as pltpu


# ----------------------------------------------------------------------------
# Small helpers
# ----------------------------------------------------------------------------
def _device_kind():
    try:
        return jax.devices()[0].device_kind.lower()
    except Exception:
        return ""


def _layer_norm(y, g, b):
    mu = jnp.mean(y, axis=-1, keepdims=True)
    var = jnp.mean((y - mu) ** 2, axis=-1, keepdims=True)
    return (y - mu) * lax.rsqrt(var + 1e-5) * g + b


def _pick_batch_tile(n, l, row_target, min_steps):
    """Largest per-step batch tile Bt (divisor of n) with Bt*l <= row_target rows,
    keeping at least `min_steps` grid steps when possible (v7x megacore)."""
    cands = [bt for bt in range(1, n + 1)
             if n % bt == 0 and bt * l <= max(row_target, l)]
    good = [bt for bt in cands if (n // bt) >= min_steps]
    return max(good) if good else max(cands)


def _vmem_limit_bytes(bt, L, D, qkv_w, n_head, d_v, d_inner, vecs_w, return_attn, kind):
    """Rough per-step VMEM need (double-buffered blocks + weights + intermediates),
    clamped to the detected generation's physical VMEM."""
    f32b, bf16b = 4, 2
    R = bt * L
    blocks = (bt * L * D + bt * L + bt * L * D) * f32b
    if return_attn:
        blocks += bt * n_head * L * L * bf16b
    weights = (D * qkv_w + n_head * d_v * D + D * d_inner + d_inner * D) * bf16b
    weights += 8 * vecs_w * f32b
    interm = R * (qkv_w + 4 * D + d_inner) * f32b + 2 * bt * n_head * L * L * f32b
    need = 2 * (blocks + weights) + interm
    phys_mib = 128 if ("v5" in kind or "v6" in kind) else 64   # v7x: 64 MiB / core
    return int(min(phys_mib * 2 ** 20, max(32 * 2 ** 20, 2 * need)))


# ----------------------------------------------------------------------------
# Pallas kernel: one full encoder layer for a tile of Bt stacked batch elements.
# ----------------------------------------------------------------------------
def _encoder_layer_kernel(x_ref, npad_ref, wqkv_ref, wo_ref, w1_ref, w2_ref, vecs_ref,
                          out_ref, *maybe_attn_ref,
                          n_head, d_k, d_v, use_bf16_exp):
    attn_ref = maybe_attn_ref[0] if maybe_attn_ref else None
    bf16, f32 = jnp.bfloat16, jnp.float32

    Bt, L, D = x_ref.shape
    H, dk, dv = n_head, d_k, d_v
    R = Bt * L
    qkv_w = 2 * H * dk + H * dv
    d_inner = w1_ref.shape[1]

    x = x_ref[...]                               # (Bt, L, D) f32
    npad = npad_ref[...]                         # (Bt, L, 1) f32, 1.0 = real token

    # Packed per-channel params (one DMA stream instead of ten small ones).
    bqkv = vecs_ref[0:1, :qkv_w]
    bo = vecs_ref[1:2, :D]
    ln1_g = vecs_ref[2:3, :D]
    ln1_b = vecs_ref[3:4, :D]
    b1 = vecs_ref[4:5, :d_inner]
    b2 = vecs_ref[5:6, :D]
    ln2_g = vecs_ref[6:7, :D]
    ln2_b = vecs_ref[7:8, :D]

    # ---- fused QKV projection: Bt*L rows through one full-width MXU matmul ----
    x2d = x.reshape(R, D)                        # collapse of leading dims (L % 8 == 0)
    xb = x2d.astype(bf16)                        # bf16 operands, f32 accumulation
    qkv = jnp.dot(xb, wqkv_ref[...], preferred_element_type=f32) + bqkv   # (R, qkv_w)

    q3 = qkv[:, :H * dk].reshape(Bt, L, H * dk).astype(bf16)
    k3 = qkv[:, H * dk:2 * H * dk].reshape(Bt, L, H * dk).astype(bf16)
    v3 = qkv[:, 2 * H * dk:].reshape(Bt, L, H * dv).astype(bf16)

    # Additive key-pad bias derived from non_pad_mask (no mask DMA); stays f32 so the
    # -1e9 fill never touches bf16.
    # TODO(synk): assumes slf_attn_mask is the key-pad broadcast of (1 - non_pad)^T;
    # a non-broadcast (e.g. causal) mask would need the full (L, L) mask as an input.
    keep = npad[..., 0][:, None, :]                              # (Bt, 1, L)
    bias = jnp.where(keep > 0.0, 0.0, -1e9).astype(f32)
    inv_temp = 1.0 / float(d_k) ** 0.5
    exp_dtype = bf16 if use_bf16_exp else f32    # bf16 EUP only on v6e/v7x

    ctx_heads = []
    attn_heads = []
    for h in range(H):                           # n_head is small & static -> unrolled
        qh = q3[:, :, h * dk:(h + 1) * dk]       # (Bt, L, dk) bf16
        kh = k3[:, :, h * dk:(h + 1) * dk]
        vh = v3[:, :, h * dv:(h + 1) * dv]
        # Batched over the Bt packed batch elements (single dot_general per head).
        s = jnp.einsum("bqd,bkd->bqk", qh, kh, preferred_element_type=f32)
        s = s * inv_temp + bias
        s = s - jnp.max(s, axis=-1, keepdims=True)
        p = jnp.exp(s.astype(exp_dtype))
        denom = jnp.sum(p.astype(f32), axis=-1, keepdims=True)
        attn = p.astype(f32) * pl.reciprocal(denom, approx=True)  # (Bt, L, L) f32
        if attn_ref is not None:
            attn_heads.append(attn)
        ctx_heads.append(jnp.einsum("bqk,bkd->bqd", attn.astype(bf16), vh,
                                    preferred_element_type=f32))

    if attn_ref is not None:
        # Single staged bf16 store of all heads (instead of H partial stores).
        attn_ref[...] = jnp.stack(attn_heads, axis=1).astype(attn_ref.dtype)

    # ---- single full-K-depth output projection over all heads ----
    ctx = jnp.concatenate(ctx_heads, axis=-1).reshape(R, H * dv)
    proj = jnp.dot(ctx.astype(bf16), wo_ref[...], preferred_element_type=f32) + bo

    # Attention residual + LayerNorm, then non-pad mask (all f32).
    npad2d = npad.reshape(R, 1)
    y = _layer_norm(proj + x2d, ln1_g, ln1_b) * npad2d

    # Position-wise feed forward (Conv1d k=1 == per-position linear) + residual + LN.
    h1 = jnp.maximum(
        jnp.dot(y.astype(bf16), w1_ref[...], preferred_element_type=f32) + b1, 0.0)
    h2 = jnp.dot(h1.astype(bf16), w2_ref[...], preferred_element_type=f32) + b2
    z = _layer_norm(h2 + y, ln2_g, ln2_b) * npad2d

    out_ref[...] = z.reshape(Bt, L, D).astype(out_ref.dtype)


# ----------------------------------------------------------------------------
# Wrapper: single fused pallas_call over the stacked (2*B) batch.
# ----------------------------------------------------------------------------
def _fused_encoder_layer(x, npad, params, *, n_head, d_k, d_v,
                         return_attn=True, attn_dtype=jnp.bfloat16):
    N, L, D = x.shape
    H = n_head
    bf16 = jnp.bfloat16

    kind = _device_kind()
    is_v5 = "v5" in kind
    is_v7 = ("v7" in kind) or ("7x" in kind)
    use_bf16_exp = ("v6" in kind) or is_v7           # no bf16 EUP/VPU on v5e

    # Per-generation row-block target; only v7x (2 TCs) needs >= 2 "parallel" steps.
    row_target = 128 if is_v5 else 256
    bt = _pick_batch_tile(N, L, row_target, min_steps=2 if is_v7 else 1)
    grid = (N // bt,)

    # bf16 matmul weights; Wq/Wk/Wv fused into one weight.
    wqkv = jnp.concatenate([params["wq"], params["wk"], params["wv"]], axis=1).astype(bf16)
    wo = params["wo"].astype(bf16)
    w1 = params["w1"].astype(bf16)
    w2 = params["w2"].astype(bf16)
    qkv_w = wqkv.shape[1]
    d_inner = w1.shape[1]

    # All small per-channel vectors packed into one (8, maxw) f32 input.
    rows = [jnp.concatenate([params["bq"], params["bk"], params["bv"]], axis=1),
            params["bo"], params["ln1_g"], params["ln1_b"],
            params["b1"], params["b2"], params["ln2_g"], params["ln2_b"]]
    maxw = max(int(r.shape[-1]) for r in rows)
    vecs = jnp.concatenate(
        [jnp.pad(r.reshape(1, -1).astype(jnp.float32),
                 ((0, 0), (0, maxw - int(r.shape[-1])))) for r in rows], axis=0)

    # TODO(synk): at production shapes (D~1k, d_inner~4k) single-buffer the constant
    # weight blocks or add an "arbitrary" K grid axis tiling w1/w2 over d_inner so
    # double-buffered weights fit v7x's 64 MiB VMEM.
    in_specs = [
        pl.BlockSpec((bt, L, D), lambda i: (i, 0, 0)),      # x (streamed)
        pl.BlockSpec((bt, L, 1), lambda i: (i, 0, 0)),      # non-pad multiplier
        pl.BlockSpec(wqkv.shape, lambda i: (0, 0)),         # resident weights
        pl.BlockSpec(wo.shape, lambda i: (0, 0)),
        pl.BlockSpec(w1.shape, lambda i: (0, 0)),
        pl.BlockSpec(w2.shape, lambda i: (0, 0)),
        pl.BlockSpec(vecs.shape, lambda i: (0, 0)),
    ]
    out_spec_x = pl.BlockSpec((bt, L, D), lambda i: (i, 0, 0))
    out_shape_x = jax.ShapeDtypeStruct((N, L, D), jnp.float32)
    if return_attn:
        out_specs = (out_spec_x,
                     pl.BlockSpec((bt, H, L, L), lambda i: (i, 0, 0, 0)))
        out_shape = (out_shape_x,
                     jax.ShapeDtypeStruct((N, H, L, L), attn_dtype))
    else:
        out_specs = out_spec_x
        out_shape = out_shape_x

    kernel = functools.partial(_encoder_layer_kernel, n_head=H, d_k=d_k, d_v=d_v,
                               use_bf16_exp=use_bf16_exp)
    return pl.pallas_call(
        kernel,
        out_shape=out_shape,
        grid=grid,
        in_specs=in_specs,
        out_specs=out_specs,
        compiler_params=pltpu.CompilerParams(
            dimension_semantics=("parallel",),
            vmem_limit_bytes=_vmem_limit_bytes(bt, L, D, qkv_w, H, d_v, d_inner,
                                               maxw, return_attn, kind)),
    )(x.astype(jnp.float32), npad.astype(jnp.float32), wqkv, wo, w1, w2, vecs)


def graph_encoder_layer(params, g1, g2, non_pad_mask, slf_attn_mask=(None, None), *,
                        n_head, d_k, d_v, return_attn=True, attn_dtype=jnp.bfloat16):
    """Mirrors GraphEncoderLayer.forward: the same attention/FFN weights are applied to
    both graphs, fused into ONE pallas_call over the stacked 2*B batch.  The attention
    key-pad bias is derived from non_pad_mask (slf_attn_mask is assumed to be its
    key-pad broadcast, the standard construction)."""
    del slf_attn_mask  # TODO(synk): pass the full (L, L) mask if a non-key-pad mask is needed.
    B = g1.shape[0]
    x = jnp.concatenate([g1, g2], axis=0)
    npad = jnp.concatenate([non_pad_mask[0], non_pad_mask[1]], axis=0)
    res = _fused_encoder_layer(x, npad, params, n_head=n_head, d_k=d_k, d_v=d_v,
                               return_attn=return_attn, attn_dtype=attn_dtype)
    if return_attn:
        out, attn = res
        return out[:B], out[B:], attn[:B], attn[B:]
    out = res
    return out[:B], out[B:]


# ----------------------------------------------------------------------------
# Pure-JAX reference (bf16 matmul operands / f32 accumulate, exact f32 softmax).
# ----------------------------------------------------------------------------
def encoder_layer_ref(x, amask, npad, p, *, n_head, d_k, d_v):
    bf = jnp.bfloat16
    B, L, D = x.shape

    def mm(a, w):
        return jnp.einsum("...ij,jk->...ik", a.astype(bf), w.astype(bf),
                          preferred_element_type=jnp.float32)

    q = mm(x, p["wq"]) + p["bq"]
    k = mm(x, p["wk"]) + p["bk"]
    v = mm(x, p["wv"]) + p["bv"]
    qh = q.astype(bf).reshape(B, L, n_head, d_k).transpose(0, 2, 1, 3)
    kh = k.astype(bf).reshape(B, L, n_head, d_k).transpose(0, 2, 1, 3)
    vh = v.astype(bf).reshape(B, L, n_head, d_v).transpose(0, 2, 1, 3)
    scores = jnp.einsum("bhqd,bhkd->bhqk", qh, kh,
                        preferred_element_type=jnp.float32) / jnp.sqrt(jnp.float32(d_k))
    scores = jnp.where(amask[:, None] > 0, jnp.float32(-1e9), scores)
    attn = jax.nn.softmax(scores, axis=-1)
    ctx = jnp.einsum("bhqk,bhkd->bhqd", attn.astype(bf), vh,
                     preferred_element_type=jnp.float32)
    ctx = ctx.transpose(0, 2, 1, 3).reshape(B, L, n_head * d_v)
    proj = mm(ctx, p["wo"]) + p["bo"]

    def ln(y, g, b):
        mu = jnp.mean(y, -1, keepdims=True)
        var = jnp.mean((y - mu) ** 2, -1, keepdims=True)
        return (y - mu) * lax.rsqrt(var + 1e-5) * g + b

    y = ln(proj + x, p["ln1_g"], p["ln1_b"]) * npad
    h1 = jnp.maximum(mm(y, p["w1"]) + p["b1"], 0.0)
    z = ln(mm(h1, p["w2"]) + p["b2"] + y, p["ln2_g"], p["ln2_b"]) * npad
    return z, attn


def make_params(key, d_model, d_inner, n_head, d_k, d_v):
    ks = jax.random.split(key, 8)
    s = 0.05
    return {
        "wq": jax.random.normal(ks[0], (d_model, n_head * d_k), jnp.float32) * s,
        "bq": jax.random.normal(ks[1], (1, n_head * d_k), jnp.float32) * s,
        "wk": jax.random.normal(ks[2], (d_model, n_head * d_k), jnp.float32) * s,
        "bk": jax.random.normal(ks[3], (1, n_head * d_k), jnp.float32) * s,
        "wv": jax.random.normal(ks[4], (d_model, n_head * d_v), jnp.float32) * s,
        "bv": jax.random.normal(ks[5], (1, n_head * d_v), jnp.float32) * s,
        "wo": jax.random.normal(ks[6], (n_head * d_v, d_model), jnp.float32) * s,
        "bo": jnp.zeros((1, d_model), jnp.float32),
        "ln1_g": jnp.ones((1, d_model), jnp.float32),
        "ln1_b": jnp.zeros((1, d_model), jnp.float32),
        "w1": jax.random.normal(ks[7], (d_model, d_inner), jnp.float32) * s,
        "b1": jnp.zeros((1, d_inner), jnp.float32),
        "w2": jax.random.normal(jax.random.fold_in(key, 99),
                                (d_inner, d_model), jnp.float32) * s,
        "b2": jnp.zeros((1, d_model), jnp.float32),
        "ln2_g": jnp.ones((1, d_model), jnp.float32),
        "ln2_b": jnp.zeros((1, d_model), jnp.float32),
    }


if __name__ == "__main__":
    # d_model = 128 -> lane-dense main-output stores; L = 8 keeps sublane-block
    # reshapes free (L % 8 == 0).
    B, L = 4, 8
    d_model, d_inner, n_head, d_k, d_v = 128, 256, 4, 32, 32

    key = jax.random.PRNGKey(0)
    kp, k1, k2 = jax.random.split(key, 3)
    params = make_params(kp, d_model, d_inner, n_head, d_k, d_v)

    g1 = jax.random.normal(k1, (B, L, d_model), jnp.float32)
    g2 = jax.random.normal(k2, (B, L, d_model), jnp.float32)

    # Trailing-padded positions per batch element (never a fully-padded sequence, so
    # additive-bias softmax == masked_fill softmax).
    def make_pad(counts):
        return jnp.array([[0.0] * (L - c) + [1.0] * c for c in counts], jnp.float32)

    pad1 = make_pad([0, 1, 3, 0])
    pad2 = make_pad([2, 0, 1, 4])
    non_pad_mask = (1.0 - pad1[..., None], 1.0 - pad2[..., None])       # (B, L, 1)
    slf_attn_mask = (jnp.broadcast_to(pad1[:, None, :], (B, L, L)),     # (B, L, L)
                     jnp.broadcast_to(pad2[:, None, :], (B, L, L)))     # 1 = masked key

    g1_out, g2_out, g1_attn, g2_attn = graph_encoder_layer(
        params, g1, g2, non_pad_mask, slf_attn_mask,
        n_head=n_head, d_k=d_k, d_v=d_v)
    jax.block_until_ready((g1_out, g2_out, g1_attn, g2_attn))

    # Fast path that skips the attention-weight HBM writeback entirely.
    g1_out_na, g2_out_na = graph_encoder_layer(
        params, g1, g2, non_pad_mask, slf_attn_mask,
        n_head=n_head, d_k=d_k, d_v=d_v, return_attn=False)
    jax.block_until_ready((g1_out_na, g2_out_na))

    # Sanity check against the pure-JAX reference.
    r1, a1 = encoder_layer_ref(g1, slf_attn_mask[0], non_pad_mask[0], params,
                               n_head=n_head, d_k=d_k, d_v=d_v)
    r2, a2 = encoder_layer_ref(g2, slf_attn_mask[1], non_pad_mask[1], params,
                               n_head=n_head, d_k=d_k, d_v=d_v)

    tol = dict(rtol=3e-2, atol=3e-2)
    assert jnp.allclose(g1_out, r1, **tol), float(jnp.max(jnp.abs(g1_out - r1)))
    assert jnp.allclose(g2_out, r2, **tol), float(jnp.max(jnp.abs(g2_out - r2)))
    assert jnp.allclose(g1_attn.astype(jnp.float32), a1, rtol=3e-2, atol=2e-2)
    assert jnp.allclose(g2_attn.astype(jnp.float32), a2, rtol=3e-2, atol=2e-2)
    assert jnp.allclose(g1_out_na, r1, **tol)
    assert jnp.allclose(g2_out_na, r2, **tol)

    print("KERNEL_OK")
</pallas_src>

<mosaic_0001>
module attributes {stable_mosaic.version = 11 : i64} {
  func.func @_encoder_layer_kernel(%arg0: i32, %arg1: memref<8x8x128xf32, #tpu.memory_space<vmem>>, %arg2: memref<8x8x1xf32, #tpu.memory_space<vmem>>, %arg3: memref<128x384xbf16, #tpu.memory_space<vmem>>, %arg4: memref<128x128xbf16, #tpu.memory_space<vmem>>, %arg5: memref<128x256xbf16, #tpu.memory_space<vmem>>, %arg6: memref<256x128xbf16, #tpu.memory_space<vmem>>, %arg7: memref<8x384xf32, #tpu.memory_space<vmem>>, %arg8: memref<8x8x128xf32, #tpu.memory_space<vmem>>, %arg9: memref<8x4x8x8xbf16, #tpu.memory_space<vmem>>) attributes {dimension_semantics = [#tpu.dimension_semantics<parallel>], iteration_bounds = array<i64: 1>, scalar_prefetch = 0 : i64, scratch_operands = 0 : i64, tpu.core_type = #tpu.core_type<tc>, window_params = [{transform_indices = @transform_0, window_bounds = array<i64: 8, 8, 128>}, {transform_indices = @transform_1, window_bounds = array<i64: 8, 8, 1>}, {pipeline_mode = #tpu.pipeline_mode<synchronous>, transform_indices = @transform_2, window_bounds = array<i64: 128, 384>}, {pipeline_mode = #tpu.pipeline_mode<synchronous>, transform_indices = @transform_3, window_bounds = array<i64: 128, 128>}, {pipeline_mode = #tpu.pipeline_mode<synchronous>, transform_indices = @transform_4, window_bounds = array<i64: 128, 256>}, {pipeline_mode = #tpu.pipeline_mode<synchronous>, transform_indices = @transform_5, window_bounds = array<i64: 256, 128>}, {pipeline_mode = #tpu.pipeline_mode<synchronous>, transform_indices = @transform_6, window_bounds = array<i64: 8, 384>}, {transform_indices = @transform_7, window_bounds = array<i64: 8, 8, 128>}, {transform_indices = @transform_8, window_bounds = array<i64: 8, 4, 8, 8>}]} {
    %c0 = arith.constant 0 : index
    %c0_0 = arith.constant 0 : index
    %c0_1 = arith.constant 0 : index
    %0 = vector.load %arg1[%c0, %c0_0, %c0_1] : memref<8x8x128xf32, #tpu.memory_space<vmem>>, vector<8x8x128xf32>
    %c0_2 = arith.constant 0 : index
    %c0_3 = arith.constant 0 : index
    %c0_4 = arith.constant 0 : index
    %1 = vector.load %arg2[%c0_2, %c0_3, %c0_4] : memref<8x8x1xf32, #tpu.memory_space<vmem>>, vector<8x8x1xf32>
    %c0_5 = arith.constant 0 : index
    %c0_6 = arith.constant 0 : index
    %2 = vector.load %arg7[%c0_5, %c0_6] : memref<8x384xf32, #tpu.memory_space<vmem>>, vector<1x384xf32>
    %c1 = arith.constant 1 : index
    %c0_7 = arith.constant 0 : index
    %3 = vector.load %arg7[%c1, %c0_7] : memref<8x384xf32, #tpu.memory_space<vmem>>, vector<1x128xf32>
    %c2 = arith.constant 2 : index
    %c0_8 = arith.constant 0 : index
    %4 = vector.load %arg7[%c2, %c0_8] : memref<8x384xf32, #tpu.memory_space<vmem>>, vector<1x128xf32>
    %c3 = arith.constant 3 : index
    %c0_9 = arith.constant 0 : index
    %5 = vector.load %arg7[%c3, %c0_9] : memref<8x384xf32, #tpu.memory_space<vmem>>, vector<1x128xf32>
    %c4 = arith.constant 4 : index
    %c0_10 = arith.constant 0 : index
    %6 = vector.load %arg7[%c4, %c0_10] : memref<8x384xf32, #tpu.memory_space<vmem>>, vector<1x256xf32>
    %c5 = arith.constant 5 : index
    %c0_11 = arith.constant 0 : index
    %7 = vector.load %arg7[%c5, %c0_11] : memref<8x384xf32, #tpu.memory_space<vmem>>, vector<1x128xf32>
    %c6 = arith.constant 6 : index
    %c0_12 = arith.constant 0 : index
    %8 = vector.load %arg7[%c6, %c0_12] : memref<8x384xf32, #tpu.memory_space<vmem>>, vector<1x128xf32>
    %c7 = arith.constant 7 : index
    %c0_13 = arith.constant 0 : index
    %9 = vector.load %arg7[%c7, %c0_13] : memref<8x384xf32, #tpu.memory_space<vmem>>, vector<1x128xf32>
    %10 = vector.shape_cast %0 : vector<8x8x128xf32> to vector<64x128xf32>
    %11 = arith.truncf %10 : vector<64x128xf32> to vector<64x128xbf16>
    %c0_14 = arith.constant 0 : index
    %c0_15 = arith.constant 0 : index
    %12 = vector.load %arg3[%c0_14, %c0_15] : memref<128x384xbf16, #tpu.memory_space<vmem>>, vector<128x384xbf16>
    %cst = arith.constant dense<0.000000e+00> : vector<64x384xf32>
    %13 = tpu.matmul %11, %12, %cst {dimension_numbers = #tpu.dot_dimension_numbers<[1], [0], [0], [1], [0, 0, 1, 1], [], []>} : vector<64x128xbf16>, vector<128x384xbf16>, vector<64x384xf32> -> vector<64x384xf32>
    %14 = vector.broadcast %2 : vector<1x384xf32> to vector<64x384xf32>
    %15 = arith.addf %13, %14 : vector<64x384xf32>
    %16 = vector.extract_strided_slice %15 {offsets = [0, 0], sizes = [64, 128], strides = [1, 1]} : vector<64x384xf32> to vector<64x128xf32>
    %17 = vector.shape_cast %16 : vector<64x128xf32> to vector<8x8x128xf32>
    %18 = arith.truncf %17 : vector<8x8x128xf32> to vector<8x8x128xbf16>
    %19 = vector.extract_strided_slice %15 {offsets = [0, 128], sizes = [64, 128], strides = [1, 1]} : vector<64x384xf32> to vector<64x128xf32>
    %20 = vector.shape_cast %19 : vector<64x128xf32> to vector<8x8x128xf32>
    %21 = arith.truncf %20 : vector<8x8x128xf32> to vector<8x8x128xbf16>
    %22 = vector.extract_strided_slice %15 {offsets = [0, 256], sizes = [64, 128], strides = [1, 1]} : vector<64x384xf32> to vector<64x128xf32>
    %23 = vector.shape_cast %22 : vector<64x128xf32> to vector<8x8x128xf32>
    %24 = arith.truncf %23 : vector<8x8x128xf32> to vector<8x8x128xbf16>
    %25 = vector.shape_cast %1 : vector<8x8x1xf32> to vector<8x8xf32>
    %26 = vector.shape_cast %25 : vector<8x8xf32> to vector<8x1x8xf32>
    %cst_16 = arith.constant 0.000000e+00 : f32
    %27 = vector.broadcast %cst_16 : f32 to vector<8x1x8xf32>
    %28 = arith.cmpf ogt, %26, %27 : vector<8x1x8xf32>
    %cst_17 = arith.constant 0.000000e+00 : f32
    %cst_18 = arith.constant -1.000000e+09 : f32
    %29 = vector.broadcast %cst_17 : f32 to vector<8x1x8xf32>
    %30 = vector.broadcast %cst_18 : f32 to vector<8x1x8xf32>
    %31 = arith.select %28, %29, %30 : vector<8x1x8xi1>, vector<8x1x8xf32>
    %32 = vector.extract_strided_slice %18 {offsets = [0, 0, 0], sizes = [8, 8, 32], strides = [1, 1, 1]} : vector<8x8x128xbf16> to vector<8x8x32xbf16>
    %33 = vector.extract_strided_slice %21 {offsets = [0, 0, 0], sizes = [8, 8, 32], strides = [1, 1, 1]} : vector<8x8x128xbf16> to vector<8x8x32xbf16>
    %34 = vector.extract_strided_slice %24 {offsets = [0, 0, 0], sizes = [8, 8, 32], strides = [1, 1, 1]} : vector<8x8x128xbf16> to vector<8x8x32xbf16>
    "tpu.trace_start"() <{level = 10 : i32, message = "bqd,bkd->bqk"}> : () -> ()
    %cst_19 = arith.constant dense<0.000000e+00> : vector<8x8x8xf32>
    %35 = tpu.matmul %32, %33, %cst_19 {dimension_numbers = #tpu.dot_dimension_numbers<[2], [2], [1], [1], [0, 0, 0, 1, 1, 1], [0], [0]>} : vector<8x8x32xbf16>, vector<8x8x32xbf16>, vector<8x8x8xf32> -> vector<8x8x8xf32>
    "tpu.trace_stop"() : () -> ()
    %cst_20 = arith.constant 0.176776692 : f32
    %36 = vector.broadcast %cst_20 : f32 to vector<8x8x8xf32>
    %37 = arith.mulf %35, %36 : vector<8x8x8xf32>
    %38 = vector.broadcast %31 : vector<8x1x8xf32> to vector<8x8x8xf32>
    %39 = arith.addf %37, %38 : vector<8x8x8xf32>
    %cst_21 = arith.constant dense<0xFF800000> : vector<8x8xf32>
    %40 = vector.multi_reduction <maximumf>, %39, %cst_21 [2] : vector<8x8x8xf32> to vector<8x8xf32>
    %41 = vector.shape_cast %40 : vector<8x8xf32> to vector<8x8x1xf32>
    %42 = vector.broadcast %41 : vector<8x8x1xf32> to vector<8x8x8xf32>
    %43 = arith.subf %39, %42 : vector<8x8x8xf32>
    %44 = math.exp %43 : vector<8x8x8xf32>
    %cst_22 = arith.constant dense<0.000000e+00> : vector<8x8xf32>
    %45 = vector.multi_reduction <add>, %44, %cst_22 [2] : vector<8x8x8xf32> to vector<8x8xf32>
    %46 = vector.shape_cast %45 : vector<8x8xf32> to vector<8x8x1xf32>
    %47 = tpu.reciprocal %46 {approx = true} : vector<8x8x1xf32> -> vector<8x8x1xf32>
    %48 = vector.broadcast %47 : vector<8x8x1xf32> to vector<8x8x8xf32>
    %49 = arith.mulf %44, %48 : vector<8x8x8xf32>
    %50 = arith.truncf %49 : vector<8x8x8xf32> to vector<8x8x8xbf16>
    "tpu.trace_start"() <{level = 10 : i32, message = "bqk,bkd->bqd"}> : () -> ()
    %cst_23 = arith.constant dense<0.000000e+00> : vector<8x8x32xf32>
    %51 = tpu.matmul %50, %34, %cst_23 {dimension_numbers = #tpu.dot_dimension_numbers<[2], [1], [1], [2], [0, 0, 0, 1, 1, 2], [0], [0]>} : vector<8x8x8xbf16>, vector<8x8x32xbf16>, vector<8x8x32xf32> -> vector<8x8x32xf32>
    "tpu.trace_stop"() : () -> ()
    %52 = vector.extract_strided_slice %18 {offsets = [0, 0, 32], sizes = [8, 8, 32], strides = [1, 1, 1]} : vector<8x8x128xbf16> to vector<8x8x32xbf16>
    %53 = vector.extract_strided_slice %21 {offsets = [0, 0, 32], sizes = [8, 8, 32], strides = [1, 1, 1]} : vector<8x8x128xbf16> to vector<8x8x32xbf16>
    %54 = vector.extract_strided_slice %24 {offsets = [0, 0, 32], sizes = [8, 8, 32], strides = [1, 1, 1]} : vector<8x8x128xbf16> to vector<8x8x32xbf16>
    "tpu.trace_start"() <{level = 10 : i32, message = "bqd,bkd->bqk"}> : () -> ()
    %cst_24 = arith.constant dense<0.000000e+00> : vector<8x8x8xf32>
    %55 = tpu.matmul %52, %53, %cst_24 {dimension_numbers = #tpu.dot_dimension_numbers<[2], [2], [1], [1], [0, 0, 0, 1, 1, 1], [0], [0]>} : vector<8x8x32xbf16>, vector<8x8x32xbf16>, vector<8x8x8xf32> -> vector<8x8x8xf32>
    "tpu.trace_stop"() : () -> ()
    %cst_25 = arith.constant 0.176776692 : f32
    %56 = vector.broadcast %cst_25 : f32 to vector<8x8x8xf32>
    %57 = arith.mulf %55, %56 : vector<8x8x8xf32>
    %58 = vector.broadcast %31 : vector<8x1x8xf32> to vector<8x8x8xf32>
    %59 = arith.addf %57, %58 : vector<8x8x8xf32>
    %cst_26 = arith.constant dense<0xFF800000> : vector<8x8xf32>
    %60 = vector.multi_reduction <maximumf>, %59, %cst_26 [2] : vector<8x8x8xf32> to vector<8x8xf32>
    %61 = vector.shape_cast %60 : vector<8x8xf32> to vector<8x8x1xf32>
    %62 = vector.broadcast %61 : vector<8x8x1xf32> to vector<8x8x8xf32>
    %63 = arith.subf %59, %62 : vector<8x8x8xf32>
    %64 = math.exp %63 : vector<8x8x8xf32>
    %cst_27 = arith.constant dense<0.000000e+00> : vector<8x8xf32>
    %65 = vector.multi_reduction <add>, %64, %cst_27 [2] : vector<8x8x8xf32> to vector<8x8xf32>
    %66 = vector.shape_cast %65 : vector<8x8xf32> to vector<8x8x1xf32>
    %67 = tpu.reciprocal %66 {approx = true} : vector<8x8x1xf32> -> vector<8x8x1xf32>
    %68 = vector.broadcast %67 : vector<8x8x1xf32> to vector<8x8x8xf32>
    %69 = arith.mulf %64, %68 : vector<8x8x8xf32>
    %70 = arith.truncf %69 : vector<8x8x8xf32> to vector<8x8x8xbf16>
    "tpu.trace_start"() <{level = 10 : i32, message = "bqk,bkd->bqd"}> : () -> ()
    %cst_28 = arith.constant dense<0.000000e+00> : vector<8x8x32xf32>
    %71 = tpu.matmul %70, %54, %cst_28 {dimension_numbers = #tpu.dot_dimension_numbers<[2], [1], [1], [2], [0, 0, 0, 1, 1, 2], [0], [0]>} : vector<8x8x8xbf16>, vector<8x8x32xbf16>, vector<8x8x32xf32> -> vector<8x8x32xf32>
    "tpu.trace_stop"() : () -> ()
    %72 = vector.extract_strided_slice %18 {offsets = [0, 0, 64], sizes = [8, 8, 32], strides = [1, 1, 1]} : vector<8x8x128xbf16> to vector<8x8x32xbf16>
    %73 = vector.extract_strided_slice %21 {offsets = [0, 0, 64], sizes = [8, 8, 32], strides = [1, 1, 1]} : vector<8x8x128xbf16> to vector<8x8x32xbf16>
    %74 = vector.extract_strided_slice %24 {offsets = [0, 0, 64], sizes = [8, 8, 32], strides = [1, 1, 1]} : vector<8x8x128xbf16> to vector<8x8x32xbf16>
    "tpu.trace_start"() <{level = 10 : i32, message = "bqd,bkd->bqk"}> : () -> ()
    %cst_29 = arith.constant dense<0.000000e+00> : vector<8x8x8xf32>
    %75 = tpu.matmul %72, %73, %cst_29 {dimension_numbers = #tpu.dot_dimension_numbers<[2], [2], [1], [1], [0, 0, 0, 1, 1, 1], [0], [0]>} : vector<8x8x32xbf16>, vector<8x8x32xbf16>, vector<8x8x8xf32> -> vector<8x8x8xf32>
    "tpu.trace_stop"() : () -> ()
    %cst_30 = arith.constant 0.176776692 : f32
    %76 = vector.broadcast %cst_30 : f32 to vector<8x8x8xf32>
    %77 = arith.mulf %75, %76 : vector<8x8x8xf32>
    %78 = vector.broadcast %31 : vector<8x1x8xf32> to vector<8x8x8xf32>
    %79 = arith.addf %77, %78 : vector<8x8x8xf32>
    %cst_31 = arith.constant dense<0xFF800000> : vector<8x8xf32>
    %80 = vector.multi_reduction <maximumf>, %79, %cst_31 [2] : vector<8x8x8xf32> to vector<8x8xf32>
    %81 = vector.shape_cast %80 : vector<8x8xf32> to vector<8x8x1xf32>
    %82 = vector.broadcast %81 : vector<8x8x1xf32> to vector<8x8x8xf32>
    %83 = arith.subf %79, %82 : vector<8x8x8xf32>
    %84 = math.exp %83 : vector<8x8x8xf32>
    %cst_32 = arith.constant dense<0.000000e+00> : vector<8x8xf32>
    %85 = vector.multi_reduction <add>, %84, %cst_32 [2] : vector<8x8x8xf32> to vector<8x8xf32>
    %86 = vector.shape_cast %85 : vector<8x8xf32> to vector<8x8x1xf32>
    %87 = tpu.reciprocal %86 {approx = true} : vector<8x8x1xf32> -> vector<8x8x1xf32>
    %88 = vector.broadcast %87 : vector<8x8x1xf32> to vector<8x8x8xf32>
    %89 = arith.mulf %84, %88 : vector<8x8x8xf32>
    %90 = arith.truncf %89 : vector<8x8x8xf32> to vector<8x8x8xbf16>
    "tpu.trace_start"() <{level = 10 : i32, message = "bqk,bkd->bqd"}> : () -> ()
    %cst_33 = arith.constant dense<0.000000e+00> : vector<8x8x32xf32>
    %91 = tpu.matmul %90, %74, %cst_33 {dimension_numbers = #tpu.dot_dimension_numbers<[2], [1], [1], [2], [0, 0, 0, 1, 1, 2], [0], [0]>} : vector<8x8x8xbf16>, vector<8x8x32xbf16>, vector<8x8x32xf32> -> vector<8x8x32xf32>
    "tpu.trace_stop"() : () -> ()
    %92 = vector.extract_strided_slice %18 {offsets = [0, 0, 96], sizes = [8, 8, 32], strides = [1, 1, 1]} : vector<8x8x128xbf16> to vector<8x8x32xbf16>
    %93 = vector.extract_strided_slice %21 {offsets = [0, 0, 96], sizes = [8, 8, 32], strides = [1, 1, 1]} : vector<8x8x128xbf16> to vector<8x8x32xbf16>
    %94 = vector.extract_strided_slice %24 {offsets = [0, 0, 96], sizes = [8, 8, 32], strides = [1, 1, 1]} : vector<8x8x128xbf16> to vector<8x8x32xbf16>
    "tpu.trace_start"() <{level = 10 : i32, message = "bqd,bkd->bqk"}> : () -> ()
    %cst_34 = arith.constant dense<0.000000e+00> : vector<8x8x8xf32>
    %95 = tpu.matmul %92, %93, %cst_34 {dimension_numbers = #tpu.dot_dimension_numbers<[2], [2], [1], [1], [0, 0, 0, 1, 1, 1], [0], [0]>} : vector<8x8x32xbf16>, vector<8x8x32xbf16>, vector<8x8x8xf32> -> vector<8x8x8xf32>
    "tpu.trace_stop"() : () -> ()
    %cst_35 = arith.constant 0.176776692 : f32
    %96 = vector.broadcast %cst_35 : f32 to vector<8x8x8xf32>
    %97 = arith.mulf %95, %96 : vector<8x8x8xf32>
    %98 = vector.broadcast %31 : vector<8x1x8xf32> to vector<8x8x8xf32>
    %99 = arith.addf %97, %98 : vector<8x8x8xf32>
    %cst_36 = arith.constant dense<0xFF800000> : vector<8x8xf32>
    %100 = vector.multi_reduction <maximumf>, %99, %cst_36 [2] : vector<8x8x8xf32> to vector<8x8xf32>
    %101 = vector.shape_cast %100 : vector<8x8xf32> to vector<8x8x1xf32>
    %102 = vector.broadcast %101 : vector<8x8x1xf32> to vector<8x8x8xf32>
    %103 = arith.subf %99, %102 : vector<8x8x8xf32>
    %104 = math.exp %103 : vector<8x8x8xf32>
    %cst_37 = arith.constant dense<0.000000e+00> : vector<8x8xf32>
    %105 = vector.multi_reduction <add>, %104, %cst_37 [2] : vector<8x8x8xf32> to vector<8x8xf32>
    %106 = vector.shape_cast %105 : vector<8x8xf32> to vector<8x8x1xf32>
    %107 = tpu.reciprocal %106 {approx = true} : vector<8x8x1xf32> -> vector<8x8x1xf32>
    %108 = vector.broadcast %107 : vector<8x8x1xf32> to vector<8x8x8xf32>
    %109 = arith.mulf %104, %108 : vector<8x8x8xf32>
    %110 = arith.truncf %109 : vector<8x8x8xf32> to vector<8x8x8xbf16>
    "tpu.trace_start"() <{level = 10 : i32, message = "bqk,bkd->bqd"}> : () -> ()
    %cst_38 = arith.constant dense<0.000000e+00> : vector<8x8x32xf32>
    %111 = tpu.matmul %110, %94, %cst_38 {dimension_numbers = #tpu.dot_dimension_numbers<[2], [1], [1], [2], [0, 0, 0, 1, 1, 2], [0], [0]>} : vector<8x8x8xbf16>, vector<8x8x32xbf16>, vector<8x8x32xf32> -> vector<8x8x32xf32>
    "tpu.trace_stop"() : () -> ()
    %112 = vector.shape_cast %49 : vector<8x8x8xf32> to vector<8x1x8x8xf32>
    %113 = vector.shape_cast %69 : vector<8x8x8xf32> to vector<8x1x8x8xf32>
    %114 = vector.shape_cast %89 : vector<8x8x8xf32> to vector<8x1x8x8xf32>
    %115 = vector.shape_cast %109 : vector<8x8x8xf32> to vector<8x1x8x8xf32>
    %116 = tpu.concatenate %112, %113, %114, %115 in 1 : vector<8x1x8x8xf32>, vector<8x1x8x8xf32>, vector<8x1x8x8xf32>, vector<8x1x8x8xf32> -> vector<8x4x8x8xf32>
    %117 = arith.truncf %116 : vector<8x4x8x8xf32> to vector<8x4x8x8xbf16>
    %c0_39 = arith.constant 0 : index
    %c0_40 = arith.constant 0 : index
    %c0_41 = arith.constant 0 : index
    %c0_42 = arith.constant 0 : index
    %118 = vector.load %arg9[%c0_39, %c0_40, %c0_41, %c0_42] : memref<8x4x8x8xbf16, #tpu.memory_space<vmem>>, vector<8x4x8x8xbf16>
    tpu.vector_store %arg9[%c0_39, %c0_40, %c0_41, %c0_42], %117 {strides = array<i32>} : memref<8x4x8x8xbf16, #tpu.memory_space<vmem>>, vector<8x4x8x8xbf16>,
    %119 = tpu.concatenate %51, %71, %91, %111 in 2 : vector<8x8x32xf32>, vector<8x8x32xf32>, vector<8x8x32xf32>, vector<8x8x32xf32> -> vector<8x8x128xf32>
    %120 = vector.shape_cast %119 : vector<8x8x128xf32> to vector<64x128xf32>
    %121 = arith.truncf %120 : vector<64x128xf32> to vector<64x128xbf16>
    %c0_43 = arith.constant 0 : index
    %c0_44 = arith.constant 0 : index
    %122 = vector.load %arg4[%c0_43, %c0_44] : memref<128x128xbf16, #tpu.memory_space<vmem>>, vector<128x128xbf16>
    %cst_45 = arith.constant dense<0.000000e+00> : vector<64x128xf32>
    %123 = tpu.matmul %121, %122, %cst_45 {dimension_numbers = #tpu.dot_dimension_numbers<[1], [0], [0], [1], [0, 0, 1, 1], [], []>} : vector<64x128xbf16>, vector<128x128xbf16>, vector<64x128xf32> -> vector<64x128xf32>
    %124 = vector.broadcast %3 : vector<1x128xf32> to vector<64x128xf32>
    %125 = arith.addf %123, %124 : vector<64x128xf32>
    %126 = vector.shape_cast %1 : vector<8x8x1xf32> to vector<64x1xf32>
    %127 = arith.addf %125, %10 : vector<64x128xf32>
    %cst_46 = arith.constant dense<0.000000e+00> : vector<64xf32>
    %128 = vector.multi_reduction <add>, %127, %cst_46 [1] : vector<64x128xf32> to vector<64xf32>
    %129 = vector.shape_cast %128 : vector<64xf32> to vector<64x1xf32>
    %cst_47 = arith.constant 1.280000e+02 : f32
    %130 = vector.broadcast %cst_47 : f32 to vector<64x1xf32>
    %131 = arith.divf %129, %130 : vector<64x1xf32>
    %132 = vector.broadcast %131 : vector<64x1xf32> to vector<64x128xf32>
    %133 = arith.subf %127, %132 : vector<64x128xf32>
    %134 = arith.mulf %133, %133 : vector<64x128xf32>
    %cst_48 = arith.constant dense<0.000000e+00> : vector<64xf32>
    %135 = vector.multi_reduction <add>, %134, %cst_48 [1] : vector<64x128xf32> to vector<64xf32>
    %136 = vector.shape_cast %135 : vector<64xf32> to vector<64x1xf32>
    %cst_49 = arith.constant 1.280000e+02 : f32
    %137 = vector.broadcast %cst_49 : f32 to vector<64x1xf32>
    %138 = arith.divf %136, %137 : vector<64x1xf32>
    %139 = vector.broadcast %131 : vector<64x1xf32> to vector<64x128xf32>
    %140 = arith.subf %127, %139 : vector<64x128xf32>
    %cst_50 = arith.constant 9.99999974E-6 : f32
    %141 = vector.broadcast %cst_50 : f32 to vector<64x1xf32>
    %142 = arith.addf %138, %141 : vector<64x1xf32>
    %143 = math.rsqrt %142 : vector<64x1xf32>
    %144 = vector.broadcast %143 : vector<64x1xf32> to vector<64x128xf32>
    %145 = arith.mulf %140, %144 : vector<64x128xf32>
    %146 = vector.broadcast %4 : vector<1x128xf32> to vector<64x128xf32>
    %147 = arith.mulf %145, %146 : vector<64x128xf32>
    %148 = vector.broadcast %5 : vector<1x128xf32> to vector<64x128xf32>
    %149 = arith.addf %147, %148 : vector<64x128xf32>
    %150 = vector.broadcast %126 : vector<64x1xf32> to vector<64x128xf32>
    %151 = arith.mulf %149, %150 : vector<64x128xf32>
    %152 = arith.truncf %151 : vector<64x128xf32> to vector<64x128xbf16>
    %c0_51 = arith.constant 0 : index
    %c0_52 = arith.constant 0 : index
    %153 = vector.load %arg5[%c0_51, %c0_52] : memref<128x256xbf16, #tpu.memory_space<vmem>>, vector<128x256xbf16>
    %cst_53 = arith.constant dense<0.000000e+00> : vector<64x256xf32>
    %154 = tpu.matmul %152, %153, %cst_53 {dimension_numbers = #tpu.dot_dimension_numbers<[1], [0], [0], [1], [0, 0, 1, 1], [], []>} : vector<64x128xbf16>, vector<128x256xbf16>, vector<64x256xf32> -> vector<64x256xf32>
    %155 = vector.broadcast %6 : vector<1x256xf32> to vector<64x256xf32>
    %156 = arith.addf %154, %155 : vector<64x256xf32>
    %cst_54 = arith.constant 0.000000e+00 : f32
    %157 = vector.broadcast %cst_54 : f32 to vector<64x256xf32>
    %158 = arith.maximumf %156, %157 : vector<64x256xf32>
    %159 = arith.truncf %158 : vector<64x256xf32> to vector<64x256xbf16>
    %c0_55 = arith.constant 0 : index
    %c0_56 = arith.constant 0 : index
    %160 = vector.load %arg6[%c0_55, %c0_56] : memref<256x128xbf16, #tpu.memory_space<vmem>>, vector<256x128xbf16>
    %cst_57 = arith.constant dense<0.000000e+00> : vector<64x128xf32>
    %161 = tpu.matmul %159, %160, %cst_57 {dimension_numbers = #tpu.dot_dimension_numbers<[1], [0], [0], [1], [0, 0, 1, 1], [], []>} : vector<64x256xbf16>, vector<256x128xbf16>, vector<64x128xf32> -> vector<64x128xf32>
    %162 = vector.broadcast %7 : vector<1x128xf32> to vector<64x128xf32>
    %163 = arith.addf %161, %162 : vector<64x128xf32>
    %164 = arith.addf %163, %151 : vector<64x128xf32>
    %cst_58 = arith.constant dense<0.000000e+00> : vector<64xf32>
    %165 = vector.multi_reduction <add>, %164, %cst_58 [1] : vector<64x128xf32> to vector<64xf32>
    %166 = vector.shape_cast %165 : vector<64xf32> to vector<64x1xf32>
    %cst_59 = arith.constant 1.280000e+02 : f32
    %167 = vector.broadcast %cst_59 : f32 to vector<64x1xf32>
    %168 = arith.divf %166, %167 : vector<64x1xf32>
    %169 = vector.broadcast %168 : vector<64x1xf32> to vector<64x128xf32>
    %170 = arith.subf %164, %169 : vector<64x128xf32>
    %171 = arith.mulf %170, %170 : vector<64x128xf32>
    %cst_60 = arith.constant dense<0.000000e+00> : vector<64xf32>
    %172 = vector.multi_reduction <add>, %171, %cst_60 [1] : vector<64x128xf32> to vector<64xf32>
    %173 = vector.shape_cast %172 : vector<64xf32> to vector<64x1xf32>
    %cst_61 = arith.constant 1.280000e+02 : f32
    %174 = vector.broadcast %cst_61 : f32 to vector<64x1xf32>
    %175 = arith.divf %173, %174 : vector<64x1xf32>
    %176 = vector.broadcast %168 : vector<64x1xf32> to vector<64x128xf32>
    %177 = arith.subf %164, %176 : vector<64x128xf32>
    %cst_62 = arith.constant 9.99999974E-6 : f32
    %178 = vector.broadcast %cst_62 : f32 to vector<64x1xf32>
    %179 = arith.addf %175, %178 : vector<64x1xf32>
    %180 = math.rsqrt %179 : vector<64x1xf32>
    %181 = vector.broadcast %180 : vector<64x1xf32> to vector<64x128xf32>
    %182 = arith.mulf %177, %181 : vector<64x128xf32>
    %183 = vector.broadcast %8 : vector<1x128xf32> to vector<64x128xf32>
    %184 = arith.mulf %182, %183 : vector<64x128xf32>
    %185 = vector.broadcast %9 : vector<1x128xf32> to vector<64x128xf32>
    %186 = arith.addf %184, %185 : vector<64x128xf32>
    %187 = vector.broadcast %126 : vector<64x1xf32> to vector<64x128xf32>
    %188 = arith.mulf %186, %187 : vector<64x128xf32>
    %189 = vector.shape_cast %188 : vector<64x128xf32> to vector<8x8x128xf32>
    %c0_63 = arith.constant 0 : index
    %c0_64 = arith.constant 0 : index
    %c0_65 = arith.constant 0 : index
    %190 = vector.load %arg8[%c0_63, %c0_64, %c0_65] : memref<8x8x128xf32, #tpu.memory_space<vmem>>, vector<8x8x128xf32>
    tpu.vector_store %arg8[%c0_63, %c0_64, %c0_65], %189 {strides = array<i32>} : memref<8x8x128xf32, #tpu.memory_space<vmem>>, vector<8x8x128xf32>,
    return
  }
  func.func @transform_0(%arg0: i32) -> (i32, i32, i32) {
    %c0_i32 = arith.constant 0 : i32
    %c0_i32_0 = arith.constant 0 : i32
    %c0_i32_1 = arith.constant 0 : i32
    return %arg0, %c0_i32, %c0_i32_0 : i32, i32, i32
  }
  func.func @transform_1(%arg0: i32) -> (i32, i32, i32) {
    %c0_i32 = arith.constant 0 : i32
    %c0_i32_0 = arith.constant 0 : i32
    %c0_i32_1 = arith.constant 0 : i32
    return %arg0, %c0_i32, %c0_i32_0 : i32, i32, i32
  }
  func.func @transform_2(%arg0: i32) -> (i32, i32) {
    %c0_i32 = arith.constant 0 : i32
    %c0_i32_0 = arith.constant 0 : i32
    %c0_i32_1 = arith.constant 0 : i32
    return %c0_i32, %c0_i32_0 : i32, i32
  }
  func.func @transform_3(%arg0: i32) -> (i32, i32) {
    %c0_i32 = arith.constant 0 : i32
    %c0_i32_0 = arith.constant 0 : i32
    %c0_i32_1 = arith.constant 0 : i32
    return %c0_i32, %c0_i32_0 : i32, i32
  }
  func.func @transform_4(%arg0: i32) -> (i32, i32) {
    %c0_i32 = arith.constant 0 : i32
    %c0_i32_0 = arith.constant 0 : i32
    %c0_i32_1 = arith.constant 0 : i32
    return %c0_i32, %c0_i32_0 : i32, i32
  }
  func.func @transform_5(%arg0: i32) -> (i32, i32) {
    %c0_i32 = arith.constant 0 : i32
    %c0_i32_0 = arith.constant 0 : i32
    %c0_i32_1 = arith.constant 0 : i32
    return %c0_i32, %c0_i32_0 : i32, i32
  }
  func.func @transform_6(%arg0: i32) -> (i32, i32) {
    %c0_i32 = arith.constant 0 : i32
    %c0_i32_0 = arith.constant 0 : i32
    %c0_i32_1 = arith.constant 0 : i32
    return %c0_i32, %c0_i32_0 : i32, i32
  }
  func.func @transform_7(%arg0: i32) -> (i32, i32, i32) {
    %c0_i32 = arith.constant 0 : i32
    %c0_i32_0 = arith.constant 0 : i32
    %c0_i32_1 = arith.constant 0 : i32
    return %arg0, %c0_i32, %c0_i32_0 : i32, i32, i32
  }
  func.func @transform_8(%arg0: i32) -> (i32, i32, i32, i32) {
    %c0_i32 = arith.constant 0 : i32
    %c0_i32_0 = arith.constant 0 : i32
    %c0_i32_1 = arith.constant 0 : i32
    %c0_i32_2 = arith.constant 0 : i32
    return %arg0, %c0_i32, %c0_i32_0, %c0_i32_1 : i32, i32, i32, i32
  }
}

</mosaic_0001>

<llo_original>
// kernel: tpu_custom_call.1
$region0: #{tpu_custom_call.1}
  #allocation0 [shape = 'u32[]', space=smem, size = 0x4, offset = 0x4, fixed_abs, tag = 'smem constant byte address 0x4 - core index']
  #allocation1 [shape = 'u32[144,128]{1,0:T(1,128)}', space=vmem, size = 0x12000, scoped, tag = 'internal scratch']
  %s0 = inlined_call_operand.vmem [shape: f32[8,8,128], index: 0, kind: input, shape index: {}]
  %s1 = inlined_call_operand.vmem [shape: f32[8,8,1], index: 1, kind: input, shape index: {}]
  %s2 = inlined_call_operand.hbm [shape: bf16[128,384], index: 2, kind: input, shape index: {}]
  %s3 = inlined_call_operand.hbm [shape: bf16[128,128], index: 3, kind: input, shape index: {}]
  %s4 = inlined_call_operand.hbm [shape: bf16[128,256], index: 4, kind: input, shape index: {}]
  %s5 = inlined_call_operand.hbm [shape: bf16[256,128], index: 5, kind: input, shape index: {}]
  %s6 = inlined_call_operand.vmem [shape: f32[8,384], index: 6, kind: input, shape index: {}]
  %s7 = inlined_call_operand.hbm [shape: f32[8,8,128], index: 7, kind: output, shape index: {0}]
  %s8 = inlined_call_operand.hbm [shape: bf16[8,4,8,8], index: 8, kind: output, shape index: {1}]
  %9 = xla_tuple %s7, %s8
  %s10 = sld [smem:[#allocation0]]
  $region62: #{tpu_custom_call.1} parent=0
    _
  %s12 = ssub.s32 1, %s10
  %s13 = scalar_select 0, %s12, %s10
  $region1: #{tpu_custom_call.1} parent=0
    #allocation2 [shape = 'u8[98304]{0}', space=vmem, size = 0x18000, scoped, tag = 'input window, operand 2, single buffered']
    #allocation3 [shape = 's32[1]{0}', space=sflag, size = 0x4, scoped, tag = 'scoped memory for tpu_custom_call.1']
    #allocation4 [shape = 's32[1]{0}', space=sflag, size = 0x4, scoped, tag = 'scoped memory for tpu_custom_call.1']
    #allocation5 [shape = 'u8[32768]{0}', space=vmem, size = 0x8000, scoped, tag = 'input window, operand 3, single buffered']
    #allocation6 [shape = 's32[1]{0}', space=sflag, size = 0x4, scoped, tag = 'scoped memory for tpu_custom_call.1']
    #allocation7 [shape = 'u8[65536]{0}', space=vmem, size = 0x10000, scoped, tag = 'input window, operand 4, single buffered']
    #allocation8 [shape = 'u8[65536]{0}', space=vmem, size = 0x10000, scoped, tag = 'input window, operand 5, single buffered']
    #allocation9 [shape = 's32[1]{0}', space=sflag, size = 0x4, scoped, tag = 'scoped memory for tpu_custom_call.1']
    #allocation10 [shape = 'u8[32768]{0}', space=vmem, size = 0x8000, scoped, tag = 'output window, operand 0, single buffered']
    #allocation11 [shape = 'u8[65536]{0}', space=vmem, size = 0x10000, scoped, tag = 'output window, operand 1, single buffered']
    #allocation12 [shape = 's32[1]{0}', space=sflag, size = 0x4, scoped, tag = 'scoped memory for tpu_custom_call.1']
    %14 = vsyncpa [#allocation3], 0
    %15 = vsyncpa [#allocation6], 0
    %16 = vsyncpa [#allocation9], 0
    %17 = vsyncpa [#allocation4], 0
    %18 = vsyncpa [#allocation12], 0
    // Predicated region
    $region2: #{tpu_custom_call.1} parent=1 // pred_check
      _
    $region3: #{tpu_custom_call.1} parent=1 // pred_check_branch
      %20 = sbr.rel (0) target = $region5
    $region4: #{tpu_custom_call.1} parent=1 // pred_region
      _
    $region5: #{tpu_custom_call.1} parent=1 // pred_fallthru
      _
    // Predicated region
    $region6: #{tpu_custom_call.1} parent=1 // pred_check
      _
    $region7: #{tpu_custom_call.1} parent=1 // pred_check_branch
      %22 = sbr.rel (0) target = $region9
    $region8: #{tpu_custom_call.1} parent=1 // pred_region
      _
    $region9: #{tpu_custom_call.1} parent=1 // pred_fallthru
      _
    // Predicated region
    $region10: #{tpu_custom_call.1} parent=1 // pred_check
      _
    $region11: #{tpu_custom_call.1} parent=1 // pred_check_branch
      %24 = sbr.rel (0) target = $region13
    $region12: #{tpu_custom_call.1} parent=1 // pred_region
      %s26 = ssub.s32 3072, 3072
      %27 = vsyncadd [#allocation3], %s26
      %s28 = sshll.u32 [#allocation2], 4
      %s29 = int_to_ptr.vmem [resolvable:$true] %s28
      %34 = dma.hbm_to_vmem [thread:$0]  %s2, 3072, %s29, [#allocation3], 192, 192, 12
    $region13: #{tpu_custom_call.1} parent=1 // pred_fallthru
      _
    // Predicated region
    $region14: #{tpu_custom_call.1} parent=1 // pred_check
      _
    $region15: #{tpu_custom_call.1} parent=1 // pred_check_branch
      %36 = sbr.rel (0) target = $region17
    $region16: #{tpu_custom_call.1} parent=1 // pred_region
      %s38 = ssub.s32 1024, 1024
      %39 = vsyncadd [#allocation6], %s38
      %s40 = sshll.u32 [#allocation5], 4
      %s41 = int_to_ptr.vmem [resolvable:$true] %s40
      %46 = dma.hbm_to_vmem [thread:$0]  %s3, 1024, %s41, [#allocation6], 64, 64, 4
    $region17: #{tpu_custom_call.1} parent=1 // pred_fallthru
      _
    // Predicated region
    $region18: #{tpu_custom_call.1} parent=1 // pred_check
      _
    $region19: #{tpu_custom_call.1} parent=1 // pred_check_branch
      %48 = sbr.rel (0) target = $region21
    $region20: #{tpu_custom_call.1} parent=1 // pred_region
      %s50 = ssub.s32 2048, 2048
      %51 = vsyncadd [#allocation6], %s50
      %s52 = sshll.u32 [#allocation7], 4
      %s53 = int_to_ptr.vmem [resolvable:$true] %s52
      %58 = dma.hbm_to_vmem [thread:$0]  %s4, 2048, %s53, [#allocation6], 128, 128, 8
    $region21: #{tpu_custom_call.1} parent=1 // pred_fallthru
      _
    // Predicated region
    $region22: #{tpu_custom_call.1} parent=1 // pred_check
      _
    $region23: #{tpu_custom_call.1} parent=1 // pred_check_branch
      %60 = sbr.rel (0) target = $region25
    $region24: #{tpu_custom_call.1} parent=1 // pred_region
      %s62 = ssub.s32 2048, 2048
      %63 = vsyncadd [#allocation9], %s62
      %s64 = sshll.u32 [#allocation8], 4
      %s65 = int_to_ptr.vmem [resolvable:$true] %s64
      %70 = dma.hbm_to_vmem [thread:$0]  %s5, 2048, %s65, [#allocation9], 64, 64, 4
    $region25: #{tpu_custom_call.1} parent=1 // pred_fallthru
      _
    // Predicated region
    $region26: #{tpu_custom_call.1} parent=1 // pred_check
      _
    $region27: #{tpu_custom_call.1} parent=1 // pred_check_branch
      %72 = sbr.rel (0) target = $region29
    $region28: #{tpu_custom_call.1} parent=1 // pred_region
      _
    $region29: #{tpu_custom_call.1} parent=1 // pred_fallthru
      _
    // Predicated region
    $region30: #{tpu_custom_call.1} parent=1 // pred_check
      _
    $region31: #{tpu_custom_call.1} parent=1 // pred_check_branch
      %74 = sbr.rel (0) target = $region33
    $region32: #{tpu_custom_call.1} parent=1 // pred_region
      %75 = dma.done [#allocation3], 3072
    $region33: #{tpu_custom_call.1} parent=1 // pred_fallthru
      _
    // Predicated region
    $region34: #{tpu_custom_call.1} parent=1 // pred_check
      _
    $region35: #{tpu_custom_call.1} parent=1 // pred_check_branch
      %77 = sbr.rel (0) target = $region37
    $region36: #{tpu_custom_call.1} parent=1 // pred_region
      %78 = dma.done [#allocation6], 1024
    $region37: #{tpu_custom_call.1} parent=1 // pred_fallthru
      _
    // Predicated region
    $region38: #{tpu_custom_call.1} parent=1 // pred_check
      _
    $region39: #{tpu_custom_call.1} parent=1 // pred_check_branch
      %80 = sbr.rel (0) target = $region41
    $region40: #{tpu_custom_call.1} parent=1 // pred_region
      %81 = dma.done [#allocation6], 2048
    $region41: #{tpu_custom_call.1} parent=1 // pred_fallthru
      _
    // Predicated region
    $region42: #{tpu_custom_call.1} parent=1 // pred_check
      _
    $region43: #{tpu_custom_call.1} parent=1 // pred_check_branch
      %83 = sbr.rel (0) target = $region45
    $region44: #{tpu_custom_call.1} parent=1 // pred_region
      %84 = dma.done [#allocation9], 2048
    $region45: #{tpu_custom_call.1} parent=1 // pred_fallthru
      _
    %v86 = vld [vmem:[%s0] sm:$0xff]
    %v87 = vld [vmem:[%s0 + $0x8] sm:$0xff]
    %v88 = vld [vmem:[%s0 + $0x10] sm:$0xff]
    %v89 = vld [vmem:[%s0 + $0x18] sm:$0xff]
    %v90 = vld [vmem:[%s0 + $0x20] sm:$0xff]
    %v91 = vld [vmem:[%s0 + $0x28] sm:$0xff]
    %v92 = vld [vmem:[%s0 + $0x30] sm:$0xff]
    %v93 = vld [vmem:[%s0 + $0x38] sm:$0xff]
    %v94 = vld [vmem:[%s1] sm:$0xff]
    %v95 = vld [vmem:[%s1 + $0x8] sm:$0xff]
    %v96 = vld [vmem:[%s1 + $0x10] sm:$0xff]
    %v97 = vld [vmem:[%s1 + $0x18] sm:$0xff]
    %v98 = vld [vmem:[%s1 + $0x20] sm:$0xff]
    %v99 = vld [vmem:[%s1 + $0x28] sm:$0xff]
    %v100 = vld [vmem:[%s1 + $0x30] sm:$0xff]
    %v101 = vld [vmem:[%s1 + $0x38] sm:$0xff]
    %v102 = vld [vmem:[%s6] ss:$8 sm:$0x7]
    %v103 = vld [vmem:[%s6 + $0x1] ss:$0 sm:$0xff]
    %v104 = vld [vmem:[%s6 + $0x2] ss:$0 sm:$0xff]
    %v105 = vld [vmem:[%s6 + $0x3] ss:$0 sm:$0xff]
    %s106 = scalar_lea.vmem %s6, 4
    %v107 = vld [vmem:[%s106] ss:$8 sm:$0x3]
    %v108 = vld [vmem:[%s6 + $0x5] ss:$0 sm:$0xff]
    %v109 = vld [vmem:[%s6 + $0x6] ss:$0 sm:$0xff]
    %v110 = vld [vmem:[%s6 + $0x7] ss:$0 sm:$0xff]
    %v111 = vpack.c.bf16 %v87, %v86
    %v112 = vpack.c.bf16 %v89, %v88
    %v113 = vpack.c.bf16 %v91, %v90
    %v114 = vpack.c.bf16 %v93, %v92
    %v115 = vld [vmem:[#allocation2] sm:$0xff]
    %v116 = vld [vmem:[#allocation2 + $0x8] sm:$0xf]
    %v117 = vld [vmem:[#allocation2 + $0xc] sm:$0xff]
    %v118 = vld [vmem:[#allocation2 + $0x14] sm:$0xf]
    %v119 = vld [vmem:[#allocation2 + $0x18] sm:$0xff]
    %v120 = vld [vmem:[#allocation2 + $0x20] sm:$0xf]
    %v121 = vld [vmem:[#allocation2 + $0x24] sm:$0xff]
    %v122 = vld [vmem:[#allocation2 + $0x2c] sm:$0xf]
    %v123 = vld [vmem:[#allocation2 + $0x30] sm:$0xff]
    %v124 = vld [vmem:[#allocation2 + $0x38] sm:$0xf]
    %v125 = vld [vmem:[#allocation2 + $0x3c] sm:$0xff]
    %v126 = vld [vmem:[#allocation2 + $0x44] sm:$0xf]
    %v127 = vld [vmem:[#allocation2 + $0x48] sm:$0xff]
    %v128 = vld [vmem:[#allocation2 + $0x50] sm:$0xf]
    %v129 = vld [vmem:[#allocation2 + $0x54] sm:$0xff]
    %v130 = vld [vmem:[#allocation2 + $0x5c] sm:$0xf]
    %v131 = vld [vmem:[#allocation2 + $0x60] sm:$0xff]
    %v132 = vld [vmem:[#allocation2 + $0x68] sm:$0xf]
    %v133 = vld [vmem:[#allocation2 + $0x6c] sm:$0xff]
    %v134 = vld [vmem:[#allocation2 + $0x74] sm:$0xf]
    %v135 = vld [vmem:[#allocation2 + $0x78] sm:$0xff]
    %v136 = vld [vmem:[#allocation2 + $0x80] sm:$0xf]
    %v137 = vld [vmem:[#allocation2 + $0x84] sm:$0xff]
    %v138 = vld [vmem:[#allocation2 + $0x8c] sm:$0xf]
    %v139 = vld [vmem:[#allocation2 + $0x90] sm:$0xff]
    %v140 = vld [vmem:[#allocation2 + $0x98] sm:$0xf]
    %v141 = vld [vmem:[#allocation2 + $0x9c] sm:$0xff]
    %v142 = vld [vmem:[#allocation2 + $0xa4] sm:$0xf]
    %v143 = vld [vmem:[#allocation2 + $0xa8] sm:$0xff]
    %v144 = vld [vmem:[#allocation2 + $0xb0] sm:$0xf]
    %v145 = vld [vmem:[#allocation2 + $0xb4] sm:$0xff]
    %v146 = vld [vmem:[#allocation2 + $0xbc] sm:$0xf]
    %v148 = vlaneseq
    %v149 = vshrl.u32 %v148, 7
    %v150 = vsub.s32 0, %v149
    %v151 = vrot.slane %v102, %v150
    %v152 = vlaneseq
    %v153 = vshrl.u32 %v152, 7
    %v154 = vsub.s32 1, %v153
    %v155 = vrot.slane %v102, %v154
    %v156 = vlaneseq
    %v157 = vshrl.u32 %v156, 7
    %v158 = vsub.s32 2, %v157
    %v159 = vrot.slane %v102, %v158
    %v195 = vunpack.c.l.b16 %v115
    %v196 = vunpack.c.h.b16 %v115
    %v197 = vunpack.c.l.b16 %v116
    %v198 = vunpack.c.l.b16 %v117
    %v199 = vunpack.c.h.b16 %v117
    %v200 = vunpack.c.l.b16 %v118
    %v201 = vunpack.c.l.b16 %v119
    %v202 = vunpack.c.h.b16 %v119
    %v203 = vunpack.c.l.b16 %v120
    %v204 = vunpack.c.l.b16 %v121
    %v205 = vunpack.c.h.b16 %v121
    %v206 = vunpack.c.l.b16 %v122
    %v207 = vunpack.c.l.b16 %v123
    %v208 = vunpack.c.h.b16 %v123
    %v209 = vunpack.c.l.b16 %v124
    %v210 = vunpack.c.l.b16 %v125
    %v211 = vunpack.c.h.b16 %v125
    %v212 = vunpack.c.l.b16 %v126
    %v213 = vunpack.c.l.b16 %v127
    %v214 = vunpack.c.h.b16 %v127
    %v215 = vunpack.c.l.b16 %v128
    %v216 = vunpack.c.l.b16 %v129
    %v217 = vunpack.c.h.b16 %v129
    %v218 = vunpack.c.l.b16 %v130
    %v219 = vunpack.c.l.b16 %v131
    %v220 = vunpack.c.h.b16 %v131
    %v221 = vunpack.c.l.b16 %v132
    %v222 = vunpack.c.l.b16 %v133
    %v223 = vunpack.c.h.b16 %v133
    %v224 = vunpack.c.l.b16 %v134
    %v225 = vunpack.c.l.b16 %v135
    %v226 = vunpack.c.h.b16 %v135
    %v227 = vunpack.c.l.b16 %v136
    %v228 = vunpack.c.l.b16 %v137
    %v229 = vunpack.c.h.b16 %v137
    %v230 = vunpack.c.l.b16 %v138
    %v231 = vunpack.c.l.b16 %v139
    %v232 = vunpack.c.h.b16 %v139
    %v233 = vunpack.c.l.b16 %v140
    %v234 = vunpack.c.l.b16 %v141
    %v235 = vunpack.c.h.b16 %v141
    %v236 = vunpack.c.l.b16 %v142
    %v237 = vunpack.c.l.b16 %v143
    %v238 = vunpack.c.h.b16 %v143
    %v239 = vunpack.c.l.b16 %v144
    %v240 = vunpack.c.l.b16 %v145
    %v241 = vunpack.c.h.b16 %v145
    %v242 = vunpack.c.l.b16 %v146
    %v243 = vpack.c.b16 %v198, %v195
    %v244 = vpack.c.b16 %v199, %v196
    %v245 = vpack.c.b16 %v200, %v197
    %v246 = vpack.c.b16 %v204, %v201
    %v247 = vpack.c.b16 %v205, %v202
    %v248 = vpack.c.b16 %v206, %v203
    %v249 = vpack.c.b16 %v210, %v207
    %v250 = vpack.c.b16 %v211, %v208
    %v251 = vpack.c.b16 %v212, %v209
    %v252 = vpack.c.b16 %v216, %v213
    %v253 = vpack.c.b16 %v217, %v214
    %v254 = vpack.c.b16 %v218, %v215
    %v255 = vpack.c.b16 %v222, %v219
    %v256 = vpack.c.b16 %v223, %v220
    %v257 = vpack.c.b16 %v224, %v221
    %v258 = vpack.c.b16 %v228, %v225
    %v259 = vpack.c.b16 %v229, %v226
    %v260 = vpack.c.b16 %v230, %v227
    %v261 = vpack.c.b16 %v234, %v231
    %v262 = vpack.c.b16 %v235, %v232
    %v263 = vpack.c.b16 %v236, %v233
    %v264 = vpack.c.b16 %v240, %v237
    %v265 = vpack.c.b16 %v241, %v238
    %v266 = vpack.c.b16 %v242, %v239
    %291 = vmatprep.subr.bf16.mxu0 %v244
    %292 = vmatpush1.bf16.msra.mxu0 %v243
    %293 = vmatprep.subr.bf16.mxu0 %v247
    %294 = vmatpush1.bf16.msra.mxu0 %v246
    %295 = vmatprep.subr.bf16.mxu0 %v250
    %296 = vmatpush1.bf16.msra.mxu0 %v249
    %297 = vmatprep.subr.bf16.mxu0 %v253
    %298 = vmatpush1.bf16.msra.mxu0 %v252
    %299 = vmatprep.subr.bf16.mxu0 %v256
    %300 = vmatpush1.bf16.msra.mxu0 %v255
    %301 = vmatprep.subr.bf16.mxu0 %v259
    %302 = vmatpush1.bf16.msra.mxu0 %v258
    %303 = vmatprep.subr.bf16.mxu0 %v262
    %304 = vmatpush1.bf16.msra.mxu0 %v261
    %305 = vmatprep.subr.bf16.mxu0 %v265
    %306 = vmatpush1.bf16.msra.mxu0 %v264
    %307 = vmatprep.subr.bf16.mxu0 0
    %308 = vmatpush1.bf16.msra.mxu0 0
    %309 = vmatprep.subr.bf16.mxu0 0
    %310 = vmatpush1.bf16.msra.mxu0 0
    %311 = vmatprep.subr.bf16.mxu0 0
    %312 = vmatpush1.bf16.msra.mxu0 0
    %313 = vmatprep.subr.bf16.mxu0 0
    %314 = vmatpush1.bf16.msra.mxu0 0
    %315 = vmatprep.subr.bf16.mxu0 0
    %316 = vmatpush1.bf16.msra.mxu0 0
    %317 = vmatprep.subr.bf16.mxu0 0
    %318 = vmatpush1.bf16.msra.mxu0 0
    %319 = vmatprep.subr.bf16.mxu0 0
    %320 = vmatpush1.bf16.msra.mxu0 0
    %321 = vmatprep.subr.bf16.mxu0 0
    %322 = vmatpush1.bf16.msra.mxu0 0
    %323 = vmatprep.mubr.bf16.mxu0 0
    %324 = vmatmul.mubr.bf16.gmra.mrb[0].mxu0 %v111
    %v325 = vpop.f32.mrb[0].mxu0
    %v326 = vadd.f32 %v151, %v325
    %v327 = vpop.f32.mrb[0].mxu0
    %v328 = vadd.f32 %v155, %v327
    %v329 = vpop.f32.mrb[0].mxu0
    %v330 = vadd.f32 %v151, %v329
    %v331 = vpop.f32.mrb[0].mxu0
    %v332 = vadd.f32 %v155, %v331
    %333 = vmatprep.mubr.bf16.mxu0 0
    %334 = vmatmul.mubr.bf16.gmra.mrb[0].mxu0 %v112
    %v335 = vpop.f32.mrb[0].mxu0
    %v336 = vadd.f32 %v151, %v335
    %v337 = vpop.f32.mrb[0].mxu0
    %v338 = vadd.f32 %v155, %v337
    %v339 = vpop.f32.mrb[0].mxu0
    %v340 = vadd.f32 %v151, %v339
    %v341 = vpop.f32.mrb[0].mxu0
    %v342 = vadd.f32 %v155, %v341
    %343 = vmatprep.mubr.bf16.mxu0 0
    %344 = vmatmul.mubr.bf16.gmra.mrb[0].mxu0 %v113
    %v345 = vpop.f32.mrb[0].mxu0
    %v346 = vadd.f32 %v151, %v345
    %v347 = vpop.f32.mrb[0].mxu0
    %v348 = vadd.f32 %v155, %v347
    %v349 = vpop.f32.mrb[0].mxu0
    %v350 = vadd.f32 %v151, %v349
    %v351 = vpop.f32.mrb[0].mxu0
    %v352 = vadd.f32 %v155, %v351
    %353 = vmatprep.mubr.bf16.mxu0 0
    %354 = vmatmul.mubr.bf16.gmra.mrb[0].mxu0 %v114
    %v355 = vpop.f32.mrb[0].mxu0
    %v356 = vadd.f32 %v151, %v355
    %v357 = vpop.f32.mrb[0].mxu0
    %v358 = vadd.f32 %v155, %v357
    %v359 = vpop.f32.mrb[0].mxu0
    %v360 = vadd.f32 %v151, %v359
    %v361 = vpop.f32.mrb[0].mxu0
    %v362 = vadd.f32 %v155, %v361
    %363 = vdwg.mxu0
    %364 = vmatprep.subr.bf16.mxu0 0
    %365 = vmatpush1.bf16.msra.mxu0 %v245
    %366 = vmatprep.subr.bf16.mxu0 0
    %367 = vmatpush1.bf16.msra.mxu0 %v248
    %368 = vmatprep.subr.bf16.mxu0 0
    %369 = vmatpush1.bf16.msra.mxu0 %v251
    %370 = vmatprep.subr.bf16.mxu0 0
    %371 = vmatpush1.bf16.msra.mxu0 %v254
    %372 = vmatprep.subr.bf16.mxu0 0
    %373 = vmatpush1.bf16.msra.mxu0 %v257
    %374 = vmatprep.subr.bf16.mxu0 0
    %375 = vmatpush1.bf16.msra.mxu0 %v260
    %376 = vmatprep.subr.bf16.mxu0 0
    %377 = vmatpush1.bf16.msra.mxu0 %v263
    %378 = vmatprep.subr.bf16.mxu0 0
    %379 = vmatpush1.bf16.msra.mxu0 %v266
    %380 = vmatprep.subr.bf16.mxu0 0
    %381 = vmatpush1.bf16.msra.mxu0 0
    %382 = vmatprep.subr.bf16.mxu0 0
    %383 = vmatpush1.bf16.msra.mxu0 0
    %384 = vmatprep.subr.bf16.mxu0 0
    %385 = vmatpush1.bf16.msra.mxu0 0
    %386 = vmatprep.subr.bf16.mxu0 0
    %387 = vmatpush1.bf16.msra.mxu0 0
    %388 = vmatprep.subr.bf16.mxu0 0
    %389 = vmatpush1.bf16.msra.mxu0 0
    %390 = vmatprep.subr.bf16.mxu0 0
    %391 = vmatpush1.bf16.msra.mxu0 0
    %392 = vmatprep.subr.bf16.mxu0 0
    %393 = vmatpush1.bf16.msra.mxu0 0
    %394 = vmatprep.subr.bf16.mxu0 0
    %395 = vmatpush1.bf16.msra.mxu0 0
    %396 = vmatprep.mubr.bf16.mxu0 0
    %397 = vmatmul.mubr.bf16.gmra.mrb[0].mxu0 %v111
    %v398 = vpop.f32.mrb[0].mxu0
    %v399 = vadd.f32 %v159, %v398
    %v400 = vpop.f32.mrb[0].mxu0
    %v401 = vpop.f32.mrb[0].mxu0
    %v402 = vadd.f32 %v159, %v401
    %v403 = vpop.f32.mrb[0].mxu0
    %404 = vmatprep.mubr.bf16.mxu0 0
    %405 = vmatmul.mubr.bf16.gmra.mrb[0].mxu0 %v112
    %v406 = vpop.f32.mrb[0].mxu0
    %v407 = vadd.f32 %v159, %v406
    %v408 = vpop.f32.mrb[0].mxu0
    %v409 = vpop.f32.mrb[0].mxu0
    %v410 = vadd.f32 %v159, %v409
    %v411 = vpop.f32.mrb[0].mxu0
    %412 = vmatprep.mubr.bf16.mxu0 0
    %413 = vmatmul.mubr.bf16.gmra.mrb[0].mxu0 %v113
    %v414 = vpop.f32.mrb[0].mxu0
    %v415 = vadd.f32 %v159, %v414
    %v416 = vpop.f32.mrb[0].mxu0
    %v417 = vpop.f32.mrb[0].mxu0
    %v418 = vadd.f32 %v159, %v417
    %v419 = vpop.f32.mrb[0].mxu0
    %420 = vmatprep.mubr.bf16.mxu0 0
    %421 = vmatmul.mubr.bf16.gmra.mrb[0].mxu0 %v114
    %v422 = vpop.f32.mrb[0].mxu0
    %v423 = vadd.f32 %v159, %v422
    %v424 = vpop.f32.mrb[0].mxu0
    %v425 = vpop.f32.mrb[0].mxu0
    %v426 = vadd.f32 %v159, %v425
    %v427 = vpop.f32.mrb[0].mxu0
    %428 = vdwg.mxu0
    %v429 = vpack.c.bf16 %v326, %v326
    %v430 = vpack.c.bf16 %v330, %v330
    %v431 = vpack.c.bf16 %v336, %v336
    %v432 = vpack.c.bf16 %v340, %v340
    %v433 = vpack.c.bf16 %v346, %v346
    %v434 = vpack.c.bf16 %v350, %v350
    %v435 = vpack.c.bf16 %v356, %v356
    %v436 = vpack.c.bf16 %v360, %v360
    %v437 = vpack.c.bf16 %v328, %v328
    %v438 = vpack.c.bf16 %v332, %v332
    %v439 = vpack.c.bf16 %v338, %v338
    %v440 = vpack.c.bf16 %v342, %v342
    %v441 = vpack.c.bf16 %v348, %v348
    %v442 = vpack.c.bf16 %v352, %v352
    %v443 = vpack.c.bf16 %v358, %v358
    %v444 = vpack.c.bf16 %v362, %v362
    %v445 = vpack.c.bf16 %v399, %v399
    %v446 = vpack.c.bf16 %v402, %v402
    %v447 = vpack.c.bf16 %v407, %v407
    %v448 = vpack.c.bf16 %v410, %v410
    %v449 = vpack.c.bf16 %v415, %v415
    %v450 = vpack.c.bf16 %v418, %v418
    %v451 = vpack.c.bf16 %v423, %v423
    %v452 = vpack.c.bf16 %v426, %v426
    %vm453 = vcmp.gt.f32.partialorder %v94, 0.0
    %vm454 = vcmp.gt.f32.partialorder %v95, 0.0
    %vm455 = vcmp.gt.f32.partialorder %v96, 0.0
    %vm456 = vcmp.gt.f32.partialorder %v97, 0.0
    %vm457 = vcmp.gt.f32.partialorder %v98, 0.0
    %vm458 = vcmp.gt.f32.partialorder %v99, 0.0
    %vm459 = vcmp.gt.f32.partialorder %v100, 0.0
    %vm460 = vcmp.gt.f32.partialorder %v101, 0.0
    %v461 = vsel %vm453, 0.0, -1e+09
    %v462 = vsel %vm454, 0.0, -1e+09
    %v463 = vsel %vm455, 0.0, -1e+09
    %v464 = vsel %vm456, 0.0, -1e+09
    %v465 = vsel %vm457, 0.0, -1e+09
    %v466 = vsel %vm458, 0.0, -1e+09
    %v467 = vsel %vm459, 0.0, -1e+09
    %v468 = vsel %vm460, 0.0, -1e+09
    %vm469 = vcmask 261120
    %v471 = vsel %vm469, %v429, 0
    %v474 = vsel %vm469, %v437, 0
    %476 = vmatprep.subr.bf16.mxu0 0
    %477 = vmatpush1.bf16.xpose.msra.mxu0 %v474
    %478 = vmatprep.subr.bf16.mxu0 0
    %479 = vmatpush1.bf16.xpose.msra.mxu0 0
    %480 = vmatprep.subr.bf16.mxu0 0
    %481 = vmatpush1.bf16.xpose.msra.mxu0 0
    %482 = vmatprep.subr.bf16.mxu0 0
    %483 = vmatpush1.bf16.xpose.msra.mxu0 0
    %484 = vmatprep.subr.bf16.mxu0 0
    %485 = vmatpush1.bf16.xpose.msra.mxu0 0
    %486 = vmatprep.subr.bf16.mxu0 0
    %487 = vmatpush1.bf16.xpose.msra.mxu0 0
    %488 = vmatprep.subr.bf16.mxu0 0
    %489 = vmatpush1.bf16.xpose.msra.mxu0 0
    %490 = vmatprep.subr.bf16.mxu0 0
    %491 = vmatpush1.bf16.xpose.msra.mxu0 0
    %492 = vmatprep.subr.bf16.mxu0 0
    %493 = vmatpush1.bf16.xpose.msra.mxu0 0
    %494 = vmatprep.subr.bf16.mxu0 0
    %495 = vmatpush1.bf16.xpose.msra.mxu0 0
    %496 = vmatprep.subr.bf16.mxu0 0
    %497 = vmatpush1.bf16.xpose.msra.mxu0 0
    %498 = vmatprep.subr.bf16.mxu0 0
    %499 = vmatpush1.bf16.xpose.msra.mxu0 0
    %500 = vmatprep.subr.bf16.mxu0 0
    %501 = vmatpush1.bf16.xpose.msra.mxu0 0
    %502 = vmatprep.subr.bf16.mxu0 0
    %503 = vmatpush1.bf16.xpose.msra.mxu0 0
    %504 = vmatprep.subr.bf16.mxu0 0
    %505 = vmatpush1.bf16.xpose.msra.mxu0 0
    %506 = vmatprep.subr.bf16.mxu0 0
    %507 = vmatpush1.bf16.xpose.msra.mxu0 0
    %508 = vmatprep.mubr.bf16.mxu0 0
    %509 = vmatmul.mubr.bf16.gmra.mrb[0].mxu0 %v471
    %v510 = vpop.f32.mrb[0].mxu0
    %v511 = vadd.f32 0.0, %v510
    %v512 = vpop.f32.mrb[0].mxu0
    %v513 = vpop.f32.mrb[0].mxu0
    %v514 = vpop.f32.mrb[0].mxu0
    %515 = vdwg.mxu0
    %v517 = vsel %vm469, %v430, 0
    %v520 = vsel %vm469, %v438, 0
    %522 = vmatprep.subr.bf16.mxu0 0
    %523 = vmatpush1.bf16.xpose.msra.mxu0 %v520
    %524 = vmatprep.subr.bf16.mxu0 0
    %525 = vmatpush1.bf16.xpose.msra.mxu0 0
    %526 = vmatprep.subr.bf16.mxu0 0
    %527 = vmatpush1.bf16.xpose.msra.mxu0 0
    %528 = vmatprep.subr.bf16.mxu0 0
    %529 = vmatpush1.bf16.xpose.msra.mxu0 0
    %530 = vmatprep.subr.bf16.mxu0 0
    %531 = vmatpush1.bf16.xpose.msra.mxu0 0
    %532 = vmatprep.subr.bf16.mxu0 0
    %533 = vmatpush1.bf16.xpose.msra.mxu0 0
    %534 = vmatprep.subr.bf16.mxu0 0
    %535 = vmatpush1.bf16.xpose.msra.mxu0 0
    %536 = vmatprep.subr.bf16.mxu0 0
    %537 = vmatpush1.bf16.xpose.msra.mxu0 0
    %538 = vmatprep.subr.bf16.mxu0 0
    %539 = vmatpush1.bf16.xpose.msra.mxu0 0
    %540 = vmatprep.subr.bf16.mxu0 0
    %541 = vmatpush1.bf16.xpose.msra.mxu0 0
    %542 = vmatprep.subr.bf16.mxu0 0
    %543 = vmatpush1.bf16.xpose.msra.mxu0 0
    %544 = vmatprep.subr.bf16.mxu0 0
    %545 = vmatpush1.bf16.xpose.msra.mxu0 0
    %546 = vmatprep.subr.bf16.mxu0 0
    %547 = vmatpush1.bf16.xpose.msra.mxu0 0
    %548 = vmatprep.subr.bf16.mxu0 0
    %549 = vmatpush1.bf16.xpose.msra.mxu0 0
    %550 = vmatprep.subr.bf16.mxu0 0
    %551 = vmatpush1.bf16.xpose.msra.mxu0 0
    %552 = vmatprep.subr.bf16.mxu0 0
    %553 = vmatpush1.bf16.xpose.msra.mxu0 0
    %554 = vmatprep.mubr.bf16.mxu0 0
    %555 = vmatmul.mubr.bf16.gmra.mrb[0].mxu0 %v517
    %v556 = vpop.f32.mrb[0].mxu0
    %v557 = vadd.f32 0.0, %v556
    %v558 = vpop.f32.mrb[0].mxu0
    %v559 = vpop.f32.mrb[0].mxu0
    %v560 = vpop.f32.mrb[0].mxu0
    %561 = vdwg.mxu0
    %v563 = vsel %vm469, %v431, 0
    %v566 = vsel %vm469, %v439, 0
    %568 = vmatprep.subr.bf16.mxu0 0
    %569 = vmatpush1.bf16.xpose.msra.mxu0 %v566
    %570 = vmatprep.subr.bf16.mxu0 0
    %571 = vmatpush1.bf16.xpose.msra.mxu0 0
    %572 = vmatprep.subr.bf16.mxu0 0
    %573 = vmatpush1.bf16.xpose.msra.mxu0 0
    %574 = vmatprep.subr.bf16.mxu0 0
    %575 = vmatpush1.bf16.xpose.msra.mxu0 0
    %576 = vmatprep.subr.bf16.mxu0 0
    %577 = vmatpush1.bf16.xpose.msra.mxu0 0
    %578 = vmatprep.subr.bf16.mxu0 0
    %579 = vmatpush1.bf16.xpose.msra.mxu0 0
    %580 = vmatprep.subr.bf16.mxu0 0
    %581 = vmatpush1.bf16.xpose.msra.mxu0 0
    %582 = vmatprep.subr.bf16.mxu0 0
    %583 = vmatpush1.bf16.xpose.msra.mxu0 0
    %584 = vmatprep.subr.bf16.mxu0 0
    %585 = vmatpush1.bf16.xpose.msra.mxu0 0
    %586 = vmatprep.subr.bf16.mxu0 0
    %587 = vmatpush1.bf16.xpose.msra.mxu0 0
    %588 = vmatprep.subr.bf16.mxu0 0
    %589 = vmatpush1.bf16.xpose.msra.mxu0 0
    %590 = vmatprep.subr.bf16.mxu0 0
    %591 = vmatpush1.bf16.xpose.msra.mxu0 0
    %592 = vmatprep.subr.bf16.mxu0 0
    %593 = vmatpush1.bf16.xpose.msra.mxu0 0
    %594 = vmatprep.subr.bf16.mxu0 0
    %595 = vmatpush1.bf16.xpose.msra.mxu0 0
    %596 = vmatprep.subr.bf16.mxu0 0
    %597 = vmatpush1.bf16.xpose.msra.mxu0 0
    %598 = vmatprep.subr.bf16.mxu0 0
    %599 = vmatpush1.bf16.xpose.msra.mxu0 0
    %600 = vmatprep.mubr.bf16.mxu0 0
    %601 = vmatmul.mubr.bf16.gmra.mrb[0].mxu0 %v563
    %v602 = vpop.f32.mrb[0].mxu0
    %v603 = vadd.f32 0.0, %v602
    %v604 = vpop.f32.mrb[0].mxu0
    %v605 = vpop.f32.mrb[0].mxu0
    %v606 = vpop.f32.mrb[0].mxu0
    %607 = vdwg.mxu0
    %v609 = vsel %vm469, %v432, 0
    %v612 = vsel %vm469, %v440, 0
    %614 = vmatprep.subr.bf16.mxu0 0
    %615 = vmatpush1.bf16.xpose.msra.mxu0 %v612
    %616 = vmatprep.subr.bf16.mxu0 0
    %617 = vmatpush1.bf16.xpose.msra.mxu0 0
    %618 = vmatprep.subr.bf16.mxu0 0
    %619 = vmatpush1.bf16.xpose.msra.mxu0 0
    %620 = vmatprep.subr.bf16.mxu0 0
    %621 = vmatpush1.bf16.xpose.msra.mxu0 0
    %622 = vmatprep.subr.bf16.mxu0 0
    %623 = vmatpush1.bf16.xpose.msra.mxu0 0
    %624 = vmatprep.subr.bf16.mxu0 0
    %625 = vmatpush1.bf16.xpose.msra.mxu0 0
    %626 = vmatprep.subr.bf16.mxu0 0
    %627 = vmatpush1.bf16.xpose.msra.mxu0 0
    %628 = vmatprep.subr.bf16.mxu0 0
    %629 = vmatpush1.bf16.xpose.msra.mxu0 0
    %630 = vmatprep.subr.bf16.mxu0 0
    %631 = vmatpush1.bf16.xpose.msra.mxu0 0
    %632 = vmatprep.subr.bf16.mxu0 0
    %633 = vmatpush1.bf16.xpose.msra.mxu0 0
    %634 = vmatprep.subr.bf16.mxu0 0
    %635 = vmatpush1.bf16.xpose.msra.mxu0 0
    %636 = vmatprep.subr.bf16.mxu0 0
    %637 = vmatpush1.bf16.xpose.msra.mxu0 0
    %638 = vmatprep.subr.bf16.mxu0 0
    %639 = vmatpush1.bf16.xpose.msra.mxu0 0
    %640 = vmatprep.subr.bf16.mxu0 0
    %641 = vmatpush1.bf16.xpose.msra.mxu0 0
    %642 = vmatprep.subr.bf16.mxu0 0
    %643 = vmatpush1.bf16.xpose.msra.mxu0 0
    %644 = vmatprep.subr.bf16.mxu0 0
    %645 = vmatpush1.bf16.xpose.msra.mxu0 0
    %646 = vmatprep.mubr.bf16.mxu0 0
    %647 = vmatmul.mubr.bf16.gmra.mrb[0].mxu0 %v609
    %v648 = vpop.f32.mrb[0].mxu0
    %v649 = vadd.f32 0.0, %v648
    %v650 = vpop.f32.mrb[0].mxu0
    %v651 = vpop.f32.mrb[0].mxu0
    %v652 = vpop.f32.mrb[0].mxu0
    %653 = vdwg.mxu0
    %v655 = vsel %vm469, %v433, 0
    %v658 = vsel %vm469, %v441, 0
    %660 = vmatprep.subr.bf16.mxu0 0
    %661 = vmatpush1.bf16.xpose.msra.mxu0 %v658
    %662 = vmatprep.subr.bf16.mxu0 0
    %663 = vmatpush1.bf16.xpose.msra.mxu0 0
    %664 = vmatprep.subr.bf16.mxu0 0
    %665 = vmatpush1.bf16.xpose.msra.mxu0 0
    %666 = vmatprep.subr.bf16.mxu0 0
    %667 = vmatpush1.bf16.xpose.msra.mxu0 0
    %668 = vmatprep.subr.bf16.mxu0 0
    %669 = vmatpush1.bf16.xpose.msra.mxu0 0
    %670 = vmatprep.subr.bf16.mxu0 0
    %671 = vmatpush1.bf16.xpose.msra.mxu0 0
    %672 = vmatprep.subr.bf16.mxu0 0
    %673 = vmatpush1.bf16.xpose.msra.mxu0 0
    %674 = vmatprep.subr.bf16.mxu0 0
    %675 = vmatpush1.bf16.xpose.msra.mxu0 0
    %676 = vmatprep.subr.bf16.mxu0 0
    %677 = vmatpush1.bf16.xpose.msra.mxu0 0
    %678 = vmatprep.subr.bf16.mxu0 0
    %679 = vmatpush1.bf16.xpose.msra.mxu0 0
    %680 = vmatprep.subr.bf16.mxu0 0
    %681 = vmatpush1.bf16.xpose.msra.mxu0 0
    %682 = vmatprep.subr.bf16.mxu0 0
    %683 = vmatpush1.bf16.xpose.msra.mxu0 0
    %684 = vmatprep.subr.bf16.mxu0 0
    %685 = vmatpush1.bf16.xpose.msra.mxu0 0
    %686 = vmatprep.subr.bf16.mxu0 0
    %687 = vmatpush1.bf16.xpose.msra.mxu0 0
    %688 = vmatprep.subr.bf16.mxu0 0
    %689 = vmatpush1.bf16.xpose.msra.mxu0 0
    %690 = vmatprep.subr.bf16.mxu0 0
    %691 = vmatpush1.bf16.xpose.msra.mxu0 0
    %692 = vmatprep.mubr.bf16.mxu0 0
    %693 = vmatmul.mubr.bf16.gmra.mrb[0].mxu0 %v655
    %v694 = vpop.f32.mrb[0].mxu0
    %v695 = vadd.f32 0.0, %v694
    %v696 = vpop.f32.mrb[0].mxu0
    %v697 = vpop.f32.mrb[0].mxu0
    %v698 = vpop.f32.mrb[0].mxu0
    %699 = vdwg.mxu0
    %v701 = vsel %vm469, %v434, 0
    %v704 = vsel %vm469, %v442, 0
    %706 = vmatprep.subr.bf16.mxu0 0
    %707 = vmatpush1.bf16.xpose.msra.mxu0 %v704
    %708 = vmatprep.subr.bf16.mxu0 0
    %709 = vmatpush1.bf16.xpose.msra.mxu0 0
    %710 = vmatprep.subr.bf16.mxu0 0
    %711 = vmatpush1.bf16.xpose.msra.mxu0 0
    %712 = vmatprep.subr.bf16.mxu0 0
    %713 = vmatpush1.bf16.xpose.msra.mxu0 0
    %714 = vmatprep.subr.bf16.mxu0 0
    %715 = vmatpush1.bf16.xpose.msra.mxu0 0
    %716 = vmatprep.subr.bf16.mxu0 0
    %717 = vmatpush1.bf16.xpose.msra.mxu0 0
    %718 = vmatprep.subr.bf16.mxu0 0
    %719 = vmatpush1.bf16.xpose.msra.mxu0 0
    %720 = vmatprep.subr.bf16.mxu0 0
    %721 = vmatpush1.bf16.xpose.msra.mxu0 0
    %722 = vmatprep.subr.bf16.mxu0 0
    %723 = vmatpush1.bf16.xpose.msra.mxu0 0
    %724 = vmatprep.subr.bf16.mxu0 0
    %725 = vmatpush1.bf16.xpose.msra.mxu0 0
    %726 = vmatprep.subr.bf16.mxu0 0
    %727 = vmatpush1.bf16.xpose.msra.mxu0 0
    %728 = vmatprep.subr.bf16.mxu0 0
    %729 = vmatpush1.bf16.xpose.msra.mxu0 0
    %730 = vmatprep.subr.bf16.mxu0 0
    %731 = vmatpush1.bf16.xpose.msra.mxu0 0
    %732 = vmatprep.subr.bf16.mxu0 0
    %733 = vmatpush1.bf16.xpose.msra.mxu0 0
    %734 = vmatprep.subr.bf16.mxu0 0
    %735 = vmatpush1.bf16.xpose.msra.mxu0 0
    %736 = vmatprep.subr.bf16.mxu0 0
    %737 = vmatpush1.bf16.xpose.msra.mxu0 0
    %738 = vmatprep.mubr.bf16.mxu0 0
    %739 = vmatmul.mubr.bf16.gmra.mrb[0].mxu0 %v701
    %v740 = vpop.f32.mrb[0].mxu0
    %v741 = vadd.f32 0.0, %v740
    %v742 = vpop.f32.mrb[0].mxu0
    %v743 = vpop.f32.mrb[0].mxu0
    %v744 = vpop.f32.mrb[0].mxu0
    %745 = vdwg.mxu0
    %v747 = vsel %vm469, %v435, 0
    %v750 = vsel %vm469, %v443, 0
    %752 = vmatprep.subr.bf16.mxu0 0
    %753 = vmatpush1.bf16.xpose.msra.mxu0 %v750
    %754 = vmatprep.subr.bf16.mxu0 0
    %755 = vmatpush1.bf16.xpose.msra.mxu0 0
    %756 = vmatprep.subr.bf16.mxu0 0
    %757 = vmatpush1.bf16.xpose.msra.mxu0 0
    %758 = vmatprep.subr.bf16.mxu0 0
    %759 = vmatpush1.bf16.xpose.msra.mxu0 0
    %760 = vmatprep.subr.bf16.mxu0 0
    %761 = vmatpush1.bf16.xpose.msra.mxu0 0
    %762 = vmatprep.subr.bf16.mxu0 0
    %763 = vmatpush1.bf16.xpose.msra.mxu0 0
    %764 = vmatprep.subr.bf16.mxu0 0
    %765 = vmatpush1.bf16.xpose.msra.mxu0 0
    %766 = vmatprep.subr.bf16.mxu0 0
    %767 = vmatpush1.bf16.xpose.msra.mxu0 0
    %768 = vmatprep.subr.bf16.mxu0 0
    %769 = vmatpush1.bf16.xpose.msra.mxu0 0
    %770 = vmatprep.subr.bf16.mxu0 0
    %771 = vmatpush1.bf16.xpose.msra.mxu0 0
    %772 = vmatprep.subr.bf16.mxu0 0
    %773 = vmatpush1.bf16.xpose.msra.mxu0 0
    %774 = vmatprep.subr.bf16.mxu0 0
    %775 = vmatpush1.bf16.xpose.msra.mxu0 0
    %776 = vmatprep.subr.bf16.mxu0 0
    %777 = vmatpush1.bf16.xpose.msra.mxu0 0
    %778 = vmatprep.subr.bf16.mxu0 0
    %779 = vmatpush1.bf16.xpose.msra.mxu0 0
    %780 = vmatprep.subr.bf16.mxu0 0
    %781 = vmatpush1.bf16.xpose.msra.mxu0 0
    %782 = vmatprep.subr.bf16.mxu0 0
    %783 = vmatpush1.bf16.xpose.msra.mxu0 0
    %784 = vmatprep.mubr.bf16.mxu0 0
    %785 = vmatmul.mubr.bf16.gmra.mrb[0].mxu0 %v747
    %v786 = vpop.f32.mrb[0].mxu0
    %v787 = vadd.f32 0.0, %v786
    %v788 = vpop.f32.mrb[0].mxu0
    %v789 = vpop.f32.mrb[0].mxu0
    %v790 = vpop.f32.mrb[0].mxu0
    %791 = vdwg.mxu0
    %v793 = vsel %vm469, %v436, 0
    %v796 = vsel %vm469, %v444, 0
    %798 = vmatprep.subr.bf16.mxu0 0
    %799 = vmatpush1.bf16.xpose.msra.mxu0 %v796
    %800 = vmatprep.subr.bf16.mxu0 0
    %801 = vmatpush1.bf16.xpose.msra.mxu0 0
    %802 = vmatprep.subr.bf16.mxu0 0
    %803 = vmatpush1.bf16.xpose.msra.mxu0 0
    %804 = vmatprep.subr.bf16.mxu0 0
    %805 = vmatpush1.bf16.xpose.msra.mxu0 0
    %806 = vmatprep.subr.bf16.mxu0 0
    %807 = vmatpush1.bf16.xpose.msra.mxu0 0
    %808 = vmatprep.subr.bf16.mxu0 0
    %809 = vmatpush1.bf16.xpose.msra.mxu0 0
    %810 = vmatprep.subr.bf16.mxu0 0
    %811 = vmatpush1.bf16.xpose.msra.mxu0 0
    %812 = vmatprep.subr.bf16.mxu0 0
    %813 = vmatpush1.bf16.xpose.msra.mxu0 0
    %814 = vmatprep.subr.bf16.mxu0 0
    %815 = vmatpush1.bf16.xpose.msra.mxu0 0
    %816 = vmatprep.subr.bf16.mxu0 0
    %817 = vmatpush1.bf16.xpose.msra.mxu0 0
    %818 = vmatprep.subr.bf16.mxu0 0
    %819 = vmatpush1.bf16.xpose.msra.mxu0 0
    %820 = vmatprep.subr.bf16.mxu0 0
    %821 = vmatpush1.bf16.xpose.msra.mxu0 0
    %822 = vmatprep.subr.bf16.mxu0 0
    %823 = vmatpush1.bf16.xpose.msra.mxu0 0
    %824 = vmatprep.subr.bf16.mxu0 0
    %825 = vmatpush1.bf16.xpose.msra.mxu0 0
    %826 = vmatprep.subr.bf16.mxu0 0
    %827 = vmatpush1.bf16.xpose.msra.mxu0 0
    %828 = vmatprep.subr.bf16.mxu0 0
    %829 = vmatpush1.bf16.xpose.msra.mxu0 0
    %830 = vmatprep.mubr.bf16.mxu0 0
    %831 = vmatmul.mubr.bf16.gmra.mrb[0].mxu0 %v793
    %v832 = vpop.f32.mrb[0].mxu0
    %v833 = vadd.f32 0.0, %v832
    %v834 = vpop.f32.mrb[0].mxu0
    %v835 = vpop.f32.mrb[0].mxu0
    %v836 = vpop.f32.mrb[0].mxu0
    %837 = vdwg.mxu0
    %v838 = vmul.f32 %v511, 0.17677669
    %v839 = vmul.f32 %v557, 0.17677669
    %v840 = vmul.f32 %v603, 0.17677669
    %v841 = vmul.f32 %v649, 0.17677669
    %v842 = vmul.f32 %v695, 0.17677669
    %v843 = vmul.f32 %v741, 0.17677669
    %v844 = vmul.f32 %v787, 0.17677669
    %v845 = vmul.f32 %v833, 0.17677669
    %854 = vset.pattern.permute.xlu0 0
    %855 = vperm.xlu0 %854, %v461
    %v856 = vpop.permute.xlu0 %855
    %857 = vset.pattern.permute.xlu0 0
    %858 = vperm.xlu0 %857, %v462
    %v859 = vpop.permute.xlu0 %858
    %860 = vset.pattern.permute.xlu0 0
    %861 = vperm.xlu0 %860, %v463
    %v862 = vpop.permute.xlu0 %861
    %863 = vset.pattern.permute.xlu0 0
    %864 = vperm.xlu0 %863, %v464
    %v865 = vpop.permute.xlu0 %864
    %866 = vset.pattern.permute.xlu0 0
    %867 = vperm.xlu0 %866, %v465
    %v868 = vpop.permute.xlu0 %867
    %869 = vset.pattern.permute.xlu0 0
    %870 = vperm.xlu0 %869, %v466
    %v871 = vpop.permute.xlu0 %870
    %872 = vset.pattern.permute.xlu0 0
    %873 = vperm.xlu0 %872, %v467
    %v874 = vpop.permute.xlu0 %873
    %875 = vset.pattern.permute.xlu0 0
    %876 = vperm.xlu0 %875, %v468
    %v877 = vpop.permute.xlu0 %876
    %v878 = vlaneseq
    %v879 = vand.u32 %v878, 127
    %v880 = vlaneseq
    %v881 = vshrl.u32 %v880, 7
    %v882 = vsub.s32 %v879, %v881
    %v883 = vrot.slane %v856, %v882
    %v884 = vlaneseq
    %v885 = vshrl.u32 %v884, 7
    %v886 = vsub.s32 %v879, %v885
    %v887 = vrot.slane %v859, %v886
    %v888 = vlaneseq
    %v889 = vshrl.u32 %v888, 7
    %v890 = vsub.s32 %v879, %v889
    %v891 = vrot.slane %v862, %v890
    %v892 = vlaneseq
    %v893 = vshrl.u32 %v892, 7
    %v894 = vsub.s32 %v879, %v893
    %v895 = vrot.slane %v865, %v894
    %v896 = vlaneseq
    %v897 = vshrl.u32 %v896, 7
    %v898 = vsub.s32 %v879, %v897
    %v899 = vrot.slane %v868, %v898
    %v900 = vlaneseq
    %v901 = vshrl.u32 %v900, 7
    %v902 = vsub.s32 %v879, %v901
    %v903 = vrot.slane %v871, %v902
    %v904 = vlaneseq
    %v905 = vshrl.u32 %v904, 7
    %v906 = vsub.s32 %v879, %v905
    %v907 = vrot.slane %v874, %v906
    %v908 = vlaneseq
    %v909 = vshrl.u32 %v908, 7
    %v910 = vsub.s32 %v879, %v909
    %v911 = vrot.slane %v877, %v910
    %vm912 = vcmask 1042434
    %v913 = vsel %vm912, %v883, %v883
    %vm914 = vcmask 1043459
    %v915 = vsel %vm914, %v883, %v913
    %vm916 = vcmask 1044484
    %v917 = vsel %vm916, %v883, %v915
    %vm918 = vcmask 1045509
    %v919 = vsel %vm918, %v883, %v917
    %vm920 = vcmask 1046534
    %v921 = vsel %vm920, %v883, %v919
    %vm922 = vcmask 1047559
    %v923 = vsel %vm922, %v883, %v921
    %v924 = vsel %vm912, %v887, %v887
    %v925 = vsel %vm914, %v887, %v924
    %v926 = vsel %vm916, %v887, %v925
    %v927 = vsel %vm918, %v887, %v926
    %v928 = vsel %vm920, %v887, %v927
    %v929 = vsel %vm922, %v887, %v928
    %v930 = vsel %vm912, %v891, %v891
    %v931 = vsel %vm914, %v891, %v930
    %v932 = vsel %vm916, %v891, %v931
    %v933 = vsel %vm918, %v891, %v932
    %v934 = vsel %vm920, %v891, %v933
    %v935 = vsel %vm922, %v891, %v934
    %v936 = vsel %vm912, %v895, %v895
    %v937 = vsel %vm914, %v895, %v936
    %v938 = vsel %vm916, %v895, %v937
    %v939 = vsel %vm918, %v895, %v938
    %v940 = vsel %vm920, %v895, %v939
    %v941 = vsel %vm922, %v895, %v940
    %v942 = vsel %vm912, %v899, %v899
    %v943 = vsel %vm914, %v899, %v942
    %v944 = vsel %vm916, %v899, %v943
    %v945 = vsel %vm918, %v899, %v944
    %v946 = vsel %vm920, %v899, %v945
    %v947 = vsel %vm922, %v899, %v946
    %v948 = vsel %vm912, %v903, %v903
    %v949 = vsel %vm914, %v903, %v948
    %v950 = vsel %vm916, %v903, %v949
    %v951 = vsel %vm918, %v903, %v950
    %v952 = vsel %vm920, %v903, %v951
    %v953 = vsel %vm922, %v903, %v952
    %v954 = vsel %vm912, %v907, %v907
    %v955 = vsel %vm914, %v907, %v954
    %v956 = vsel %vm916, %v907, %v955
    %v957 = vsel %vm918, %v907, %v956
    %v958 = vsel %vm920, %v907, %v957
    %v959 = vsel %vm922, %v907, %v958
    %v960 = vsel %vm912, %v911, %v911
    %v961 = vsel %vm914, %v911, %v960
    %v962 = vsel %vm916, %v911, %v961
    %v963 = vsel %vm918, %v911, %v962
    %v964 = vsel %vm920, %v911, %v963
    %v965 = vsel %vm922, %v911, %v964
    %v974 = vadd.f32 %v838, %v923
    %v975 = vadd.f32 %v839, %v929
    %v976 = vadd.f32 %v840, %v935
    %v977 = vadd.f32 %v841, %v941
    %v978 = vadd.f32 %v842, %v947
    %v979 = vadd.f32 %v843, %v953
    %v980 = vadd.f32 %v844, %v959
    %v981 = vadd.f32 %v845, %v965
    %vm982 = vcmask 64512
    %v983 = vsel %vm982, %v974, -inf
    %984 = vmax.xlane.f32.xlu0 %v983
    %v985 = vpop.xlane.xlu0 %984
    %v986 = vsel %vm982, %v975, -inf
    %987 = vmax.xlane.f32.xlu0 %v986
    %v988 = vpop.xlane.xlu0 %987
    %v989 = vsel %vm982, %v976, -inf
    %990 = vmax.xlane.f32.xlu0 %v989
    %v991 = vpop.xlane.xlu0 %990
    %v992 = vsel %vm982, %v977, -inf
    %993 = vmax.xlane.f32.xlu0 %v992
    %v994 = vpop.xlane.xlu0 %993
    %v995 = vsel %vm982, %v978, -inf
    %996 = vmax.xlane.f32.xlu0 %v995
    %v997 = vpop.xlane.xlu0 %996
    %v998 = vsel %vm982, %v979, -inf
    %999 = vmax.xlane.f32.xlu0 %v998
    %v1000 = vpop.xlane.xlu0 %999
    %v1001 = vsel %vm982, %v980, -inf
    %1002 = vmax.xlane.f32.xlu0 %v1001
    %v1003 = vpop.xlane.xlu0 %1002
    %v1004 = vsel %vm982, %v981, -inf
    %1005 = vmax.xlane.f32.xlu0 %v1004
    %v1006 = vpop.xlane.xlu0 %1005
    %v1007 = vsub.f32 %v974, %v985
    %v1008 = vsub.f32 %v975, %v988
    %v1009 = vsub.f32 %v976, %v991
    %v1010 = vsub.f32 %v977, %v994
    %v1011 = vsub.f32 %v978, %v997
    %v1012 = vsub.f32 %v979, %v1000
    %v1013 = vsub.f32 %v980, %v1003
    %v1014 = vsub.f32 %v981, %v1006
    %v1015 = vmul.f32 %v1007, 1.442695
    %v1016 = vpow.pop %v1015
    %v1017 = vmul.f32 %v1008, 1.442695
    %v1018 = vpow.pop %v1017
    %v1019 = vmul.f32 %v1009, 1.442695
    %v1020 = vpow.pop %v1019
    %v1021 = vmul.f32 %v1010, 1.442695
    %v1022 = vpow.pop %v1021
    %v1023 = vmul.f32 %v1011, 1.442695
    %v1024 = vpow.pop %v1023
    %v1025 = vmul.f32 %v1012, 1.442695
    %v1026 = vpow.pop %v1025
    %v1027 = vmul.f32 %v1013, 1.442695
    %v1028 = vpow.pop %v1027
    %v1029 = vmul.f32 %v1014, 1.442695
    %v1030 = vpow.pop %v1029
    %v1031 = vsel %vm982, %v1016, 0.0
    %1032 = vadd.xlane.f32.xlu0 %v1031
    %v1033 = vpop.xlane.xlu0 %1032
    %v1034 = vsel %vm982, %v1018, 0.0
    %1035 = vadd.xlane.f32.xlu0 %v1034
    %v1036 = vpop.xlane.xlu0 %1035
    %v1037 = vsel %vm982, %v1020, 0.0
    %1038 = vadd.xlane.f32.xlu0 %v1037
    %v1039 = vpop.xlane.xlu0 %1038
    %v1040 = vsel %vm982, %v1022, 0.0
    %1041 = vadd.xlane.f32.xlu0 %v1040
    %v1042 = vpop.xlane.xlu0 %1041
    %v1043 = vsel %vm982, %v1024, 0.0
    %1044 = vadd.xlane.f32.xlu0 %v1043
    %v1045 = vpop.xlane.xlu0 %1044
    %v1046 = vsel %vm982, %v1026, 0.0
    %1047 = vadd.xlane.f32.xlu0 %v1046
    %v1048 = vpop.xlane.xlu0 %1047
    %v1049 = vsel %vm982, %v1028, 0.0
    %1050 = vadd.xlane.f32.xlu0 %v1049
    %v1051 = vpop.xlane.xlu0 %1050
    %v1052 = vsel %vm982, %v1030, 0.0
    %1053 = vadd.xlane.f32.xlu0 %v1052
    %v1054 = vpop.xlane.xlu0 %1053
    %v1055 = vrcp.pop %v1033
    %v1056 = vrcp.pop %v1036
    %v1057 = vrcp.pop %v1039
    %v1058 = vrcp.pop %v1042
    %v1059 = vrcp.pop %v1045
    %v1060 = vrcp.pop %v1048
    %v1061 = vrcp.pop %v1051
    %v1062 = vrcp.pop %v1054
    %v1063 = vmul.f32 %v1016, %v1055
    %v1064 = vmul.f32 %v1018, %v1056
    %v1065 = vmul.f32 %v1020, %v1057
    %v1066 = vmul.f32 %v1022, %v1058
    %v1067 = vmul.f32 %v1024, %v1059
    %v1068 = vmul.f32 %v1026, %v1060
    %v1069 = vmul.f32 %v1028, %v1061
    %v1070 = vmul.f32 %v1030, %v1062
    %v1071 = vpack.c.bf16 %v1063, %v1063
    %v1072 = vpack.c.bf16 %v1064, %v1064
    %v1073 = vpack.c.bf16 %v1065, %v1065
    %v1074 = vpack.c.bf16 %v1066, %v1066
    %v1075 = vpack.c.bf16 %v1067, %v1067
    %v1076 = vpack.c.bf16 %v1068, %v1068
    %v1077 = vpack.c.bf16 %v1069, %v1069
    %v1078 = vpack.c.bf16 %v1070, %v1070
    %v1080 = vsel %vm982, %v1071, 0
    %vm1082 = vcmask 1043456
    %v1084 = vsel %vm1082, %v445, 0
    %1086 = vmatprep.subr.bf16.mxu0 0
    %1087 = vmatpush1.bf16.msra.mxu0 %v1084
    %1088 = vmatprep.subr.bf16.mxu0 0
    %1089 = vmatpush1.bf16.msra.mxu0 0
    %1090 = vmatprep.subr.bf16.mxu0 0
    %1091 = vmatpush1.bf16.msra.mxu0 0
    %1092 = vmatprep.subr.bf16.mxu0 0
    %1093 = vmatpush1.bf16.msra.mxu0 0
    %1094 = vmatprep.subr.bf16.mxu0 0
    %1095 = vmatpush1.bf16.msra.mxu0 0
    %1096 = vmatprep.subr.bf16.mxu0 0
    %1097 = vmatpush1.bf16.msra.mxu0 0
    %1098 = vmatprep.subr.bf16.mxu0 0
    %1099 = vmatpush1.bf16.msra.mxu0 0
    %1100 = vmatprep.subr.bf16.mxu0 0
    %1101 = vmatpush1.bf16.msra.mxu0 0
    %1102 = vmatprep.subr.bf16.mxu0 0
    %1103 = vmatpush1.bf16.msra.mxu0 0
    %1104 = vmatprep.subr.bf16.mxu0 0
    %1105 = vmatpush1.bf16.msra.mxu0 0
    %1106 = vmatprep.subr.bf16.mxu0 0
    %1107 = vmatpush1.bf16.msra.mxu0 0
    %1108 = vmatprep.subr.bf16.mxu0 0
    %1109 = vmatpush1.bf16.msra.mxu0 0
    %1110 = vmatprep.subr.bf16.mxu0 0
    %1111 = vmatpush1.bf16.msra.mxu0 0
    %1112 = vmatprep.subr.bf16.mxu0 0
    %1113 = vmatpush1.bf16.msra.mxu0 0
    %1114 = vmatprep.subr.bf16.mxu0 0
    %1115 = vmatpush1.bf16.msra.mxu0 0
    %1116 = vmatprep.subr.bf16.mxu0 0
    %1117 = vmatpush1.bf16.msra.mxu0 0
    %1118 = vmatprep.mubr.bf16.mxu0 0
    %1119 = vmatmul.mubr.bf16.gmra.mrb[0].mxu0 %v1080
    %v1120 = vpop.f32.mrb[0].mxu0
    %v1121 = vadd.f32 0.0, %v1120
    %v1122 = vpop.f32.mrb[0].mxu0
    %v1123 = vpop.f32.mrb[0].mxu0
    %v1124 = vpop.f32.mrb[0].mxu0
    %1125 = vdwg.mxu0
    %v1127 = vsel %vm982, %v1072, 0
    %v1130 = vsel %vm1082, %v446, 0
    %1132 = vmatprep.subr.bf16.mxu0 0
    %1133 = vmatpush1.bf16.msra.mxu0 %v1130
    %1134 = vmatprep.subr.bf16.mxu0 0
    %1135 = vmatpush1.bf16.msra.mxu0 0
    %1136 = vmatprep.subr.bf16.mxu0 0
    %1137 = vmatpush1.bf16.msra.mxu0 0
    %1138 = vmatprep.subr.bf16.mxu0 0
    %1139 = vmatpush1.bf16.msra.mxu0 0
    %1140 = vmatprep.subr.bf16.mxu0 0
    %1141 = vmatpush1.bf16.msra.mxu0 0
    %1142 = vmatprep.subr.bf16.mxu0 0
    %1143 = vmatpush1.bf16.msra.mxu0 0
    %1144 = vmatprep.subr.bf16.mxu0 0
    %1145 = vmatpush1.bf16.msra.mxu0 0
    %1146 = vmatprep.subr.bf16.mxu0 0
    %1147 = vmatpush1.bf16.msra.mxu0 0
    %1148 = vmatprep.subr.bf16.mxu0 0
    %1149 = vmatpush1.bf16.msra.mxu0 0
    %1150 = vmatprep.subr.bf16.mxu0 0
    %1151 = vmatpush1.bf16.msra.mxu0 0
    %1152 = vmatprep.subr.bf16.mxu0 0
    %1153 = vmatpush1.bf16.msra.mxu0 0
    %1154 = vmatprep.subr.bf16.mxu0 0
    %1155 = vmatpush1.bf16.msra.mxu0 0
    %1156 = vmatprep.subr.bf16.mxu0 0
    %1157 = vmatpush1.bf16.msra.mxu0 0
    %1158 = vmatprep.subr.bf16.mxu0 0
    %1159 = vmatpush1.bf16.msra.mxu0 0
    %1160 = vmatprep.subr.bf16.mxu0 0
    %1161 = vmatpush1.bf16.msra.mxu0 0
    %1162 = vmatprep.subr.bf16.mxu0 0
    %1163 = vmatpush1.bf16.msra.mxu0 0
    %1164 = vmatprep.mubr.bf16.mxu0 0
    %1165 = vmatmul.mubr.bf16.gmra.mrb[0].mxu0 %v1127
    %v1166 = vpop.f32.mrb[0].mxu0
    %v1167 = vadd.f32 0.0, %v1166
    %v1168 = vpop.f32.mrb[0].mxu0
    %v1169 = vpop.f32.mrb[0].mxu0
    %v1170 = vpop.f32.mrb[0].mxu0
    %1171 = vdwg.mxu0
    %v1173 = vsel %vm982, %v1073, 0
    %v1176 = vsel %vm1082, %v447, 0
    %1178 = vmatprep.subr.bf16.mxu0 0
    %1179 = vmatpush1.bf16.msra.mxu0 %v1176
    %1180 = vmatprep.subr.bf16.mxu0 0
    %1181 = vmatpush1.bf16.msra.mxu0 0
    %1182 = vmatprep.subr.bf16.mxu0 0
    %1183 = vmatpush1.bf16.msra.mxu0 0
    %1184 = vmatprep.subr.bf16.mxu0 0
    %1185 = vmatpush1.bf16.msra.mxu0 0
    %1186 = vmatprep.subr.bf16.mxu0 0
    %1187 = vmatpush1.bf16.msra.mxu0 0
    %1188 = vmatprep.subr.bf16.mxu0 0
    %1189 = vmatpush1.bf16.msra.mxu0 0
    %1190 = vmatprep.subr.bf16.mxu0 0
    %1191 = vmatpush1.bf16.msra.mxu0 0
    %1192 = vmatprep.subr.bf16.mxu0 0
    %1193 = vmatpush1.bf16.msra.mxu0 0
    %1194 = vmatprep.subr.bf16.mxu0 0
    %1195 = vmatpush1.bf16.msra.mxu0 0
    %1196 = vmatprep.subr.bf16.mxu0 0
    %1197 = vmatpush1.bf16.msra.mxu0 0
    %1198 = vmatprep.subr.bf16.mxu0 0
    %1199 = vmatpush1.bf16.msra.mxu0 0
    %1200 = vmatprep.subr.bf16.mxu0 0
    %1201 = vmatpush1.bf16.msra.mxu0 0
    %1202 = vmatprep.subr.bf16.mxu0 0
    %1203 = vmatpush1.bf16.msra.mxu0 0
    %1204 = vmatprep.subr.bf16.mxu0 0
    %1205 = vmatpush1.bf16.msra.mxu0 0
    %1206 = vmatprep.subr.bf16.mxu0 0
    %1207 = vmatpush1.bf16.msra.mxu0 0
    %1208 = vmatprep.subr.bf16.mxu0 0
    %1209 = vmatpush1.bf16.msra.mxu0 0
    %1210 = vmatprep.mubr.bf16.mxu0 0
    %1211 = vmatmul.mubr.bf16.gmra.mrb[0].mxu0 %v1173
    %v1212 = vpop.f32.mrb[0].mxu0
    %v1213 = vadd.f32 0.0, %v1212
    %v1214 = vpop.f32.mrb[0].mxu0
    %v1215 = vpop.f32.mrb[0].mxu0
    %v1216 = vpop.f32.mrb[0].mxu0
    %1217 = vdwg.mxu0
    %v1219 = vsel %vm982, %v1074, 0
    %v1222 = vsel %vm1082, %v448, 0
    %1224 = vmatprep.subr.bf16.mxu0 0
    %1225 = vmatpush1.bf16.msra.mxu0 %v1222
    %1226 = vmatprep.subr.bf16.mxu0 0
    %1227 = vmatpush1.bf16.msra.mxu0 0
    %1228 = vmatprep.subr.bf16.mxu0 0
    %1229 = vmatpush1.bf16.msra.mxu0 0
    %1230 = vmatprep.subr.bf16.mxu0 0
    %1231 = vmatpush1.bf16.msra.mxu0 0
    %1232 = vmatprep.subr.bf16.mxu0 0
    %1233 = vmatpush1.bf16.msra.mxu0 0
    %1234 = vmatprep.subr.bf16.mxu0 0
    %1235 = vmatpush1.bf16.msra.mxu0 0
    %1236 = vmatprep.subr.bf16.mxu0 0
    %1237 = vmatpush1.bf16.msra.mxu0 0
    %1238 = vmatprep.subr.bf16.mxu0 0
    %1239 = vmatpush1.bf16.msra.mxu0 0
    %1240 = vmatprep.subr.bf16.mxu0 0
    %1241 = vmatpush1.bf16.msra.mxu0 0
    %1242 = vmatprep.subr.bf16.mxu0 0
    %1243 = vmatpush1.bf16.msra.mxu0 0
    %1244 = vmatprep.subr.bf16.mxu0 0
    %1245 = vmatpush1.bf16.msra.mxu0 0
    %1246 = vmatprep.subr.bf16.mxu0 0
    %1247 = vmatpush1.bf16.msra.mxu0 0
    %1248 = vmatprep.subr.bf16.mxu0 0
    %1249 = vmatpush1.bf16.msra.mxu0 0
    %1250 = vmatprep.subr.bf16.mxu0 0
    %1251 = vmatpush1.bf16.msra.mxu0 0
    %1252 = vmatprep.subr.bf16.mxu0 0
    %1253 = vmatpush1.bf16.msra.mxu0 0
    %1254 = vmatprep.subr.bf16.mxu0 0
    %1255 = vmatpush1.bf16.msra.mxu0 0
    %1256 = vmatprep.mubr.bf16.mxu0 0
    %1257 = vmatmul.mubr.bf16.gmra.mrb[0].mxu0 %v1219
    %v1258 = vpop.f32.mrb[0].mxu0
    %v1259 = vadd.f32 0.0, %v1258
    %v1260 = vpop.f32.mrb[0].mxu0
    %v1261 = vpop.f32.mrb[0].mxu0
    %v1262 = vpop.f32.mrb[0].mxu0
    %1263 = vdwg.mxu0
    %v1265 = vsel %vm982, %v1075, 0
    %v1268 = vsel %vm1082, %v449, 0
    %1270 = vmatprep.subr.bf16.mxu0 0
    %1271 = vmatpush1.bf16.msra.mxu0 %v1268
    %1272 = vmatprep.subr.bf16.mxu0 0
    %1273 = vmatpush1.bf16.msra.mxu0 0
    %1274 = vmatprep.subr.bf16.mxu0 0
    %1275 = vmatpush1.bf16.msra.mxu0 0
    %1276 = vmatprep.subr.bf16.mxu0 0
    %1277 = vmatpush1.bf16.msra.mxu0 0
    %1278 = vmatprep.subr.bf16.mxu0 0
    %1279 = vmatpush1.bf16.msra.mxu0 0
    %1280 = vmatprep.subr.bf16.mxu0 0
    %1281 = vmatpush1.bf16.msra.mxu0 0
    %1282 = vmatprep.subr.bf16.mxu0 0
    %1283 = vmatpush1.bf16.msra.mxu0 0
    %1284 = vmatprep.subr.bf16.mxu0 0
    %1285 = vmatpush1.bf16.msra.mxu0 0
    %1286 = vmatprep.subr.bf16.mxu0 0
    %1287 = vmatpush1.bf16.msra.mxu0 0
    %1288 = vmatprep.subr.bf16.mxu0 0
    %1289 = vmatpush1.bf16.msra.mxu0 0
    %1290 = vmatprep.subr.bf16.mxu0 0
    %1291 = vmatpush1.bf16.msra.mxu0 0
    %1292 = vmatprep.subr.bf16.mxu0 0
    %1293 = vmatpush1.bf16.msra.mxu0 0
    %1294 = vmatprep.subr.bf16.mxu0 0
    %1295 = vmatpush1.bf16.msra.mxu0 0
    %1296 = vmatprep.subr.bf16.mxu0 0
    %1297 = vmatpush1.bf16.msra.mxu0 0
    %1298 = vmatprep.subr.bf16.mxu0 0
    %1299 = vmatpush1.bf16.msra.mxu0 0
    %1300 = vmatprep.subr.bf16.mxu0 0
    %1301 = vmatpush1.bf16.msra.mxu0 0
    %1302 = vmatprep.mubr.bf16.mxu0 0
    %1303 = vmatmul.mubr.bf16.gmra.mrb[0].mxu0 %v1265
    %v1304 = vpop.f32.mrb[0].mxu0
    %v1305 = vadd.f32 0.0, %v1304
    %v1306 = vpop.f32.mrb[0].mxu0
    %v1307 = vpop.f32.mrb[0].mxu0
    %v1308 = vpop.f32.mrb[0].mxu0
    %1309 = vdwg.mxu0
    %v1311 = vsel %vm982, %v1076, 0
    %v1314 = vsel %vm1082, %v450, 0
    %1316 = vmatprep.subr.bf16.mxu0 0
    %1317 = vmatpush1.bf16.msra.mxu0 %v1314
    %1318 = vmatprep.subr.bf16.mxu0 0
    %1319 = vmatpush1.bf16.msra.mxu0 0
    %1320 = vmatprep.subr.bf16.mxu0 0
    %1321 = vmatpush1.bf16.msra.mxu0 0
    %1322 = vmatprep.subr.bf16.mxu0 0
    %1323 = vmatpush1.bf16.msra.mxu0 0
    %1324 = vmatprep.subr.bf16.mxu0 0
    %1325 = vmatpush1.bf16.msra.mxu0 0
    %1326 = vmatprep.subr.bf16.mxu0 0
    %1327 = vmatpush1.bf16.msra.mxu0 0
    %1328 = vmatprep.subr.bf16.mxu0 0
    %1329 = vmatpush1.bf16.msra.mxu0 0
    %1330 = vmatprep.subr.bf16.mxu0 0
    %1331 = vmatpush1.bf16.msra.mxu0 0
    %1332 = vmatprep.subr.bf16.mxu0 0
    %1333 = vmatpush1.bf16.msra.mxu0 0
    %1334 = vmatprep.subr.bf16.mxu0 0
    %1335 = vmatpush1.bf16.msra.mxu0 0
    %1336 = vmatprep.subr.bf16.mxu0 0
    %1337 = vmatpush1.bf16.msra.mxu0 0
    %1338 = vmatprep.subr.bf16.mxu0 0
    %1339 = vmatpush1.bf16.msra.mxu0 0
    %1340 = vmatprep.subr.bf16.mxu0 0
    %1341 = vmatpush1.bf16.msra.mxu0 0
    %1342 = vmatprep.subr.bf16.mxu0 0
    %1343 = vmatpush1.bf16.msra.mxu0 0
    %1344 = vmatprep.subr.bf16.mxu0 0
    %1345 = vmatpush1.bf16.msra.mxu0 0
    %1346 = vmatprep.subr.bf16.mxu0 0
    %1347 = vmatpush1.bf16.msra.mxu0 0
    %1348 = vmatprep.mubr.bf16.mxu0 0
    %1349 = vmatmul.mubr.bf16.gmra.mrb[0].mxu0 %v1311
    %v1350 = vpop.f32.mrb[0].mxu0
    %v1351 = vadd.f32 0.0, %v1350
    %v1352 = vpop.f32.mrb[0].mxu0
    %v1353 = vpop.f32.mrb[0].mxu0
    %v1354 = vpop.f32.mrb[0].mxu0
    %1355 = vdwg.mxu0
    %v1357 = vsel %vm982, %v1077, 0
    %v1360 = vsel %vm1082, %v451, 0
    %1362 = vmatprep.subr.bf16.mxu0 0
    %1363 = vmatpush1.bf16.msra.mxu0 %v1360
    %1364 = vmatprep.subr.bf16.mxu0 0
    %1365 = vmatpush1.bf16.msra.mxu0 0
    %1366 = vmatprep.subr.bf16.mxu0 0
    %1367 = vmatpush1.bf16.msra.mxu0 0
    %1368 = vmatprep.subr.bf16.mxu0 0
    %1369 = vmatpush1.bf16.msra.mxu0 0
    %1370 = vmatprep.subr.bf16.mxu0 0
    %1371 = vmatpush1.bf16.msra.mxu0 0
    %1372 = vmatprep.subr.bf16.mxu0 0
    %1373 = vmatpush1.bf16.msra.mxu0 0
    %1374 = vmatprep.subr.bf16.mxu0 0
    %1375 = vmatpush1.bf16.msra.mxu0 0
    %1376 = vmatprep.subr.bf16.mxu0 0
    %1377 = vmatpush1.bf16.msra.mxu0 0
    %1378 = vmatprep.subr.bf16.mxu0 0
    %1379 = vmatpush1.bf16.msra.mxu0 0
    %1380 = vmatprep.subr.bf16.mxu0 0
    %1381 = vmatpush1.bf16.msra.mxu0 0
    %1382 = vmatprep.subr.bf16.mxu0 0
    %1383 = vmatpush1.bf16.msra.mxu0 0
    %1384 = vmatprep.subr.bf16.mxu0 0
    %1385 = vmatpush1.bf16.msra.mxu0 0
    %1386 = vmatprep.subr.bf16.mxu0 0
    %1387 = vmatpush1.bf16.msra.mxu0 0
    %1388 = vmatprep.subr.bf16.mxu0 0
    %1389 = vmatpush1.bf16.msra.mxu0 0
    %1390 = vmatprep.subr.bf16.mxu0 0
    %1391 = vmatpush1.bf16.msra.mxu0 0
    %1392 = vmatprep.subr.bf16.mxu0 0
    %1393 = vmatpush1.bf16.msra.mxu0 0
    %1394 = vmatprep.mubr.bf16.mxu0 0
    %1395 = vmatmul.mubr.bf16.gmra.mrb[0].mxu0 %v1357
    %v1396 = vpop.f32.mrb[0].mxu0
    %v1397 = vadd.f32 0.0, %v1396
    %v1398 = vpop.f32.mrb[0].mxu0
    %v1399 = vpop.f32.mrb[0].mxu0
    %v1400 = vpop.f32.mrb[0].mxu0
    %1401 = vdwg.mxu0
    %v1403 = vsel %vm982, %v1078, 0
    %v1406 = vsel %vm1082, %v452, 0
    %1408 = vmatprep.subr.bf16.mxu0 0
    %1409 = vmatpush1.bf16.msra.mxu0 %v1406
    %1410 = vmatprep.subr.bf16.mxu0 0
    %1411 = vmatpush1.bf16.msra.mxu0 0
    %1412 = vmatprep.subr.bf16.mxu0 0
    %1413 = vmatpush1.bf16.msra.mxu0 0
    %1414 = vmatprep.subr.bf16.mxu0 0
    %1415 = vmatpush1.bf16.msra.mxu0 0
    %1416 = vmatprep.subr.bf16.mxu0 0
    %1417 = vmatpush1.bf16.msra.mxu0 0
    %1418 = vmatprep.subr.bf16.mxu0 0
    %1419 = vmatpush1.bf16.msra.mxu0 0
    %1420 = vmatprep.subr.bf16.mxu0 0
    %1421 = vmatpush1.bf16.msra.mxu0 0
    %1422 = vmatprep.subr.bf16.mxu0 0
    %1423 = vmatpush1.bf16.msra.mxu0 0
    %1424 = vmatprep.subr.bf16.mxu0 0
    %1425 = vmatpush1.bf16.msra.mxu0 0
    %1426 = vmatprep.subr.bf16.mxu0 0
    %1427 = vmatpush1.bf16.msra.mxu0 0
    %1428 = vmatprep.subr.bf16.mxu0 0
    %1429 = vmatpush1.bf16.msra.mxu0 0
    %1430 = vmatprep.subr.bf16.mxu0 0
    %1431 = vmatpush1.bf16.msra.mxu0 0
    %1432 = vmatprep.subr.bf16.mxu0 0
    %1433 = vmatpush1.bf16.msra.mxu0 0
    %1434 = vmatprep.subr.bf16.mxu0 0
    %1435 = vmatpush1.bf16.msra.mxu0 0
    %1436 = vmatprep.subr.bf16.mxu0 0
    %1437 = vmatpush1.bf16.msra.mxu0 0
    %1438 = vmatprep.subr.bf16.mxu0 0
    %1439 = vmatpush1.bf16.msra.mxu0 0
    %1440 = vmatprep.mubr.bf16.mxu0 0
    %1441 = vmatmul.mubr.bf16.gmra.mrb[0].mxu0 %v1403
    %v1442 = vpop.f32.mrb[0].mxu0
    %v1443 = vadd.f32 0.0, %v1442
    %v1444 = vpop.f32.mrb[0].mxu0
    %v1445 = vpop.f32.mrb[0].mxu0
    %v1446 = vpop.f32.mrb[0].mxu0
    %1447 = vdwg.mxu0
    %1449 = vrot.lane.b32.xlu0 %v429, 96
    %v1450 = vpop.permute.xlu0 %1449
    %1452 = vrot.lane.b32.xlu0 %v437, 96
    %v1453 = vpop.permute.xlu0 %1452
    %v1455 = vsel %vm469, %v1450, 0
    %v1458 = vsel %vm469, %v1453, 0
    %1460 = vmatprep.subr.bf16.mxu0 0
    %1461 = vmatpush1.bf16.xpose.msra.mxu0 %v1458
    %1462 = vmatprep.subr.bf16.mxu0 0
    %1463 = vmatpush1.bf16.xpose.msra.mxu0 0
    %1464 = vmatprep.subr.bf16.mxu0 0
    %1465 = vmatpush1.bf16.xpose.msra.mxu0 0
    %1466 = vmatprep.subr.bf16.mxu0 0
    %1467 = vmatpush1.bf16.xpose.msra.mxu0 0
    %1468 = vmatprep.subr.bf16.mxu0 0
    %1469 = vmatpush1.bf16.xpose.msra.mxu0 0
    %1470 = vmatprep.subr.bf16.mxu0 0
    %1471 = vmatpush1.bf16.xpose.msra.mxu0 0
    %1472 = vmatprep.subr.bf16.mxu0 0
    %1473 = vmatpush1.bf16.xpose.msra.mxu0 0
    %1474 = vmatprep.subr.bf16.mxu0 0
    %1475 = vmatpush1.bf16.xpose.msra.mxu0 0
    %1476 = vmatprep.subr.bf16.mxu0 0
    %1477 = vmatpush1.bf16.xpose.msra.mxu0 0
    %1478 = vmatprep.subr.bf16.mxu0 0
    %1479 = vmatpush1.bf16.xpose.msra.mxu0 0
    %1480 = vmatprep.subr.bf16.mxu0 0
    %1481 = vmatpush1.bf16.xpose.msra.mxu0 0
    %1482 = vmatprep.subr.bf16.mxu0 0
    %1483 = vmatpush1.bf16.xpose.msra.mxu0 0
    %1484 = vmatprep.subr.bf16.mxu0 0
    %1485 = vmatpush1.bf16.xpose.msra.mxu0 0
    %1486 = vmatprep.subr.bf16.mxu0 0
    %1487 = vmatpush1.bf16.xpose.msra.mxu0 0
    %1488 = vmatprep.subr.bf16.mxu0 0
    %1489 = vmatpush1.bf16.xpose.msra.mxu0 0
    %1490 = vmatprep.subr.bf16.mxu0 0
    %1491 = vmatpush1.bf16.xpose.msra.mxu0 0
    %1492 = vmatprep.mubr.bf16.mxu0 0
    %1493 = vmatmul.mubr.bf16.gmra.mrb[0].mxu0 %v1455
    %v1494 = vpop.f32.mrb[0].mxu0
    %v1495 = vadd.f32 0.0, %v1494
    %v1496 = vpop.f32.mrb[0].mxu0
    %v1497 = vpop.f32.mrb[0].mxu0
    %v1498 = vpop.f32.mrb[0].mxu0
    %1499 = vdwg.mxu0
    %1501 = vrot.lane.b32.xlu0 %v430, 96
    %v1502 = vpop.permute.xlu0 %1501
    %1504 = vrot.lane.b32.xlu0 %v438, 96
    %v1505 = vpop.permute.xlu0 %1504
    %v1507 = vsel %vm469, %v1502, 0
    %v1510 = vsel %vm469, %v1505, 0
    %1512 = vmatprep.subr.bf16.mxu0 0
    %1513 = vmatpush1.bf16.xpose.msra.mxu0 %v1510
    %1514 = vmatprep.subr.bf16.mxu0 0
    %1515 = vmatpush1.bf16.xpose.msra.mxu0 0
    %1516 = vmatprep.subr.bf16.mxu0 0
    %1517 = vmatpush1.bf16.xpose.msra.mxu0 0
    %1518 = vmatprep.subr.bf16.mxu0 0
    %1519 = vmatpush1.bf16.xpose.msra.mxu0 0
    %1520 = vmatprep.subr.bf16.mxu0 0
    %1521 = vmatpush1.bf16.xpose.msra.mxu0 0
    %1522 = vmatprep.subr.bf16.mxu0 0
    %1523 = vmatpush1.bf16.xpose.msra.mxu0 0
    %1524 = vmatprep.subr.bf16.mxu0 0
    %1525 = vmatpush1.bf16.xpose.msra.mxu0 0
    %1526 = vmatprep.subr.bf16.mxu0 0
    %1527 = vmatpush1.bf16.xpose.msra.mxu0 0
    %1528 = vmatprep.subr.bf16.mxu0 0
    %1529 = vmatpush1.bf16.xpose.msra.mxu0 0
    %1530 = vmatprep.subr.bf16.mxu0 0
    %1531 = vmatpush1.bf16.xpose.msra.mxu0 0
    %1532 = vmatprep.subr.bf16.mxu0 0
    %1533 = vmatpush1.bf16.xpose.msra.mxu0 0
    %1534 = vmatprep.subr.bf16.mxu0 0
    %1535 = vmatpush1.bf16.xpose.msra.mxu0 0
    %1536 = vmatprep.subr.bf16.mxu0 0
    %1537 = vmatpush1.bf16.xpose.msra.mxu0 0
    %1538 = vmatprep.subr.bf16.mxu0 0
    %1539 = vmatpush1.bf16.xpose.msra.mxu0 0
    %1540 = vmatprep.subr.bf16.mxu0 0
    %1541 = vmatpush1.bf16.xpose.msra.mxu0 0
    %1542 = vmatprep.subr.bf16.mxu0 0
    %1543 = vmatpush1.bf16.xpose.msra.mxu0 0
    %1544 = vmatprep.mubr.bf16.mxu0 0
    %1545 = vmatmul.mubr.bf16.gmra.mrb[0].mxu0 %v1507
    %v1546 = vpop.f32.mrb[0].mxu0
    %v1547 = vadd.f32 0.0, %v1546
    %v1548 = vpop.f32.mrb[0].mxu0
    %v1549 = vpop.f32.mrb[0].mxu0
    %v1550 = vpop.f32.mrb[0].mxu0
    %1551 = vdwg.mxu0
    %1553 = vrot.lane.b32.xlu0 %v431, 96
    %v1554 = vpop.permute.xlu0 %1553
    %1556 = vrot.lane.b32.xlu0 %v439, 96
    %v1557 = vpop.permute.xlu0 %1556
    %v1559 = vsel %vm469, %v1554, 0
    %v1562 = vsel %vm469, %v1557, 0
    %1564 = vmatprep.subr.bf16.mxu0 0
    %1565 = vmatpush1.bf16.xpose.msra.mxu0 %v1562
    %1566 = vmatprep.subr.bf16.mxu0 0
    %1567 = vmatpush1.bf16.xpose.msra.mxu0 0
    %1568 = vmatprep.subr.bf16.mxu0 0
    %1569 = vmatpush1.bf16.xpose.msra.mxu0 0
    %1570 = vmatprep.subr.bf16.mxu0 0
    %1571 = vmatpush1.bf16.xpose.msra.mxu0 0
    %1572 = vmatprep.subr.bf16.mxu0 0
    %1573 = vmatpush1.bf16.xpose.msra.mxu0 0
    %1574 = vmatprep.subr.bf16.mxu0 0
    %1575 = vmatpush1.bf16.xpose.msra.mxu0 0
    %1576 = vmatprep.subr.bf16.mxu0 0
    %1577 = vmatpush1.bf16.xpose.msra.mxu0 0
    %1578 = vmatprep.subr.bf16.mxu0 0
    %1579 = vmatpush1.bf16.xpose.msra.mxu0 0
    %1580 = vmatprep.subr.bf16.mxu0 0
    %1581 = vmatpush1.bf16.xpose.msra.mxu0 0
    %1582 = vmatprep.subr.bf16.mxu0 0
    %1583 = vmatpush1.bf16.xpose.msra.mxu0 0
    %1584 = vmatprep.subr.bf16.mxu0 0
    %1585 = vmatpush1.bf16.xpose.msra.mxu0 0
    %1586 = vmatprep.subr.bf16.mxu0 0
    %1587 = vmatpush1.bf16.xpose.msra.mxu0 0
    %1588 = vmatprep.subr.bf16.mxu0 0
    %1589 = vmatpush1.bf16.xpose.msra.mxu0 0
    %1590 = vmatprep.subr.bf16.mxu0 0
    %1591 = vmatpush1.bf16.xpose.msra.mxu0 0
    %1592 = vmatprep.subr.bf16.mxu0 0
    %1593 = vmatpush1.bf16.xpose.msra.mxu0 0
    %1594 = vmatprep.subr.bf16.mxu0 0
    %1595 = vmatpush1.bf16.xpose.msra.mxu0 0
    %1596 = vmatprep.mubr.bf16.mxu0 0
    %1597 = vmatmul.mubr.bf16.gmra.mrb[0].mxu0 %v1559
    %v1598 = vpop.f32.mrb[0].mxu0
    %v1599 = vadd.f32 0.0, %v1598
    %v1600 = vpop.f32.mrb[0].mxu0
    %v1601 = vpop.f32.mrb[0].mxu0
    %v1602 = vpop.f32.mrb[0].mxu0
    %1603 = vdwg.mxu0
    %1605 = vrot.lane.b32.xlu0 %v432, 96
    %v1606 = vpop.permute.xlu0 %1605
    %1608 = vrot.lane.b32.xlu0 %v440, 96
    %v1609 = vpop.permute.xlu0 %1608
    %v1611 = vsel %vm469, %v1606, 0
    %v1614 = vsel %vm469, %v1609, 0
    %1616 = vmatprep.subr.bf16.mxu0 0
    %1617 = vmatpush1.bf16.xpose.msra.mxu0 %v1614
    %1618 = vmatprep.subr.bf16.mxu0 0
    %1619 = vmatpush1.bf16.xpose.msra.mxu0 0
    %1620 = vmatprep.subr.bf16.mxu0 0
    %1621 = vmatpush1.bf16.xpose.msra.mxu0 0
    %1622 = vmatprep.subr.bf16.mxu0 0
    %1623 = vmatpush1.bf16.xpose.msra.mxu0 0
    %1624 = vmatprep.subr.bf16.mxu0 0
    %1625 = vmatpush1.bf16.xpose.msra.mxu0 0
    %1626 = vmatprep.subr.bf16.mxu0 0
    %1627 = vmatpush1.bf16.xpose.msra.mxu0 0
    %1628 = vmatprep.subr.bf16.mxu0 0
    %1629 = vmatpush1.bf16.xpose.msra.mxu0 0
    %1630 = vmatprep.subr.bf16.mxu0 0
    %1631 = vmatpush1.bf16.xpose.msra.mxu0 0
    %1632 = vmatprep.subr.bf16.mxu0 0
    %1633 = vmatpush1.bf16.xpose.msra.mxu0 0
    %1634 = vmatprep.subr.bf16.mxu0 0
    %1635 = vmatpush1.bf16.xpose.msra.mxu0 0
    %1636 = vmatprep.subr.bf16.mxu0 0
    %1637 = vmatpush1.bf16.xpose.msra.mxu0 0
    %1638 = vmatprep.subr.bf16.mxu0 0
    %1639 = vmatpush1.bf16.xpose.msra.mxu0 0
    %1640 = vmatprep.subr.bf16.mxu0 0
    %1641 = vmatpush1.bf16.xpose.msra.mxu0 0
    %1642 = vmatprep.subr.bf16.mxu0 0
    %1643 = vmatpush1.bf16.xpose.msra.mxu0 0
    %1644 = vmatprep.subr.bf16.mxu0 0
    %1645 = vmatpush1.bf16.xpose.msra.mxu0 0
    %1646 = vmatprep.subr.bf16.mxu0 0
    %1647 = vmatpush1.bf16.xpose.msra.mxu0 0
    %1648 = vmatprep.mubr.bf16.mxu0 0
    %1649 = vmatmul.mubr.bf16.gmra.mrb[0].mxu0 %v1611
    %v1650 = vpop.f32.mrb[0].mxu0
    %v1651 = vadd.f32 0.0, %v1650
    %v1652 = vpop.f32.mrb[0].mxu0
    %v1653 = vpop.f32.mrb[0].mxu0
    %v1654 = vpop.f32.mrb[0].mxu0
    %1655 = vdwg.mxu0
    %1657 = vrot.lane.b32.xlu0 %v433, 96
    %v1658 = vpop.permute.xlu0 %1657
    %1660 = vrot.lane.b32.xlu0 %v441, 96
    %v1661 = vpop.permute.xlu0 %1660
    %v1663 = vsel %vm469, %v1658, 0
    %v1666 = vsel %vm469, %v1661, 0
    %1668 = vmatprep.subr.bf16.mxu0 0
    %1669 = vmatpush1.bf16.xpose.msra.mxu0 %v1666
    %1670 = vmatprep.subr.bf16.mxu0 0
    %1671 = vmatpush1.bf16.xpose.msra.mxu0 0
    %1672 = vmatprep.subr.bf16.mxu0 0
    %1673 = vmatpush1.bf16.xpose.msra.mxu0 0
    %1674 = vmatprep.subr.bf16.mxu0 0
    %1675 = vmatpush1.bf16.xpose.msra.mxu0 0
    %1676 = vmatprep.subr.bf16.mxu0 0
    %1677 = vmatpush1.bf16.xpose.msra.mxu0 0
    %1678 = vmatprep.subr.bf16.mxu0 0
    %1679 = vmatpush1.bf16.xpose.msra.mxu0 0
    %1680 = vmatprep.subr.bf16.mxu0 0
    %1681 = vmatpush1.bf16.xpose.msra.mxu0 0
    %1682 = vmatprep.subr.bf16.mxu0 0
    %1683 = vmatpush1.bf16.xpose.msra.mxu0 0
    %1684 = vmatprep.subr.bf16.mxu0 0
    %1685 = vmatpush1.bf16.xpose.msra.mxu0 0
    %1686 = vmatprep.subr.bf16.mxu0 0
    %1687 = vmatpush1.bf16.xpose.msra.mxu0 0
    %1688 = vmatprep.subr.bf16.mxu0 0
    %1689 = vmatpush1.bf16.xpose.msra.mxu0 0
    %1690 = vmatprep.subr.bf16.mxu0 0
    %1691 = vmatpush1.bf16.xpose.msra.mxu0 0
    %1692 = vmatprep.subr.bf16.mxu0 0
    %1693 = vmatpush1.bf16.xpose.msra.mxu0 0
    %1694 = vmatprep.subr.bf16.mxu0 0
    %1695 = vmatpush1.bf16.xpose.msra.mxu0 0
    %1696 = vmatprep.subr.bf16.mxu0 0
    %1697 = vmatpush1.bf16.xpose.msra.mxu0 0
    %1698 = vmatprep.subr.bf16.mxu0 0
    %1699 = vmatpush1.bf16.xpose.msra.mxu0 0
    %1700 = vmatprep.mubr.bf16.mxu0 0
    %1701 = vmatmul.mubr.bf16.gmra.mrb[0].mxu0 %v1663
    %v1702 = vpop.f32.mrb[0].mxu0
    %v1703 = vadd.f32 0.0, %v1702
    %v1704 = vpop.f32.mrb[0].mxu0
    %v1705 = vpop.f32.mrb[0].mxu0
    %v1706 = vpop.f32.mrb[0].mxu0
    %1707 = vdwg.mxu0
    %1709 = vrot.lane.b32.xlu0 %v434, 96
    %v1710 = vpop.permute.xlu0 %1709
    %1712 = vrot.lane.b32.xlu0 %v442, 96
    %v1713 = vpop.permute.xlu0 %1712
    %v1715 = vsel %vm469, %v1710, 0
    %v1718 = vsel %vm469, %v1713, 0
    %1720 = vmatprep.subr.bf16.mxu0 0
    %1721 = vmatpush1.bf16.xpose.msra.mxu0 %v1718
    %1722 = vmatprep.subr.bf16.mxu0 0
    %1723 = vmatpush1.bf16.xpose.msra.mxu0 0
    %1724 = vmatprep.subr.bf16.mxu0 0
    %1725 = vmatpush1.bf16.xpose.msra.mxu0 0
    %1726 = vmatprep.subr.bf16.mxu0 0
    %1727 = vmatpush1.bf16.xpose.msra.mxu0 0
    %1728 = vmatprep.subr.bf16.mxu0 0
    %1729 = vmatpush1.bf16.xpose.msra.mxu0 0
    %1730 = vmatprep.subr.bf16.mxu0 0
    %1731 = vmatpush1.bf16.xpose.msra.mxu0 0
    %1732 = vmatprep.subr.bf16.mxu0 0
    %1733 = vmatpush1.bf16.xpose.msra.mxu0 0
    %1734 = vmatprep.subr.bf16.mxu0 0
    %1735 = vmatpush1.bf16.xpose.msra.mxu0 0
    %1736 = vmatprep.subr.bf16.mxu0 0
    %1737 = vmatpush1.bf16.xpose.msra.mxu0 0
    %1738 = vmatprep.subr.bf16.mxu0 0
    %1739 = vmatpush1.bf16.xpose.msra.mxu0 0
    %1740 = vmatprep.subr.bf16.mxu0 0
    %1741 = vmatpush1.bf16.xpose.msra.mxu0 0
    %1742 = vmatprep.subr.bf16.mxu0 0
    %1743 = vmatpush1.bf16.xpose.msra.mxu0 0
    %1744 = vmatprep.subr.bf16.mxu0 0
    %1745 = vmatpush1.bf16.xpose.msra.mxu0 0
    %1746 = vmatprep.subr.bf16.mxu0 0
    %1747 = vmatpush1.bf16.xpose.msra.mxu0 0
    %1748 = vmatprep.subr.bf16.mxu0 0
    %1749 = vmatpush1.bf16.xpose.msra.mxu0 0
    %1750 = vmatprep.subr.bf16.mxu0 0
    %1751 = vmatpush1.bf16.xpose.msra.mxu0 0
    %1752 = vmatprep.mubr.bf16.mxu0 0
    %1753 = vmatmul.mubr.bf16.gmra.mrb[0].mxu0 %v1715
    %v1754 = vpop.f32.mrb[0].mxu0
    %v1755 = vadd.f32 0.0, %v1754
    %v1756 = vpop.f32.mrb[0].mxu0
    %v1757 = vpop.f32.mrb[0].mxu0
    %v1758 = vpop.f32.mrb[0].mxu0
    %1759 = vdwg.mxu0
    %1761 = vrot.lane.b32.xlu0 %v435, 96
    %v1762 = vpop.permute.xlu0 %1761
    %1764 = vrot.lane.b32.xlu0 %v443, 96
    %v1765 = vpop.permute.xlu0 %1764
    %v1767 = vsel %vm469, %v1762, 0
    %v1770 = vsel %vm469, %v1765, 0
    %1772 = vmatprep.subr.bf16.mxu0 0
    %1773 = vmatpush1.bf16.xpose.msra.mxu0 %v1770
    %1774 = vmatprep.subr.bf16.mxu0 0
    %1775 = vmatpush1.bf16.xpose.msra.mxu0 0
    %1776 = vmatprep.subr.bf16.mxu0 0
    %1777 = vmatpush1.bf16.xpose.msra.mxu0 0
    %1778 = vmatprep.subr.bf16.mxu0 0
    %1779 = vmatpush1.bf16.xpose.msra.mxu0 0
    %1780 = vmatprep.subr.bf16.mxu0 0
    %1781 = vmatpush1.bf16.xpose.msra.mxu0 0
    %1782 = vmatprep.subr.bf16.mxu0 0
    %1783 = vmatpush1.bf16.xpose.msra.mxu0 0
    %1784 = vmatprep.subr.bf16.mxu0 0
    %1785 = vmatpush1.bf16.xpose.msra.mxu0 0
    %1786 = vmatprep.subr.bf16.mxu0 0
    %1787 = vmatpush1.bf16.xpose.msra.mxu0 0
    %1788 = vmatprep.subr.bf16.mxu0 0
    %1789 = vmatpush1.bf16.xpose.msra.mxu0 0
    %1790 = vmatprep.subr.bf16.mxu0 0
    %1791 = vmatpush1.bf16.xpose.msra.mxu0 0
    %1792 = vmatprep.subr.bf16.mxu0 0
    %1793 = vmatpush1.bf16.xpose.msra.mxu0 0
    %1794 = vmatprep.subr.bf16.mxu0 0
    %1795 = vmatpush1.bf16.xpose.msra.mxu0 0
    %1796 = vmatprep.subr.bf16.mxu0 0
    %1797 = vmatpush1.bf16.xpose.msra.mxu0 0
    %1798 = vmatprep.subr.bf16.mxu0 0
    %1799 = vmatpush1.bf16.xpose.msra.mxu0 0
    %1800 = vmatprep.subr.bf16.mxu0 0
    %1801 = vmatpush1.bf16.xpose.msra.mxu0 0
    %1802 = vmatprep.subr.bf16.mxu0 0
    %1803 = vmatpush1.bf16.xpose.msra.mxu0 0
    %1804 = vmatprep.mubr.bf16.mxu0 0
    %1805 = vmatmul.mubr.bf16.gmra.mrb[0].mxu0 %v1767
    %v1806 = vpop.f32.mrb[0].mxu0
    %v1807 = vadd.f32 0.0, %v1806
    %v1808 = vpop.f32.mrb[0].mxu0
    %v1809 = vpop.f32.mrb[0].mxu0
    %v1810 = vpop.f32.mrb[0].mxu0
    %1811 = vdwg.mxu0
    %1813 = vrot.lane.b32.xlu0 %v436, 96
    %v1814 = vpop.permute.xlu0 %1813
    %1816 = vrot.lane.b32.xlu0 %v444, 96
    %v1817 = vpop.permute.xlu0 %1816
    %v1819 = vsel %vm469, %v1814, 0
    %v1822 = vsel %vm469, %v1817, 0
    %1824 = vmatprep.subr.bf16.mxu0 0
    %1825 = vmatpush1.bf16.xpose.msra.mxu0 %v1822
    %1826 = vmatprep.subr.bf16.mxu0 0
    %1827 = vmatpush1.bf16.xpose.msra.mxu0 0
    %1828 = vmatprep.subr.bf16.mxu0 0
    %1829 = vmatpush1.bf16.xpose.msra.mxu0 0
    %1830 = vmatprep.subr.bf16.mxu0 0
    %1831 = vmatpush1.bf16.xpose.msra.mxu0 0
    %1832 = vmatprep.subr.bf16.mxu0 0
    %1833 = vmatpush1.bf16.xpose.msra.mxu0 0
    %1834 = vmatprep.subr.bf16.mxu0 0
    %1835 = vmatpush1.bf16.xpose.msra.mxu0 0
    %1836 = vmatprep.subr.bf16.mxu0 0
    %1837 = vmatpush1.bf16.xpose.msra.mxu0 0
    %1838 = vmatprep.subr.bf16.mxu0 0
    %1839 = vmatpush1.bf16.xpose.msra.mxu0 0
    %1840 = vmatprep.subr.bf16.mxu0 0
    %1841 = vmatpush1.bf16.xpose.msra.mxu0 0
    %1842 = vmatprep.subr.bf16.mxu0 0
    %1843 = vmatpush1.bf16.xpose.msra.mxu0 0
    %1844 = vmatprep.subr.bf16.mxu0 0
    %1845 = vmatpush1.bf16.xpose.msra.mxu0 0
    %1846 = vmatprep.subr.bf16.mxu0 0
    %1847 = vmatpush1.bf16.xpose.msra.mxu0 0
    %1848 = vmatprep.subr.bf16.mxu0 0
    %1849 = vmatpush1.bf16.xpose.msra.mxu0 0
    %1850 = vmatprep.subr.bf16.mxu0 0
    %1851 = vmatpush1.bf16.xpose.msra.mxu0 0
    %1852 = vmatprep.subr.bf16.mxu0 0
    %1853 = vmatpush1.bf16.xpose.msra.mxu0 0
    %1854 = vmatprep.subr.bf16.mxu0 0
    %1855 = vmatpush1.bf16.xpose.msra.mxu0 0
    %1856 = vmatprep.mubr.bf16.mxu0 0
    %1857 = vmatmul.mubr.bf16.gmra.mrb[0].mxu0 %v1819
    %v1858 = vpop.f32.mrb[0].mxu0
    %v1859 = vadd.f32 0.0, %v1858
    %v1860 = vpop.f32.mrb[0].mxu0
    %v1861 = vpop.f32.mrb[0].mxu0
    %v1862 = vpop.f32.mrb[0].mxu0
    %1863 = vdwg.mxu0
    %v1864 = vmul.f32 %v1495, 0.17677669
    %v1865 = vmul.f32 %v1547, 0.17677669
    %v1866 = vmul.f32 %v1599, 0.17677669
    %v1867 = vmul.f32 %v1651, 0.17677669
    %v1868 = vmul.f32 %v1703, 0.17677669
    %v1869 = vmul.f32 %v1755, 0.17677669
    %v1870 = vmul.f32 %v1807, 0.17677669
    %v1871 = vmul.f32 %v1859, 0.17677669
    %v1872 = vadd.f32 %v1864, %v923
    %v1873 = vadd.f32 %v1865, %v929
    %v1874 = vadd.f32 %v1866, %v935
    %v1875 = vadd.f32 %v1867, %v941
    %v1876 = vadd.f32 %v1868, %v947
    %v1877 = vadd.f32 %v1869, %v953
    %v1878 = vadd.f32 %v1870, %v959
    %v1879 = vadd.f32 %v1871, %v965
    %v1880 = vsel %vm982, %v1872, -inf
    %1881 = vmax.xlane.f32.xlu0 %v1880
    %v1882 = vpop.xlane.xlu0 %1881
    %v1883 = vsel %vm982, %v1873, -inf
    %1884 = vmax.xlane.f32.xlu0 %v1883
    %v1885 = vpop.xlane.xlu0 %1884
    %v1886 = vsel %vm982, %v1874, -inf
    %1887 = vmax.xlane.f32.xlu0 %v1886
    %v1888 = vpop.xlane.xlu0 %1887
    %v1889 = vsel %vm982, %v1875, -inf
    %1890 = vmax.xlane.f32.xlu0 %v1889
    %v1891 = vpop.xlane.xlu0 %1890
    %v1892 = vsel %vm982, %v1876, -inf
    %1893 = vmax.xlane.f32.xlu0 %v1892
    %v1894 = vpop.xlane.xlu0 %1893
    %v1895 = vsel %vm982, %v1877, -inf
    %1896 = vmax.xlane.f32.xlu0 %v1895
    %v1897 = vpop.xlane.xlu0 %1896
    %v1898 = vsel %vm982, %v1878, -inf
    %1899 = vmax.xlane.f32.xlu0 %v1898
    %v1900 = vpop.xlane.xlu0 %1899
    %v1901 = vsel %vm982, %v1879, -inf
    %1902 = vmax.xlane.f32.xlu0 %v1901
    %v1903 = vpop.xlane.xlu0 %1902
    %v1904 = vsub.f32 %v1872, %v1882
    %v1905 = vsub.f32 %v1873, %v1885
    %v1906 = vsub.f32 %v1874, %v1888
    %v1907 = vsub.f32 %v1875, %v1891
    %v1908 = vsub.f32 %v1876, %v1894
    %v1909 = vsub.f32 %v1877, %v1897
    %v1910 = vsub.f32 %v1878, %v1900
    %v1911 = vsub.f32 %v1879, %v1903
    %v1912 = vmul.f32 %v1904, 1.442695
    %v1913 = vpow.pop %v1912
    %v1914 = vmul.f32 %v1905, 1.442695
    %v1915 = vpow.pop %v1914
    %v1916 = vmul.f32 %v1906, 1.442695
    %v1917 = vpow.pop %v1916
    %v1918 = vmul.f32 %v1907, 1.442695
    %v1919 = vpow.pop %v1918
    %v1920 = vmul.f32 %v1908, 1.442695
    %v1921 = vpow.pop %v1920
    %v1922 = vmul.f32 %v1909, 1.442695
    %v1923 = vpow.pop %v1922
    %v1924 = vmul.f32 %v1910, 1.442695
    %v1925 = vpow.pop %v1924
    %v1926 = vmul.f32 %v1911, 1.442695
    %v1927 = vpow.pop %v1926
    %v1928 = vsel %vm982, %v1913, 0.0
    %1929 = vadd.xlane.f32.xlu0 %v1928
    %v1930 = vpop.xlane.xlu0 %1929
    %v1931 = vsel %vm982, %v1915, 0.0
    %1932 = vadd.xlane.f32.xlu0 %v1931
    %v1933 = vpop.xlane.xlu0 %1932
    %v1934 = vsel %vm982, %v1917, 0.0
    %1935 = vadd.xlane.f32.xlu0 %v1934
    %v1936 = vpop.xlane.xlu0 %1935
    %v1937 = vsel %vm982, %v1919, 0.0
    %1938 = vadd.xlane.f32.xlu0 %v1937
    %v1939 = vpop.xlane.xlu0 %1938
    %v1940 = vsel %vm982, %v1921, 0.0
    %1941 = vadd.xlane.f32.xlu0 %v1940
    %v1942 = vpop.xlane.xlu0 %1941
    %v1943 = vsel %vm982, %v1923, 0.0
    %1944 = vadd.xlane.f32.xlu0 %v1943
    %v1945 = vpop.xlane.xlu0 %1944
    %v1946 = vsel %vm982, %v1925, 0.0
    %1947 = vadd.xlane.f32.xlu0 %v1946
    %v1948 = vpop.xlane.xlu0 %1947
    %v1949 = vsel %vm982, %v1927, 0.0
    %1950 = vadd.xlane.f32.xlu0 %v1949
    %v1951 = vpop.xlane.xlu0 %1950
    %v1952 = vrcp.pop %v1930
    %v1953 = vrcp.pop %v1933
    %v1954 = vrcp.pop %v1936
    %v1955 = vrcp.pop %v1939
    %v1956 = vrcp.pop %v1942
    %v1957 = vrcp.pop %v1945
    %v1958 = vrcp.pop %v1948
    %v1959 = vrcp.pop %v1951
    %v1960 = vmul.f32 %v1913, %v1952
    %v1961 = vmul.f32 %v1915, %v1953
    %v1962 = vmul.f32 %v1917, %v1954
    %v1963 = vmul.f32 %v1919, %v1955
    %v1964 = vmul.f32 %v1921, %v1956
    %v1965 = vmul.f32 %v1923, %v1957
    %v1966 = vmul.f32 %v1925, %v1958
    %v1967 = vmul.f32 %v1927, %v1959
    %v1968 = vpack.c.bf16 %v1960, %v1960
    %v1969 = vpack.c.bf16 %v1961, %v1961
    %v1970 = vpack.c.bf16 %v1962, %v1962
    %v1971 = vpack.c.bf16 %v1963, %v1963
    %v1972 = vpack.c.bf16 %v1964, %v1964
    %v1973 = vpack.c.bf16 %v1965, %v1965
    %v1974 = vpack.c.bf16 %v1966, %v1966
    %v1975 = vpack.c.bf16 %v1967, %v1967
    %1977 = vrot.lane.b32.xlu0 %v445, 96
    %v1978 = vpop.permute.xlu0 %1977
    %v1980 = vsel %vm982, %v1968, 0
    %v1983 = vsel %vm1082, %v1978, 0
    %1985 = vmatprep.subr.bf16.mxu0 0
    %1986 = vmatpush1.bf16.msra.mxu0 %v1983
    %1987 = vmatprep.subr.bf16.mxu0 0
    %1988 = vmatpush1.bf16.msra.mxu0 0
    %1989 = vmatprep.subr.bf16.mxu0 0
    %1990 = vmatpush1.bf16.msra.mxu0 0
    %1991 = vmatprep.subr.bf16.mxu0 0
    %1992 = vmatpush1.bf16.msra.mxu0 0
    %1993 = vmatprep.subr.bf16.mxu0 0
    %1994 = vmatpush1.bf16.msra.mxu0 0
    %1995 = vmatprep.subr.bf16.mxu0 0
    %1996 = vmatpush1.bf16.msra.mxu0 0
    %1997 = vmatprep.subr.bf16.mxu0 0
    %1998 = vmatpush1.bf16.msra.mxu0 0
    %1999 = vmatprep.subr.bf16.mxu0 0
    %2000 = vmatpush1.bf16.msra.mxu0 0
    %2001 = vmatprep.subr.bf16.mxu0 0
    %2002 = vmatpush1.bf16.msra.mxu0 0
    %2003 = vmatprep.subr.bf16.mxu0 0
    %2004 = vmatpush1.bf16.msra.mxu0 0
    %2005 = vmatprep.subr.bf16.mxu0 0
    %2006 = vmatpush1.bf16.msra.mxu0 0
    %2007 = vmatprep.subr.bf16.mxu0 0
    %2008 = vmatpush1.bf16.msra.mxu0 0
    %2009 = vmatprep.subr.bf16.mxu0 0
    %2010 = vmatpush1.bf16.msra.mxu0 0
    %2011 = vmatprep.subr.bf16.mxu0 0
    %2012 = vmatpush1.bf16.msra.mxu0 0
    %2013 = vmatprep.subr.bf16.mxu0 0
    %2014 = vmatpush1.bf16.msra.mxu0 0
    %2015 = vmatprep.subr.bf16.mxu0 0
    %2016 = vmatpush1.bf16.msra.mxu0 0
    %2017 = vmatprep.mubr.bf16.mxu0 0
    %2018 = vmatmul.mubr.bf16.gmra.mrb[0].mxu0 %v1980
    %v2019 = vpop.f32.mrb[0].mxu0
    %v2020 = vadd.f32 0.0, %v2019
    %v2021 = vpop.f32.mrb[0].mxu0
    %v2022 = vpop.f32.mrb[0].mxu0
    %v2023 = vpop.f32.mrb[0].mxu0
    %2024 = vdwg.mxu0
    %2026 = vrot.lane.b32.xlu0 %v446, 96
    %v2027 = vpop.permute.xlu0 %2026
    %v2029 = vsel %vm982, %v1969, 0
    %v2032 = vsel %vm1082, %v2027, 0
    %2034 = vmatprep.subr.bf16.mxu0 0
    %2035 = vmatpush1.bf16.msra.mxu0 %v2032
    %2036 = vmatprep.subr.bf16.mxu0 0
    %2037 = vmatpush1.bf16.msra.mxu0 0
    %2038 = vmatprep.subr.bf16.mxu0 0
    %2039 = vmatpush1.bf16.msra.mxu0 0
    %2040 = vmatprep.subr.bf16.mxu0 0
    %2041 = vmatpush1.bf16.msra.mxu0 0
    %2042 = vmatprep.subr.bf16.mxu0 0
    %2043 = vmatpush1.bf16.msra.mxu0 0
    %2044 = vmatprep.subr.bf16.mxu0 0
    %2045 = vmatpush1.bf16.msra.mxu0 0
    %2046 = vmatprep.subr.bf16.mxu0 0
    %2047 = vmatpush1.bf16.msra.mxu0 0
    %2048 = vmatprep.subr.bf16.mxu0 0
    %2049 = vmatpush1.bf16.msra.mxu0 0
    %2050 = vmatprep.subr.bf16.mxu0 0
    %2051 = vmatpush1.bf16.msra.mxu0 0
    %2052 = vmatprep.subr.bf16.mxu0 0
    %2053 = vmatpush1.bf16.msra.mxu0 0
    %2054 = vmatprep.subr.bf16.mxu0 0
    %2055 = vmatpush1.bf16.msra.mxu0 0
    %2056 = vmatprep.subr.bf16.mxu0 0
    %2057 = vmatpush1.bf16.msra.mxu0 0
    %2058 = vmatprep.subr.bf16.mxu0 0
    %2059 = vmatpush1.bf16.msra.mxu0 0
    %2060 = vmatprep.subr.bf16.mxu0 0
    %2061 = vmatpush1.bf16.msra.mxu0 0
    %2062 = vmatprep.subr.bf16.mxu0 0
    %2063 = vmatpush1.bf16.msra.mxu0 0
    %2064 = vmatprep.subr.bf16.mxu0 0
    %2065 = vmatpush1.bf16.msra.mxu0 0
    %2066 = vmatprep.mubr.bf16.mxu0 0
    %2067 = vmatmul.mubr.bf16.gmra.mrb[0].mxu0 %v2029
    %v2068 = vpop.f32.mrb[0].mxu0
    %v2069 = vadd.f32 0.0, %v2068
    %v2070 = vpop.f32.mrb[0].mxu0
    %v2071 = vpop.f32.mrb[0].mxu0
    %v2072 = vpop.f32.mrb[0].mxu0
    %2073 = vdwg.mxu0
    %2075 = vrot.lane.b32.xlu0 %v447, 96
    %v2076 = vpop.permute.xlu0 %2075
    %v2078 = vsel %vm982, %v1970, 0
    %v2081 = vsel %vm1082, %v2076, 0
    %2083 = vmatprep.subr.bf16.mxu0 0
    %2084 = vmatpush1.bf16.msra.mxu0 %v2081
    %2085 = vmatprep.subr.bf16.mxu0 0
    %2086 = vmatpush1.bf16.msra.mxu0 0
    %2087 = vmatprep.subr.bf16.mxu0 0
    %2088 = vmatpush1.bf16.msra.mxu0 0
    %2089 = vmatprep.subr.bf16.mxu0 0
    %2090 = vmatpush1.bf16.msra.mxu0 0
    %2091 = vmatprep.subr.bf16.mxu0 0
    %2092 = vmatpush1.bf16.msra.mxu0 0
    %2093 = vmatprep.subr.bf16.mxu0 0
    %2094 = vmatpush1.bf16.msra.mxu0 0
    %2095 = vmatprep.subr.bf16.mxu0 0
    %2096 = vmatpush1.bf16.msra.mxu0 0
    %2097 = vmatprep.subr.bf16.mxu0 0
    %2098 = vmatpush1.bf16.msra.mxu0 0
    %2099 = vmatprep.subr.bf16.mxu0 0
    %2100 = vmatpush1.bf16.msra.mxu0 0
    %2101 = vmatprep.subr.bf16.mxu0 0
    %2102 = vmatpush1.bf16.msra.mxu0 0
    %2103 = vmatprep.subr.bf16.mxu0 0
    %2104 = vmatpush1.bf16.msra.mxu0 0
    %2105 = vmatprep.subr.bf16.mxu0 0
    %2106 = vmatpush1.bf16.msra.mxu0 0
    %2107 = vmatprep.subr.bf16.mxu0 0
    %2108 = vmatpush1.bf16.msra.mxu0 0
    %2109 = vmatprep.subr.bf16.mxu0 0
    %2110 = vmatpush1.bf16.msra.mxu0 0
    %2111 = vmatprep.subr.bf16.mxu0 0
    %2112 = vmatpush1.bf16.msra.mxu0 0
    %2113 = vmatprep.subr.bf16.mxu0 0
    %2114 = vmatpush1.bf16.msra.mxu0 0
    %2115 = vmatprep.mubr.bf16.mxu0 0
    %2116 = vmatmul.mubr.bf16.gmra.mrb[0].mxu0 %v2078
    %v2117 = vpop.f32.mrb[0].mxu0
    %v2118 = vadd.f32 0.0, %v2117
    %v2119 = vpop.f32.mrb[0].mxu0
    %v2120 = vpop.f32.mrb[0].mxu0
    %v2121 = vpop.f32.mrb[0].mxu0
    %2122 = vdwg.mxu0
    %2124 = vrot.lane.b32.xlu0 %v448, 96
    %v2125 = vpop.permute.xlu0 %2124
    %v2127 = vsel %vm982, %v1971, 0
    %v2130 = vsel %vm1082, %v2125, 0
    %2132 = vmatprep.subr.bf16.mxu0 0
    %2133 = vmatpush1.bf16.msra.mxu0 %v2130
    %2134 = vmatprep.subr.bf16.mxu0 0
    %2135 = vmatpush1.bf16.msra.mxu0 0
    %2136 = vmatprep.subr.bf16.mxu0 0
    %2137 = vmatpush1.bf16.msra.mxu0 0
    %2138 = vmatprep.subr.bf16.mxu0 0
    %2139 = vmatpush1.bf16.msra.mxu0 0
    %2140 = vmatprep.subr.bf16.mxu0 0
    %2141 = vmatpush1.bf16.msra.mxu0 0
    %2142 = vmatprep.subr.bf16.mxu0 0
    %2143 = vmatpush1.bf16.msra.mxu0 0
    %2144 = vmatprep.subr.bf16.mxu0 0
    %2145 = vmatpush1.bf16.msra.mxu0 0
    %2146 = vmatprep.subr.bf16.mxu0 0
    %2147 = vmatpush1.bf16.msra.mxu0 0
    %2148 = vmatprep.subr.bf16.mxu0 0
    %2149 = vmatpush1.bf16.msra.mxu0 0
    %2150 = vmatprep.subr.bf16.mxu0 0
    %2151 = vmatpush1.bf16.msra.mxu0 0
    %2152 = vmatprep.subr.bf16.mxu0 0
    %2153 = vmatpush1.bf16.msra.mxu0 0
    %2154 = vmatprep.subr.bf16.mxu0 0
    %2155 = vmatpush1.bf16.msra.mxu0 0
    %2156 = vmatprep.subr.bf16.mxu0 0
    %2157 = vmatpush1.bf16.msra.mxu0 0
    %2158 = vmatprep.subr.bf16.mxu0 0
    %2159 = vmatpush1.bf16.msra.mxu0 0
    %2160 = vmatprep.subr.bf16.mxu0 0
    %2161 = vmatpush1.bf16.msra.mxu0 0
    %2162 = vmatprep.subr.bf16.mxu0 0
    %2163 = vmatpush1.bf16.msra.mxu0 0
    %2164 = vmatprep.mubr.bf16.mxu0 0
    %2165 = vmatmul.mubr.bf16.gmra.mrb[0].mxu0 %v2127
    %v2166 = vpop.f32.mrb[0].mxu0
    %v2167 = vadd.f32 0.0, %v2166
    %v2168 = vpop.f32.mrb[0].mxu0
    %v2169 = vpop.f32.mrb[0].mxu0
    %v2170 = vpop.f32.mrb[0].mxu0
    %2171 = vdwg.mxu0
    %2173 = vrot.lane.b32.xlu0 %v449, 96
    %v2174 = vpop.permute.xlu0 %2173
    %v2176 = vsel %vm982, %v1972, 0
    %v2179 = vsel %vm1082, %v2174, 0
    %2181 = vmatprep.subr.bf16.mxu0 0
    %2182 = vmatpush1.bf16.msra.mxu0 %v2179
    %2183 = vmatprep.subr.bf16.mxu0 0
    %2184 = vmatpush1.bf16.msra.mxu0 0
    %2185 = vmatprep.subr.bf16.mxu0 0
    %2186 = vmatpush1.bf16.msra.mxu0 0
    %2187 = vmatprep.subr.bf16.mxu0 0
    %2188 = vmatpush1.bf16.msra.mxu0 0
    %2189 = vmatprep.subr.bf16.mxu0 0
    %2190 = vmatpush1.bf16.msra.mxu0 0
    %2191 = vmatprep.subr.bf16.mxu0 0
    %2192 = vmatpush1.bf16.msra.mxu0 0
    %2193 = vmatprep.subr.bf16.mxu0 0
    %2194 = vmatpush1.bf16.msra.mxu0 0
    %2195 = vmatprep.subr.bf16.mxu0 0
    %2196 = vmatpush1.bf16.msra.mxu0 0
    %2197 = vmatprep.subr.bf16.mxu0 0
    %2198 = vmatpush1.bf16.msra.mxu0 0
    %2199 = vmatprep.subr.bf16.mxu0 0
    %2200 = vmatpush1.bf16.msra.mxu0 0
    %2201 = vmatprep.subr.bf16.mxu0 0
    %2202 = vmatpush1.bf16.msra.mxu0 0
    %2203 = vmatprep.subr.bf16.mxu0 0
    %2204 = vmatpush1.bf16.msra.mxu0 0
    %2205 = vmatprep.subr.bf16.mxu0 0
    %2206 = vmatpush1.bf16.msra.mxu0 0
    %2207 = vmatprep.subr.bf16.mxu0 0
    %2208 = vmatpush1.bf16.msra.mxu0 0
    %2209 = vmatprep.subr.bf16.mxu0 0
    %2210 = vmatpush1.bf16.msra.mxu0 0
    %2211 = vmatprep.subr.bf16.mxu0 0
    %2212 = vmatpush1.bf16.msra.mxu0 0
    %2213 = vmatprep.mubr.bf16.mxu0 0
    %2214 = vmatmul.mubr.bf16.gmra.mrb[0].mxu0 %v2176
    %v2215 = vpop.f32.mrb[0].mxu0
    %v2216 = vadd.f32 0.0, %v2215
    %v2217 = vpop.f32.mrb[0].mxu0
    %v2218 = vpop.f32.mrb[0].mxu0
    %v2219 = vpop.f32.mrb[0].mxu0
    %2220 = vdwg.mxu0
    %2222 = vrot.lane.b32.xlu0 %v450, 96
    %v2223 = vpop.permute.xlu0 %2222
    %v2225 = vsel %vm982, %v1973, 0
    %v2228 = vsel %vm1082, %v2223, 0
    %2230 = vmatprep.subr.bf16.mxu0 0
    %2231 = vmatpush1.bf16.msra.mxu0 %v2228
    %2232 = vmatprep.subr.bf16.mxu0 0
    %2233 = vmatpush1.bf16.msra.mxu0 0
    %2234 = vmatprep.subr.bf16.mxu0 0
    %2235 = vmatpush1.bf16.msra.mxu0 0
    %2236 = vmatprep.subr.bf16.mxu0 0
    %2237 = vmatpush1.bf16.msra.mxu0 0
    %2238 = vmatprep.subr.bf16.mxu0 0
    %2239 = vmatpush1.bf16.msra.mxu0 0
    %2240 = vmatprep.subr.bf16.mxu0 0
    %2241 = vmatpush1.bf16.msra.mxu0 0
    %2242 = vmatprep.subr.bf16.mxu0 0
    %2243 = vmatpush1.bf16.msra.mxu0 0
    %2244 = vmatprep.subr.bf16.mxu0 0
    %2245 = vmatpush1.bf16.msra.mxu0 0
    %2246 = vmatprep.subr.bf16.mxu0 0
    %2247 = vmatpush1.bf16.msra.mxu0 0
    %2248 = vmatprep.subr.bf16.mxu0 0
    %2249 = vmatpush1.bf16.msra.mxu0 0
    %2250 = vmatprep.subr.bf16.mxu0 0
    %2251 = vmatpush1.bf16.msra.mxu0 0
    %2252 = vmatprep.subr.bf16.mxu0 0
    %2253 = vmatpush1.bf16.msra.mxu0 0
    %2254 = vmatprep.subr.bf16.mxu0 0
    %2255 = vmatpush1.bf16.msra.mxu0 0
    %2256 = vmatprep.subr.bf16.mxu0 0
    %2257 = vmatpush1.bf16.msra.mxu0 0
    %2258 = vmatprep.subr.bf16.mxu0 0
    %2259 = vmatpush1.bf16.msra.mxu0 0
    %2260 = vmatprep.subr.bf16.mxu0 0
    %2261 = vmatpush1.bf16.msra.mxu0 0
    %2262 = vmatprep.mubr.bf16.mxu0 0
    %2263 = vmatmul.mubr.bf16.gmra.mrb[0].mxu0 %v2225
    %v2264 = vpop.f32.mrb[0].mxu0
    %v2265 = vadd.f32 0.0, %v2264
    %v2266 = vpop.f32.mrb[0].mxu0
    %v2267 = vpop.f32.mrb[0].mxu0
    %v2268 = vpop.f32.mrb[0].mxu0
    %2269 = vdwg.mxu0
    %2271 = vrot.lane.b32.xlu0 %v451, 96
    %v2272 = vpop.permute.xlu0 %2271
    %v2274 = vsel %vm982, %v1974, 0
    %v2277 = vsel %vm1082, %v2272, 0
    %2279 = vmatprep.subr.bf16.mxu0 0
    %2280 = vmatpush1.bf16.msra.mxu0 %v2277
    %2281 = vmatprep.subr.bf16.mxu0 0
    %2282 = vmatpush1.bf16.msra.mxu0 0
    %2283 = vmatprep.subr.bf16.mxu0 0
    %2284 = vmatpush1.bf16.msra.mxu0 0
    %2285 = vmatprep.subr.bf16.mxu0 0
    %2286 = vmatpush1.bf16.msra.mxu0 0
    %2287 = vmatprep.subr.bf16.mxu0 0
    %2288 = vmatpush1.bf16.msra.mxu0 0
    %2289 = vmatprep.subr.bf16.mxu0 0
    %2290 = vmatpush1.bf16.msra.mxu0 0
    %2291 = vmatprep.subr.bf16.mxu0 0
    %2292 = vmatpush1.bf16.msra.mxu0 0
    %2293 = vmatprep.subr.bf16.mxu0 0
    %2294 = vmatpush1.bf16.msra.mxu0 0
    %2295 = vmatprep.subr.bf16.mxu0 0
    %2296 = vmatpush1.bf16.msra.mxu0 0
    %2297 = vmatprep.subr.bf16.mxu0 0
    %2298 = vmatpush1.bf16.msra.mxu0 0
    %2299 = vmatprep.subr.bf16.mxu0 0
    %2300 = vmatpush1.bf16.msra.mxu0 0
    %2301 = vmatprep.subr.bf16.mxu0 0
    %2302 = vmatpush1.bf16.msra.mxu0 0
    %2303 = vmatprep.subr.bf16.mxu0 0
    %2304 = vmatpush1.bf16.msra.mxu0 0
    %2305 = vmatprep.subr.bf16.mxu0 0
    %2306 = vmatpush1.bf16.msra.mxu0 0
    %2307 = vmatprep.subr.bf16.mxu0 0
    %2308 = vmatpush1.bf16.msra.mxu0 0
    %2309 = vmatprep.subr.bf16.mxu0 0
    %2310 = vmatpush1.bf16.msra.mxu0 0
    %2311 = vmatprep.mubr.bf16.mxu0 0
    %2312 = vmatmul.mubr.bf16.gmra.mrb[0].mxu0 %v2274
    %v2313 = vpop.f32.mrb[0].mxu0
    %v2314 = vadd.f32 0.0, %v2313
    %v2315 = vpop.f32.mrb[0].mxu0
    %v2316 = vpop.f32.mrb[0].mxu0
    %v2317 = vpop.f32.mrb[0].mxu0
    %2318 = vdwg.mxu0
    %2320 = vrot.lane.b32.xlu0 %v452, 96
    %v2321 = vpop.permute.xlu0 %2320
    %v2323 = vsel %vm982, %v1975, 0
    %v2326 = vsel %vm1082, %v2321, 0
    %2328 = vmatprep.subr.bf16.mxu0 0
    %2329 = vmatpush1.bf16.msra.mxu0 %v2326
    %2330 = vmatprep.subr.bf16.mxu0 0
    %2331 = vmatpush1.bf16.msra.mxu0 0
    %2332 = vmatprep.subr.bf16.mxu0 0
    %2333 = vmatpush1.bf16.msra.mxu0 0
    %2334 = vmatprep.subr.bf16.mxu0 0
    %2335 = vmatpush1.bf16.msra.mxu0 0
    %2336 = vmatprep.subr.bf16.mxu0 0
    %2337 = vmatpush1.bf16.msra.mxu0 0
    %2338 = vmatprep.subr.bf16.mxu0 0
    %2339 = vmatpush1.bf16.msra.mxu0 0
    %2340 = vmatprep.subr.bf16.mxu0 0
    %2341 = vmatpush1.bf16.msra.mxu0 0
    %2342 = vmatprep.subr.bf16.mxu0 0
    %2343 = vmatpush1.bf16.msra.mxu0 0
    %2344 = vmatprep.subr.bf16.mxu0 0
    %2345 = vmatpush1.bf16.msra.mxu0 0
    %2346 = vmatprep.subr.bf16.mxu0 0
    %2347 = vmatpush1.bf16.msra.mxu0 0
    %2348 = vmatprep.subr.bf16.mxu0 0
    %2349 = vmatpush1.bf16.msra.mxu0 0
    %2350 = vmatprep.subr.bf16.mxu0 0
    %2351 = vmatpush1.bf16.msra.mxu0 0
    %2352 = vmatprep.subr.bf16.mxu0 0
    %2353 = vmatpush1.bf16.msra.mxu0 0
    %2354 = vmatprep.subr.bf16.mxu0 0
    %2355 = vmatpush1.bf16.msra.mxu0 0
    %2356 = vmatprep.subr.bf16.mxu0 0
    %2357 = vmatpush1.bf16.msra.mxu0 0
    %2358 = vmatprep.subr.bf16.mxu0 0
    %2359 = vmatpush1.bf16.msra.mxu0 0
    %2360 = vmatprep.mubr.bf16.mxu0 0
    %2361 = vmatmul.mubr.bf16.gmra.mrb[0].mxu0 %v2323
    %v2362 = vpop.f32.mrb[0].mxu0
    %v2363 = vadd.f32 0.0, %v2362
    %v2364 = vpop.f32.mrb[0].mxu0
    %v2365 = vpop.f32.mrb[0].mxu0
    %v2366 = vpop.f32.mrb[0].mxu0
    %2367 = vdwg.mxu0
    %2368 = vrot.lane.b32.xlu0 %v429, 64
    %v2369 = vpop.permute.xlu0 %2368
    %2370 = vrot.lane.b32.xlu0 %v437, 64
    %v2371 = vpop.permute.xlu0 %2370
    %v2373 = vsel %vm469, %v2369, 0
    %v2376 = vsel %vm469, %v2371, 0
    %2378 = vmatprep.subr.bf16.mxu0 0
    %2379 = vmatpush1.bf16.xpose.msra.mxu0 %v2376
    %2380 = vmatprep.subr.bf16.mxu0 0
    %2381 = vmatpush1.bf16.xpose.msra.mxu0 0
    %2382 = vmatprep.subr.bf16.mxu0 0
    %2383 = vmatpush1.bf16.xpose.msra.mxu0 0
    %2384 = vmatprep.subr.bf16.mxu0 0
    %2385 = vmatpush1.bf16.xpose.msra.mxu0 0
    %2386 = vmatprep.subr.bf16.mxu0 0
    %2387 = vmatpush1.bf16.xpose.msra.mxu0 0
    %2388 = vmatprep.subr.bf16.mxu0 0
    %2389 = vmatpush1.bf16.xpose.msra.mxu0 0
    %2390 = vmatprep.subr.bf16.mxu0 0
    %2391 = vmatpush1.bf16.xpose.msra.mxu0 0
    %2392 = vmatprep.subr.bf16.mxu0 0
    %2393 = vmatpush1.bf16.xpose.msra.mxu0 0
    %2394 = vmatprep.subr.bf16.mxu0 0
    %2395 = vmatpush1.bf16.xpose.msra.mxu0 0
    %2396 = vmatprep.subr.bf16.mxu0 0
    %2397 = vmatpush1.bf16.xpose.msra.mxu0 0
    %2398 = vmatprep.subr.bf16.mxu0 0
    %2399 = vmatpush1.bf16.xpose.msra.mxu0 0
    %2400 = vmatprep.subr.bf16.mxu0 0
    %2401 = vmatpush1.bf16.xpose.msra.mxu0 0
    %2402 = vmatprep.subr.bf16.mxu0 0
    %2403 = vmatpush1.bf16.xpose.msra.mxu0 0
    %2404 = vmatprep.subr.bf16.mxu0 0
    %2405 = vmatpush1.bf16.xpose.msra.mxu0 0
    %2406 = vmatprep.subr.bf16.mxu0 0
    %2407 = vmatpush1.bf16.xpose.msra.mxu0 0
    %2408 = vmatprep.subr.bf16.mxu0 0
    %2409 = vmatpush1.bf16.xpose.msra.mxu0 0
    %2410 = vmatprep.mubr.bf16.mxu0 0
    %2411 = vmatmul.mubr.bf16.gmra.mrb[0].mxu0 %v2373
    %v2412 = vpop.f32.mrb[0].mxu0
    %v2413 = vadd.f32 0.0, %v2412
    %v2414 = vpop.f32.mrb[0].mxu0
    %v2415 = vpop.f32.mrb[0].mxu0
    %v2416 = vpop.f32.mrb[0].mxu0
    %2417 = vdwg.mxu0
    %2418 = vrot.lane.b32.xlu0 %v430, 64
    %v2419 = vpop.permute.xlu0 %2418
    %2420 = vrot.lane.b32.xlu0 %v438, 64
    %v2421 = vpop.permute.xlu0 %2420
    %v2423 = vsel %vm469, %v2419, 0
    %v2426 = vsel %vm469, %v2421, 0
    %2428 = vmatprep.subr.bf16.mxu0 0
    %2429 = vmatpush1.bf16.xpose.msra.mxu0 %v2426
    %2430 = vmatprep.subr.bf16.mxu0 0
    %2431 = vmatpush1.bf16.xpose.msra.mxu0 0
    %2432 = vmatprep.subr.bf16.mxu0 0
    %2433 = vmatpush1.bf16.xpose.msra.mxu0 0
    %2434 = vmatprep.subr.bf16.mxu0 0
    %2435 = vmatpush1.bf16.xpose.msra.mxu0 0
    %2436 = vmatprep.subr.bf16.mxu0 0
    %2437 = vmatpush1.bf16.xpose.msra.mxu0 0
    %2438 = vmatprep.subr.bf16.mxu0 0
    %2439 = vmatpush1.bf16.xpose.msra.mxu0 0
    %2440 = vmatprep.subr.bf16.mxu0 0
    %2441 = vmatpush1.bf16.xpose.msra.mxu0 0
    %2442 = vmatprep.subr.bf16.mxu0 0
    %2443 = vmatpush1.bf16.xpose.msra.mxu0 0
    %2444 = vmatprep.subr.bf16.mxu0 0
    %2445 = vmatpush1.bf16.xpose.msra.mxu0 0
    %2446 = vmatprep.subr.bf16.mxu0 0
    %2447 = vmatpush1.bf16.xpose.msra.mxu0 0
    %2448 = vmatprep.subr.bf16.mxu0 0
    %2449 = vmatpush1.bf16.xpose.msra.mxu0 0
    %2450 = vmatprep.subr.bf16.mxu0 0
    %2451 = vmatpush1.bf16.xpose.msra.mxu0 0
    %2452 = vmatprep.subr.bf16.mxu0 0
    %2453 = vmatpush1.bf16.xpose.msra.mxu0 0
    %2454 = vmatprep.subr.bf16.mxu0 0
    %2455 = vmatpush1.bf16.xpose.msra.mxu0 0
    %2456 = vmatprep.subr.bf16.mxu0 0
    %2457 = vmatpush1.bf16.xpose.msra.mxu0 0
    %2458 = vmatprep.subr.bf16.mxu0 0
    %2459 = vmatpush1.bf16.xpose.msra.mxu0 0
    %2460 = vmatprep.mubr.bf16.mxu0 0
    %2461 = vmatmul.mubr.bf16.gmra.mrb[0].mxu0 %v2423
    %v2462 = vpop.f32.mrb[0].mxu0
    %v2463 = vadd.f32 0.0, %v2462
    %v2464 = vpop.f32.mrb[0].mxu0
    %v2465 = vpop.f32.mrb[0].mxu0
    %v2466 = vpop.f32.mrb[0].mxu0
    %2467 = vdwg.mxu0
    %2468 = vrot.lane.b32.xlu0 %v431, 64
    %v2469 = vpop.permute.xlu0 %2468
    %2470 = vrot.lane.b32.xlu0 %v439, 64
    %v2471 = vpop.permute.xlu0 %2470
    %v2473 = vsel %vm469, %v2469, 0
    %v2476 = vsel %vm469, %v2471, 0
    %2478 = vmatprep.subr.bf16.mxu0 0
    %2479 = vmatpush1.bf16.xpose.msra.mxu0 %v2476
    %2480 = vmatprep.subr.bf16.mxu0 0
    %2481 = vmatpush1.bf16.xpose.msra.mxu0 0
    %2482 = vmatprep.subr.bf16.mxu0 0
    %2483 = vmatpush1.bf16.xpose.msra.mxu0 0
    %2484 = vmatprep.subr.bf16.mxu0 0
    %2485 = vmatpush1.bf16.xpose.msra.mxu0 0
    %2486 = vmatprep.subr.bf16.mxu0 0
    %2487 = vmatpush1.bf16.xpose.msra.mxu0 0
    %2488 = vmatprep.subr.bf16.mxu0 0
    %2489 = vmatpush1.bf16.xpose.msra.mxu0 0
    %2490 = vmatprep.subr.bf16.mxu0 0
    %2491 = vmatpush1.bf16.xpose.msra.mxu0 0
    %2492 = vmatprep.subr.bf16.mxu0 0
    %2493 = vmatpush1.bf16.xpose.msra.mxu0 0
    %2494 = vmatprep.subr.bf16.mxu0 0
    %2495 = vmatpush1.bf16.xpose.msra.mxu0 0
    %2496 = vmatprep.subr.bf16.mxu0 0
    %2497 = vmatpush1.bf16.xpose.msra.mxu0 0
    %2498 = vmatprep.subr.bf16.mxu0 0
    %2499 = vmatpush1.bf16.xpose.msra.mxu0 0
    %2500 = vmatprep.subr.bf16.mxu0 0
    %2501 = vmatpush1.bf16.xpose.msra.mxu0 0
    %2502 = vmatprep.subr.bf16.mxu0 0
    %2503 = vmatpush1.bf16.xpose.msra.mxu0 0
    %2504 = vmatprep.subr.bf16.mxu0 0
    %2505 = vmatpush1.bf16.xpose.msra.mxu0 0
    %2506 = vmatprep.subr.bf16.mxu0 0
    %2507 = vmatpush1.bf16.xpose.msra.mxu0 0
    %2508 = vmatprep.subr.bf16.mxu0 0
    %2509 = vmatpush1.bf16.xpose.msra.mxu0 0
    %2510 = vmatprep.mubr.bf16.mxu0 0
    %2511 = vmatmul.mubr.bf16.gmra.mrb[0].mxu0 %v2473
    %v2512 = vpop.f32.mrb[0].mxu0
    %v2513 = vadd.f32 0.0, %v2512
    %v2514 = vpop.f32.mrb[0].mxu0
    %v2515 = vpop.f32.mrb[0].mxu0
    %v2516 = vpop.f32.mrb[0].mxu0
    %2517 = vdwg.mxu0
    %2518 = vrot.lane.b32.xlu0 %v432, 64
    %v2519 = vpop.permute.xlu0 %2518
    %2520 = vrot.lane.b32.xlu0 %v440, 64
    %v2521 = vpop.permute.xlu0 %2520
    %v2523 = vsel %vm469, %v2519, 0
    %v2526 = vsel %vm469, %v2521, 0
    %2528 = vmatprep.subr.bf16.mxu0 0
    %2529 = vmatpush1.bf16.xpose.msra.mxu0 %v2526
    %2530 = vmatprep.subr.bf16.mxu0 0
    %2531 = vmatpush1.bf16.xpose.msra.mxu0 0
    %2532 = vmatprep.subr.bf16.mxu0 0
    %2533 = vmatpush1.bf16.xpose.msra.mxu0 0
    %2534 = vmatprep.subr.bf16.mxu0 0
    %2535 = vmatpush1.bf16.xpose.msra.mxu0 0
    %2536 = vmatprep.subr.bf16.mxu0 0
    %2537 = vmatpush1.bf16.xpose.msra.mxu0 0
    %2538 = vmatprep.subr.bf16.mxu0 0
    %2539 = vmatpush1.bf16.xpose.msra.mxu0 0
    %2540 = vmatprep.subr.bf16.mxu0 0
    %2541 = vmatpush1.bf16.xpose.msra.mxu0 0
    %2542 = vmatprep.subr.bf16.mxu0 0
    %2543 = vmatpush1.bf16.xpose.msra.mxu0 0
    %2544 = vmatprep.subr.bf16.mxu0 0
    %2545 = vmatpush1.bf16.xpose.msra.mxu0 0
    %2546 = vmatprep.subr.bf16.mxu0 0
    %2547 = vmatpush1.bf16.xpose.msra.mxu0 0
    %2548 = vmatprep.subr.bf16.mxu0 0
    %2549 = vmatpush1.bf16.xpose.msra.mxu0 0
    %2550 = vmatprep.subr.bf16.mxu0 0
    %2551 = vmatpush1.bf16.xpose.msra.mxu0 0
    %2552 = vmatprep.subr.bf16.mxu0 0
    %2553 = vmatpush1.bf16.xpose.msra.mxu0 0
    %2554 = vmatprep.subr.bf16.mxu0 0
    %2555 = vmatpush1.bf16.xpose.msra.mxu0 0
    %2556 = vmatprep.subr.bf16.mxu0 0
    %2557 = vmatpush1.bf16.xpose.msra.mxu0 0
    %2558 = vmatprep.subr.bf16.mxu0 0
    %2559 = vmatpush1.bf16.xpose.msra.mxu0 0
    %2560 = vmatprep.mubr.bf16.mxu0 0
    %2561 = vmatmul.mubr.bf16.gmra.mrb[0].mxu0 %v2523
    %v2562 = vpop.f32.mrb[0].mxu0
    %v2563 = vadd.f32 0.0, %v2562
    %v2564 = vpop.f32.mrb[0].mxu0
    %v2565 = vpop.f32.mrb[0].mxu0
    %v2566 = vpop.f32.mrb[0].mxu0
    %2567 = vdwg.mxu0
    %2568 = vrot.lane.b32.xlu0 %v433, 64
    %v2569 = vpop.permute.xlu0 %2568
    %2570 = vrot.lane.b32.xlu0 %v441, 64
    %v2571 = vpop.permute.xlu0 %2570
    %v2573 = vsel %vm469, %v2569, 0
    %v2576 = vsel %vm469, %v2571, 0
    %2578 = vmatprep.subr.bf16.mxu0 0
    %2579 = vmatpush1.bf16.xpose.msra.mxu0 %v2576
    %2580 = vmatprep.subr.bf16.mxu0 0
    %2581 = vmatpush1.bf16.xpose.msra.mxu0 0
    %2582 = vmatprep.subr.bf16.mxu0 0
    %2583 = vmatpush1.bf16.xpose.msra.mxu0 0
    %2584 = vmatprep.subr.bf16.mxu0 0
    %2585 = vmatpush1.bf16.xpose.msra.mxu0 0
    %2586 = vmatprep.subr.bf16.mxu0 0
    %2587 = vmatpush1.bf16.xpose.msra.mxu0 0
    %2588 = vmatprep.subr.bf16.mxu0 0
    %2589 = vmatpush1.bf16.xpose.msra.mxu0 0
    %2590 = vmatprep.subr.bf16.mxu0 0
    %2591 = vmatpush1.bf16.xpose.msra.mxu0 0
    %2592 = vmatprep.subr.bf16.mxu0 0
    %2593 = vmatpush1.bf16.xpose.msra.mxu0 0
    %2594 = vmatprep.subr.bf16.mxu0 0
    %2595 = vmatpush1.bf16.xpose.msra.mxu0 0
    %2596 = vmatprep.subr.bf16.mxu0 0
    %2597 = vmatpush1.bf16.xpose.msra.mxu0 0
    %2598 = vmatprep.subr.bf16.mxu0 0
    %2599 = vmatpush1.bf16.xpose.msra.mxu0 0
    %2600 = vmatprep.subr.bf16.mxu0 0
    %2601 = vmatpush1.bf16.xpose.msra.mxu0 0
    %2602 = vmatprep.subr.bf16.mxu0 0
    %2603 = vmatpush1.bf16.xpose.msra.mxu0 0
    %2604 = vmatprep.subr.bf16.mxu0 0
    %2605 = vmatpush1.bf16.xpose.msra.mxu0 0
    %2606 = vmatprep.subr.bf16.mxu0 0
    %2607 = vmatpush1.bf16.xpose.msra.mxu0 0
    %2608 = vmatprep.subr.bf16.mxu0 0
    %2609 = vmatpush1.bf16.xpose.msra.mxu0 0
    %2610 = vmatprep.mubr.bf16.mxu0 0
    %2611 = vmatmul.mubr.bf16.gmra.mrb[0].mxu0 %v2573
    %v2612 = vpop.f32.mrb[0].mxu0
    %v2613 = vadd.f32 0.0, %v2612
    %v2614 = vpop.f32.mrb[0].mxu0
    %v2615 = vpop.f32.mrb[0].mxu0
    %v2616 = vpop.f32.mrb[0].mxu0
    %2617 = vdwg.mxu0
    %2618 = vrot.lane.b32.xlu0 %v434, 64
    %v2619 = vpop.permute.xlu0 %2618
    %2620 = vrot.lane.b32.xlu0 %v442, 64
    %v2621 = vpop.permute.xlu0 %2620
    %v2623 = vsel %vm469, %v2619, 0
    %v2626 = vsel %vm469, %v2621, 0
    %2628 = vmatprep.subr.bf16.mxu0 0
    %2629 = vmatpush1.bf16.xpose.msra.mxu0 %v2626
    %2630 = vmatprep.subr.bf16.mxu0 0
    %2631 = vmatpush1.bf16.xpose.msra.mxu0 0
    %2632 = vmatprep.subr.bf16.mxu0 0
    %2633 = vmatpush1.bf16.xpose.msra.mxu0 0
    %2634 = vmatprep.subr.bf16.mxu0 0
    %2635 = vmatpush1.bf16.xpose.msra.mxu0 0
    %2636 = vmatprep.subr.bf16.mxu0 0
    %2637 = vmatpush1.bf16.xpose.msra.mxu0 0
    %2638 = vmatprep.subr.bf16.mxu0 0
    %2639 = vmatpush1.bf16.xpose.msra.mxu0 0
    %2640 = vmatprep.subr.bf16.mxu0 0
    %2641 = vmatpush1.bf16.xpose.msra.mxu0 0
    %2642 = vmatprep.subr.bf16.mxu0 0
    %2643 = vmatpush1.bf16.xpose.msra.mxu0 0
    %2644 = vmatprep.subr.bf16.mxu0 0
    %2645 = vmatpush1.bf16.xpose.msra.mxu0 0
    %2646 = vmatprep.subr.bf16.mxu0 0
    %2647 = vmatpush1.bf16.xpose.msra.mxu0 0
    %2648 = vmatprep.subr.bf16.mxu0 0
    %2649 = vmatpush1.bf16.xpose.msra.mxu0 0
    %2650 = vmatprep.subr.bf16.mxu0 0
    %2651 = vmatpush1.bf16.xpose.msra.mxu0 0
    %2652 = vmatprep.subr.bf16.mxu0 0
    %2653 = vmatpush1.bf16.xpose.msra.mxu0 0
    %2654 = vmatprep.subr.bf16.mxu0 0
    %2655 = vmatpush1.bf16.xpose.msra.mxu0 0
    %2656 = vmatprep.subr.bf16.mxu0 0
    %2657 = vmatpush1.bf16.xpose.msra.mxu0 0
    %2658 = vmatprep.subr.bf16.mxu0 0
    %2659 = vmatpush1.bf16.xpose.msra.mxu0 0
    %2660 = vmatprep.mubr.bf16.mxu0 0
    %2661 = vmatmul.mubr.bf16.gmra.mrb[0].mxu0 %v2623
    %v2662 = vpop.f32.mrb[0].mxu0
    %v2663 = vadd.f32 0.0, %v2662
    %v2664 = vpop.f32.mrb[0].mxu0
    %v2665 = vpop.f32.mrb[0].mxu0
    %v2666 = vpop.f32.mrb[0].mxu0
    %2667 = vdwg.mxu0
    %2668 = vrot.lane.b32.xlu0 %v435, 64
    %v2669 = vpop.permute.xlu0 %2668
    %2670 = vrot.lane.b32.xlu0 %v443, 64
    %v2671 = vpop.permute.xlu0 %2670
    %v2673 = vsel %vm469, %v2669, 0
    %v2676 = vsel %vm469, %v2671, 0
    %2678 = vmatprep.subr.bf16.mxu0 0
    %2679 = vmatpush1.bf16.xpose.msra.mxu0 %v2676
    %2680 = vmatprep.subr.bf16.mxu0 0
    %2681 = vmatpush1.bf16.xpose.msra.mxu0 0
    %2682 = vmatprep.subr.bf16.mxu0 0
    %2683 = vmatpush1.bf16.xpose.msra.mxu0 0
    %2684 = vmatprep.subr.bf16.mxu0 0
    %2685 = vmatpush1.bf16.xpose.msra.mxu0 0
    %2686 = vmatprep.subr.bf16.mxu0 0
    %2687 = vmatpush1.bf16.xpose.msra.mxu0 0
    %2688 = vmatprep.subr.bf16.mxu0 0
    %2689 = vmatpush1.bf16.xpose.msra.mxu0 0
    %2690 = vmatprep.subr.bf16.mxu0 0
    %2691 = vmatpush1.bf16.xpose.msra.mxu0 0
    %2692 = vmatprep.subr.bf16.mxu0 0
    %2693 = vmatpush1.bf16.xpose.msra.mxu0 0
    %2694 = vmatprep.subr.bf16.mxu0 0
    %2695 = vmatpush1.bf16.xpose.msra.mxu0 0
    %2696 = vmatprep.subr.bf16.mxu0 0
    %2697 = vmatpush1.bf16.xpose.msra.mxu0 0
    %2698 = vmatprep.subr.bf16.mxu0 0
    %2699 = vmatpush1.bf16.xpose.msra.mxu0 0
    %2700 = vmatprep.subr.bf16.mxu0 0
    %2701 = vmatpush1.bf16.xpose.msra.mxu0 0
    %2702 = vmatprep.subr.bf16.mxu0 0
    %2703 = vmatpush1.bf16.xpose.msra.mxu0 0
    %2704 = vmatprep.subr.bf16.mxu0 0
    %2705 = vmatpush1.bf16.xpose.msra.mxu0 0
    %2706 = vmatprep.subr.bf16.mxu0 0
    %2707 = vmatpush1.bf16.xpose.msra.mxu0 0
    %2708 = vmatprep.subr.bf16.mxu0 0
    %2709 = vmatpush1.bf16.xpose.msra.mxu0 0
    %2710 = vmatprep.mubr.bf16.mxu0 0
    %2711 = vmatmul.mubr.bf16.gmra.mrb[0].mxu0 %v2673
    %v2712 = vpop.f32.mrb[0].mxu0
    %v2713 = vadd.f32 0.0, %v2712
    %v2714 = vpop.f32.mrb[0].mxu0
    %v2715 = vpop.f32.mrb[0].mxu0
    %v2716 = vpop.f32.mrb[0].mxu0
    %2717 = vdwg.mxu0
    %2718 = vrot.lane.b32.xlu0 %v436, 64
    %v2719 = vpop.permute.xlu0 %2718
    %2720 = vrot.lane.b32.xlu0 %v444, 64
    %v2721 = vpop.permute.xlu0 %2720
    %v2723 = vsel %vm469, %v2719, 0
    %v2726 = vsel %vm469, %v2721, 0
    %2728 = vmatprep.subr.bf16.mxu0 0
    %2729 = vmatpush1.bf16.xpose.msra.mxu0 %v2726
    %2730 = vmatprep.subr.bf16.mxu0 0
    %2731 = vmatpush1.bf16.xpose.msra.mxu0 0
    %2732 = vmatprep.subr.bf16.mxu0 0
    %2733 = vmatpush1.bf16.xpose.msra.mxu0 0
    %2734 = vmatprep.subr.bf16.mxu0 0
    %2735 = vmatpush1.bf16.xpose.msra.mxu0 0
    %2736 = vmatprep.subr.bf16.mxu0 0
    %2737 = vmatpush1.bf16.xpose.msra.mxu0 0
    %2738 = vmatprep.subr.bf16.mxu0 0
    %2739 = vmatpush1.bf16.xpose.msra.mxu0 0
    %2740 = vmatprep.subr.bf16.mxu0 0
    %2741 = vmatpush1.bf16.xpose.msra.mxu0 0
    %2742 = vmatprep.subr.bf16.mxu0 0
    %2743 = vmatpush1.bf16.xpose.msra.mxu0 0
    %2744 = vmatprep.subr.bf16.mxu0 0
    %2745 = vmatpush1.bf16.xpose.msra.mxu0 0
    %2746 = vmatprep.subr.bf16.mxu0 0
    %2747 = vmatpush1.bf16.xpose.msra.mxu0 0
    %2748 = vmatprep.subr.bf16.mxu0 0
    %2749 = vmatpush1.bf16.xpose.msra.mxu0 0
    %2750 = vmatprep.subr.bf16.mxu0 0
    %2751 = vmatpush1.bf16.xpose.msra.mxu0 0
    %2752 = vmatprep.subr.bf16.mxu0 0
    %2753 = vmatpush1.bf16.xpose.msra.mxu0 0
    %2754 = vmatprep.subr.bf16.mxu0 0
    %2755 = vmatpush1.bf16.xpose.msra.mxu0 0
    %2756 = vmatprep.subr.bf16.mxu0 0
    %2757 = vmatpush1.bf16.xpose.msra.mxu0 0
    %2758 = vmatprep.subr.bf16.mxu0 0
    %2759 = vmatpush1.bf16.xpose.msra.mxu0 0
    %2760 = vmatprep.mubr.bf16.mxu0 0
    %2761 = vmatmul.mubr.bf16.gmra.mrb[0].mxu0 %v2723
    %v2762 = vpop.f32.mrb[0].mxu0
    %v2763 = vadd.f32 0.0, %v2762
    %v2764 = vpop.f32.mrb[0].mxu0
    %v2765 = vpop.f32.mrb[0].mxu0
    %v2766 = vpop.f32.mrb[0].mxu0
    %2767 = vdwg.mxu0
    %v2768 = vmul.f32 %v2413, 0.17677669
    %v2769 = vmul.f32 %v2463, 0.17677669
    %v2770 = vmul.f32 %v2513, 0.17677669
    %v2771 = vmul.f32 %v2563, 0.17677669
    %v2772 = vmul.f32 %v2613, 0.17677669
    %v2773 = vmul.f32 %v2663, 0.17677669
    %v2774 = vmul.f32 %v2713, 0.17677669
    %v2775 = vmul.f32 %v2763, 0.17677669
    %v2776 = vadd.f32 %v2768, %v923
    %v2777 = vadd.f32 %v2769, %v929
    %v2778 = vadd.f32 %v2770, %v935
    %v2779 = vadd.f32 %v2771, %v941
    %v2780 = vadd.f32 %v2772, %v947
    %v2781 = vadd.f32 %v2773, %v953
    %v2782 = vadd.f32 %v2774, %v959
    %v2783 = vadd.f32 %v2775, %v965
    %v2784 = vsel %vm982, %v2776, -inf
    %2785 = vmax.xlane.f32.xlu0 %v2784
    %v2786 = vpop.xlane.xlu0 %2785
    %v2787 = vsel %vm982, %v2777, -inf
    %2788 = vmax.xlane.f32.xlu0 %v2787
    %v2789 = vpop.xlane.xlu0 %2788
    %v2790 = vsel %vm982, %v2778, -inf
    %2791 = vmax.xlane.f32.xlu0 %v2790
    %v2792 = vpop.xlane.xlu0 %2791
    %v2793 = vsel %vm982, %v2779, -inf
    %2794 = vmax.xlane.f32.xlu0 %v2793
    %v2795 = vpop.xlane.xlu0 %2794
    %v2796 = vsel %vm982, %v2780, -inf
    %2797 = vmax.xlane.f32.xlu0 %v2796
    %v2798 = vpop.xlane.xlu0 %2797
    %v2799 = vsel %vm982, %v2781, -inf
    %2800 = vmax.xlane.f32.xlu0 %v2799
    %v2801 = vpop.xlane.xlu0 %2800
    %v2802 = vsel %vm982, %v2782, -inf
    %2803 = vmax.xlane.f32.xlu0 %v2802
    %v2804 = vpop.xlane.xlu0 %2803
    %v2805 = vsel %vm982, %v2783, -inf
    %2806 = vmax.xlane.f32.xlu0 %v2805
    %v2807 = vpop.xlane.xlu0 %2806
    %v2808 = vsub.f32 %v2776, %v2786
    %v2809 = vsub.f32 %v2777, %v2789
    %v2810 = vsub.f32 %v2778, %v2792
    %v2811 = vsub.f32 %v2779, %v2795
    %v2812 = vsub.f32 %v2780, %v2798
    %v2813 = vsub.f32 %v2781, %v2801
    %v2814 = vsub.f32 %v2782, %v2804
    %v2815 = vsub.f32 %v2783, %v2807
    %v2816 = vmul.f32 %v2808, 1.442695
    %v2817 = vpow.pop %v2816
    %v2818 = vmul.f32 %v2809, 1.442695
    %v2819 = vpow.pop %v2818
    %v2820 = vmul.f32 %v2810, 1.442695
    %v2821 = vpow.pop %v2820
    %v2822 = vmul.f32 %v2811, 1.442695
    %v2823 = vpow.pop %v2822
    %v2824 = vmul.f32 %v2812, 1.442695
    %v2825 = vpow.pop %v2824
    %v2826 = vmul.f32 %v2813, 1.442695
    %v2827 = vpow.pop %v2826
    %v2828 = vmul.f32 %v2814, 1.442695
    %v2829 = vpow.pop %v2828
    %v2830 = vmul.f32 %v2815, 1.442695
    %v2831 = vpow.pop %v2830
    %v2832 = vsel %vm982, %v2817, 0.0
    %2833 = vadd.xlane.f32.xlu0 %v2832
    %v2834 = vpop.xlane.xlu0 %2833
    %v2835 = vsel %vm982, %v2819, 0.0
    %2836 = vadd.xlane.f32.xlu0 %v2835
    %v2837 = vpop.xlane.xlu0 %2836
    %v2838 = vsel %vm982, %v2821, 0.0
    %2839 = vadd.xlane.f32.xlu0 %v2838
    %v2840 = vpop.xlane.xlu0 %2839
    %v2841 = vsel %vm982, %v2823, 0.0
    %2842 = vadd.xlane.f32.xlu0 %v2841
    %v2843 = vpop.xlane.xlu0 %2842
    %v2844 = vsel %vm982, %v2825, 0.0
    %2845 = vadd.xlane.f32.xlu0 %v2844
    %v2846 = vpop.xlane.xlu0 %2845
    %v2847 = vsel %vm982, %v2827, 0.0
    %2848 = vadd.xlane.f32.xlu0 %v2847
    %v2849 = vpop.xlane.xlu0 %2848
    %v2850 = vsel %vm982, %v2829, 0.0
    %2851 = vadd.xlane.f32.xlu0 %v2850
    %v2852 = vpop.xlane.xlu0 %2851
    %v2853 = vsel %vm982, %v2831, 0.0
    %2854 = vadd.xlane.f32.xlu0 %v2853
    %v2855 = vpop.xlane.xlu0 %2854
    %v2856 = vrcp.pop %v2834
    %v2857 = vrcp.pop %v2837
    %v2858 = vrcp.pop %v2840
    %v2859 = vrcp.pop %v2843
    %v2860 = vrcp.pop %v2846
    %v2861 = vrcp.pop %v2849
    %v2862 = vrcp.pop %v2852
    %v2863 = vrcp.pop %v2855
    %v2864 = vmul.f32 %v2817, %v2856
    %v2865 = vmul.f32 %v2819, %v2857
    %v2866 = vmul.f32 %v2821, %v2858
    %v2867 = vmul.f32 %v2823, %v2859
    %v2868 = vmul.f32 %v2825, %v2860
    %v2869 = vmul.f32 %v2827, %v2861
    %v2870 = vmul.f32 %v2829, %v2862
    %v2871 = vmul.f32 %v2831, %v2863
    %v2872 = vpack.c.bf16 %v2864, %v2864
    %v2873 = vpack.c.bf16 %v2865, %v2865
    %v2874 = vpack.c.bf16 %v2866, %v2866
    %v2875 = vpack.c.bf16 %v2867, %v2867
    %v2876 = vpack.c.bf16 %v2868, %v2868
    %v2877 = vpack.c.bf16 %v2869, %v2869
    %v2878 = vpack.c.bf16 %v2870, %v2870
    %v2879 = vpack.c.bf16 %v2871, %v2871
    %2880 = vrot.lane.b32.xlu0 %v445, 64
    %v2881 = vpop.permute.xlu0 %2880
    %v2883 = vsel %vm982, %v2872, 0
    %v2886 = vsel %vm1082, %v2881, 0
    %2888 = vmatprep.subr.bf16.mxu0 0
    %2889 = vmatpush1.bf16.msra.mxu0 %v2886
    %2890 = vmatprep.subr.bf16.mxu0 0
    %2891 = vmatpush1.bf16.msra.mxu0 0
    %2892 = vmatprep.subr.bf16.mxu0 0
    %2893 = vmatpush1.bf16.msra.mxu0 0
    %2894 = vmatprep.subr.bf16.mxu0 0
    %2895 = vmatpush1.bf16.msra.mxu0 0
    %2896 = vmatprep.subr.bf16.mxu0 0
    %2897 = vmatpush1.bf16.msra.mxu0 0
    %2898 = vmatprep.subr.bf16.mxu0 0
    %2899 = vmatpush1.bf16.msra.mxu0 0
    %2900 = vmatprep.subr.bf16.mxu0 0
    %2901 = vmatpush1.bf16.msra.mxu0 0
    %2902 = vmatprep.subr.bf16.mxu0 0
    %2903 = vmatpush1.bf16.msra.mxu0 0
    %2904 = vmatprep.subr.bf16.mxu0 0
    %2905 = vmatpush1.bf16.msra.mxu0 0
    %2906 = vmatprep.subr.bf16.mxu0 0
    %2907 = vmatpush1.bf16.msra.mxu0 0
    %2908 = vmatprep.subr.bf16.mxu0 0
    %2909 = vmatpush1.bf16.msra.mxu0 0
    %2910 = vmatprep.subr.bf16.mxu0 0
    %2911 = vmatpush1.bf16.msra.mxu0 0
    %2912 = vmatprep.subr.bf16.mxu0 0
    %2913 = vmatpush1.bf16.msra.mxu0 0
    %2914 = vmatprep.subr.bf16.mxu0 0
    %2915 = vmatpush1.bf16.msra.mxu0 0
    %2916 = vmatprep.subr.bf16.mxu0 0
    %2917 = vmatpush1.bf16.msra.mxu0 0
    %2918 = vmatprep.subr.bf16.mxu0 0
    %2919 = vmatpush1.bf16.msra.mxu0 0
    %2920 = vmatprep.mubr.bf16.mxu0 0
    %2921 = vmatmul.mubr.bf16.gmra.mrb[0].mxu0 %v2883
    %v2922 = vpop.f32.mrb[0].mxu0
    %v2923 = vadd.f32 0.0, %v2922
    %v2924 = vpop.f32.mrb[0].mxu0
    %v2925 = vpop.f32.mrb[0].mxu0
    %v2926 = vpop.f32.mrb[0].mxu0
    %2927 = vdwg.mxu0
    %2928 = vrot.lane.b32.xlu0 %v446, 64
    %v2929 = vpop.permute.xlu0 %2928
    %v2931 = vsel %vm982, %v2873, 0
    %v2934 = vsel %vm1082, %v2929, 0
    %2936 = vmatprep.subr.bf16.mxu0 0
    %2937 = vmatpush1.bf16.msra.mxu0 %v2934
    %2938 = vmatprep.subr.bf16.mxu0 0
    %2939 = vmatpush1.bf16.msra.mxu0 0
    %2940 = vmatprep.subr.bf16.mxu0 0
    %2941 = vmatpush1.bf16.msra.mxu0 0
    %2942 = vmatprep.subr.bf16.mxu0 0
    %2943 = vmatpush1.bf16.msra.mxu0 0
    %2944 = vmatprep.subr.bf16.mxu0 0
    %2945 = vmatpush1.bf16.msra.mxu0 0
    %2946 = vmatprep.subr.bf16.mxu0 0
    %2947 = vmatpush1.bf16.msra.mxu0 0
    %2948 = vmatprep.subr.bf16.mxu0 0
    %2949 = vmatpush1.bf16.msra.mxu0 0
    %2950 = vmatprep.subr.bf16.mxu0 0
    %2951 = vmatpush1.bf16.msra.mxu0 0
    %2952 = vmatprep.subr.bf16.mxu0 0
    %2953 = vmatpush1.bf16.msra.mxu0 0
    %2954 = vmatprep.subr.bf16.mxu0 0
    %2955 = vmatpush1.bf16.msra.mxu0 0
    %2956 = vmatprep.subr.bf16.mxu0 0
    %2957 = vmatpush1.bf16.msra.mxu0 0
    %2958 = vmatprep.subr.bf16.mxu0 0
    %2959 = vmatpush1.bf16.msra.mxu0 0
    %2960 = vmatprep.subr.bf16.mxu0 0
    %2961 = vmatpush1.bf16.msra.mxu0 0
    %2962 = vmatprep.subr.bf16.mxu0 0
    %2963 = vmatpush1.bf16.msra.mxu0 0
    %2964 = vmatprep.subr.bf16.mxu0 0
    %2965 = vmatpush1.bf16.msra.mxu0 0
    %2966 = vmatprep.subr.bf16.mxu0 0
    %2967 = vmatpush1.bf16.msra.mxu0 0
    %2968 = vmatprep.mubr.bf16.mxu0 0
    %2969 = vmatmul.mubr.bf16.gmra.mrb[0].mxu0 %v2931
    %v2970 = vpop.f32.mrb[0].mxu0
    %v2971 = vadd.f32 0.0, %v2970
    %v2972 = vpop.f32.mrb[0].mxu0
    %v2973 = vpop.f32.mrb[0].mxu0
    %v2974 = vpop.f32.mrb[0].mxu0
    %2975 = vdwg.mxu0
    %2976 = vrot.lane.b32.xlu0 %v447, 64
    %v2977 = vpop.permute.xlu0 %2976
    %v2979 = vsel %vm982, %v2874, 0
    %v2982 = vsel %vm1082, %v2977, 0
    %2984 = vmatprep.subr.bf16.mxu0 0
    %2985 = vmatpush1.bf16.msra.mxu0 %v2982
    %2986 = vmatprep.subr.bf16.mxu0 0
    %2987 = vmatpush1.bf16.msra.mxu0 0
    %2988 = vmatprep.subr.bf16.mxu0 0
    %2989 = vmatpush1.bf16.msra.mxu0 0
    %2990 = vmatprep.subr.bf16.mxu0 0
    %2991 = vmatpush1.bf16.msra.mxu0 0
    %2992 = vmatprep.subr.bf16.mxu0 0
    %2993 = vmatpush1.bf16.msra.mxu0 0
    %2994 = vmatprep.subr.bf16.mxu0 0
    %2995 = vmatpush1.bf16.msra.mxu0 0
    %2996 = vmatprep.subr.bf16.mxu0 0
    %2997 = vmatpush1.bf16.msra.mxu0 0
    %2998 = vmatprep.subr.bf16.mxu0 0
    %2999 = vmatpush1.bf16.msra.mxu0 0
    %3000 = vmatprep.subr.bf16.mxu0 0
    %3001 = vmatpush1.bf16.msra.mxu0 0
    %3002 = vmatprep.subr.bf16.mxu0 0
    %3003 = vmatpush1.bf16.msra.mxu0 0
    %3004 = vmatprep.subr.bf16.mxu0 0
    %3005 = vmatpush1.bf16.msra.mxu0 0
    %3006 = vmatprep.subr.bf16.mxu0 0
    %3007 = vmatpush1.bf16.msra.mxu0 0
    %3008 = vmatprep.subr.bf16.mxu0 0
    %3009 = vmatpush1.bf16.msra.mxu0 0
    %3010 = vmatprep.subr.bf16.mxu0 0
    %3011 = vmatpush1.bf16.msra.mxu0 0
    %3012 = vmatprep.subr.bf16.mxu0 0
    %3013 = vmatpush1.bf16.msra.mxu0 0
    %3014 = vmatprep.subr.bf16.mxu0 0
    %3015 = vmatpush1.bf16.msra.mxu0 0
    %3016 = vmatprep.mubr.bf16.mxu0 0
    %3017 = vmatmul.mubr.bf16.gmra.mrb[0].mxu0 %v2979
    %v3018 = vpop.f32.mrb[0].mxu0
    %v3019 = vadd.f32 0.0, %v3018
    %v3020 = vpop.f32.mrb[0].mxu0
    %v3021 = vpop.f32.mrb[0].mxu0
    %v3022 = vpop.f32.mrb[0].mxu0
    %3023 = vdwg.mxu0
    %3024 = vrot.lane.b32.xlu0 %v448, 64
    %v3025 = vpop.permute.xlu0 %3024
    %v3027 = vsel %vm982, %v2875, 0
    %v3030 = vsel %vm1082, %v3025, 0
    %3032 = vmatprep.subr.bf16.mxu0 0
    %3033 = vmatpush1.bf16.msra.mxu0 %v3030
    %3034 = vmatprep.subr.bf16.mxu0 0
    %3035 = vmatpush1.bf16.msra.mxu0 0
    %3036 = vmatprep.subr.bf16.mxu0 0
    %3037 = vmatpush1.bf16.msra.mxu0 0
    %3038 = vmatprep.subr.bf16.mxu0 0
    %3039 = vmatpush1.bf16.msra.mxu0 0
    %3040 = vmatprep.subr.bf16.mxu0 0
    %3041 = vmatpush1.bf16.msra.mxu0 0
    %3042 = vmatprep.subr.bf16.mxu0 0
    %3043 = vmatpush1.bf16.msra.mxu0 0
    %3044 = vmatprep.subr.bf16.mxu0 0
    %3045 = vmatpush1.bf16.msra.mxu0 0
    %3046 = vmatprep.subr.bf16.mxu0 0
    %3047 = vmatpush1.bf16.msra.mxu0 0
    %3048 = vmatprep.subr.bf16.mxu0 0
    %3049 = vmatpush1.bf16.msra.mxu0 0
    %3050 = vmatprep.subr.bf16.mxu0 0
    %3051 = vmatpush1.bf16.msra.mxu0 0
    %3052 = vmatprep.subr.bf16.mxu0 0
    %3053 = vmatpush1.bf16.msra.mxu0 0
    %3054 = vmatprep.subr.bf16.mxu0 0
    %3055 = vmatpush1.bf16.msra.mxu0 0
    %3056 = vmatprep.subr.bf16.mxu0 0
    %3057 = vmatpush1.bf16.msra.mxu0 0
    %3058 = vmatprep.subr.bf16.mxu0 0
    %3059 = vmatpush1.bf16.msra.mxu0 0
    %3060 = vmatprep.subr.bf16.mxu0 0
    %3061 = vmatpush1.bf16.msra.mxu0 0
    %3062 = vmatprep.subr.bf16.mxu0 0
    %3063 = vmatpush1.bf16.msra.mxu0 0
    %3064 = vmatprep.mubr.bf16.mxu0 0
    %3065 = vmatmul.mubr.bf16.gmra.mrb[0].mxu0 %v3027
    %v3066 = vpop.f32.mrb[0].mxu0
    %v3067 = vadd.f32 0.0, %v3066
    %v3068 = vpop.f32.mrb[0].mxu0
    %v3069 = vpop.f32.mrb[0].mxu0
    %v3070 = vpop.f32.mrb[0].mxu0
    %3071 = vdwg.mxu0
    %3072 = vrot.lane.b32.xlu0 %v449, 64
    %v3073 = vpop.permute.xlu0 %3072
    %v3075 = vsel %vm982, %v2876, 0
    %v3078 = vsel %vm1082, %v3073, 0
    %3080 = vmatprep.subr.bf16.mxu0 0
    %3081 = vmatpush1.bf16.msra.mxu0 %v3078
    %3082 = vmatprep.subr.bf16.mxu0 0
    %3083 = vmatpush1.bf16.msra.mxu0 0
    %3084 = vmatprep.subr.bf16.mxu0 0
    %3085 = vmatpush1.bf16.msra.mxu0 0
    %3086 = vmatprep.subr.bf16.mxu0 0
    %3087 = vmatpush1.bf16.msra.mxu0 0
    %3088 = vmatprep.subr.bf16.mxu0 0
    %3089 = vmatpush1.bf16.msra.mxu0 0
    %3090 = vmatprep.subr.bf16.mxu0 0
    %3091 = vmatpush1.bf16.msra.mxu0 0
    %3092 = vmatprep.subr.bf16.mxu0 0
    %3093 = vmatpush1.bf16.msra.mxu0 0
    %3094 = vmatprep.subr.bf16.mxu0 0
    %3095 = vmatpush1.bf16.msra.mxu0 0
    %3096 = vmatprep.subr.bf16.mxu0 0
    %3097 = vmatpush1.bf16.msra.mxu0 0
    %3098 = vmatprep.subr.bf16.mxu0 0
    %3099 = vmatpush1.bf16.msra.mxu0 0
    %3100 = vmatprep.subr.bf16.mxu0 0
    %3101 = vmatpush1.bf16.msra.mxu0 0
    %3102 = vmatprep.subr.bf16.mxu0 0
    %3103 = vmatpush1.bf16.msra.mxu0 0
    %3104 = vmatprep.subr.bf16.mxu0 0
    %3105 = vmatpush1.bf16.msra.mxu0 0
    %3106 = vmatprep.subr.bf16.mxu0 0
    %3107 = vmatpush1.bf16.msra.mxu0 0
    %3108 = vmatprep.subr.bf16.mxu0 0
    %3109 = vmatpush1.bf16.msra.mxu0 0
    %3110 = vmatprep.subr.bf16.mxu0 0
    %3111 = vmatpush1.bf16.msra.mxu0 0
    %3112 = vmatprep.mubr.bf16.mxu0 0
    %3113 = vmatmul.mubr.bf16.gmra.mrb[0].mxu0 %v3075
    %v3114 = vpop.f32.mrb[0].mxu0
    %v3115 = vadd.f32 0.0, %v3114
    %v3116 = vpop.f32.mrb[0].mxu0
    %v3117 = vpop.f32.mrb[0].mxu0
    %v3118 = vpop.f32.mrb[0].mxu0
    %3119 = vdwg.mxu0
    %3120 = vrot.lane.b32.xlu0 %v450, 64
    %v3121 = vpop.permute.xlu0 %3120
    %v3123 = vsel %vm982, %v2877, 0
    %v3126 = vsel %vm1082, %v3121, 0
    %3128 = vmatprep.subr.bf16.mxu0 0
    %3129 = vmatpush1.bf16.msra.mxu0 %v3126
    %3130 = vmatprep.subr.bf16.mxu0 0
    %3131 = vmatpush1.bf16.msra.mxu0 0
    %3132 = vmatprep.subr.bf16.mxu0 0
    %3133 = vmatpush1.bf16.msra.mxu0 0
    %3134 = vmatprep.subr.bf16.mxu0 0
    %3135 = vmatpush1.bf16.msra.mxu0 0
    %3136 = vmatprep.subr.bf16.mxu0 0
    %3137 = vmatpush1.bf16.msra.mxu0 0
    %3138 = vmatprep.subr.bf16.mxu0 0
    %3139 = vmatpush1.bf16.msra.mxu0 0
    %3140 = vmatprep.subr.bf16.mxu0 0
    %3141 = vmatpush1.bf16.msra.mxu0 0
    %3142 = vmatprep.subr.bf16.mxu0 0
    %3143 = vmatpush1.bf16.msra.mxu0 0
    %3144 = vmatprep.subr.bf16.mxu0 0
    %3145 = vmatpush1.bf16.msra.mxu0 0
    %3146 = vmatprep.subr.bf16.mxu0 0
    %3147 = vmatpush1.bf16.msra.mxu0 0
    %3148 = vmatprep.subr.bf16.mxu0 0
    %3149 = vmatpush1.bf16.msra.mxu0 0
    %3150 = vmatprep.subr.bf16.mxu0 0
    %3151 = vmatpush1.bf16.msra.mxu0 0
    %3152 = vmatprep.subr.bf16.mxu0 0
    %3153 = vmatpush1.bf16.msra.mxu0 0
    %3154 = vmatprep.subr.bf16.mxu0 0
    %3155 = vmatpush1.bf16.msra.mxu0 0
    %3156 = vmatprep.subr.bf16.mxu0 0
    %3157 = vmatpush1.bf16.msra.mxu0 0
    %3158 = vmatprep.subr.bf16.mxu0 0
    %3159 = vmatpush1.bf16.msra.mxu0 0
    %3160 = vmatprep.mubr.bf16.mxu0 0
    %3161 = vmatmul.mubr.bf16.gmra.mrb[0].mxu0 %v3123
    %v3162 = vpop.f32.mrb[0].mxu0
    %v3163 = vadd.f32 0.0, %v3162
    %v3164 = vpop.f32.mrb[0].mxu0
    %v3165 = vpop.f32.mrb[0].mxu0
    %v3166 = vpop.f32.mrb[0].mxu0
    %3167 = vdwg.mxu0
    %3168 = vrot.lane.b32.xlu0 %v451, 64
    %v3169 = vpop.permute.xlu0 %3168
    %v3171 = vsel %vm982, %v2878, 0
    %v3174 = vsel %vm1082, %v3169, 0
    %3176 = vmatprep.subr.bf16.mxu0 0
    %3177 = vmatpush1.bf16.msra.mxu0 %v3174
    %3178 = vmatprep.subr.bf16.mxu0 0
    %3179 = vmatpush1.bf16.msra.mxu0 0
    %3180 = vmatprep.subr.bf16.mxu0 0
    %3181 = vmatpush1.bf16.msra.mxu0 0
    %3182 = vmatprep.subr.bf16.mxu0 0
    %3183 = vmatpush1.bf16.msra.mxu0 0
    %3184 = vmatprep.subr.bf16.mxu0 0
    %3185 = vmatpush1.bf16.msra.mxu0 0
    %3186 = vmatprep.subr.bf16.mxu0 0
    %3187 = vmatpush1.bf16.msra.mxu0 0
    %3188 = vmatprep.subr.bf16.mxu0 0
    %3189 = vmatpush1.bf16.msra.mxu0 0
    %3190 = vmatprep.subr.bf16.mxu0 0
    %3191 = vmatpush1.bf16.msra.mxu0 0
    %3192 = vmatprep.subr.bf16.mxu0 0
    %3193 = vmatpush1.bf16.msra.mxu0 0
    %3194 = vmatprep.subr.bf16.mxu0 0
    %3195 = vmatpush1.bf16.msra.mxu0 0
    %3196 = vmatprep.subr.bf16.mxu0 0
    %3197 = vmatpush1.bf16.msra.mxu0 0
    %3198 = vmatprep.subr.bf16.mxu0 0
    %3199 = vmatpush1.bf16.msra.mxu0 0
    %3200 = vmatprep.subr.bf16.mxu0 0
    %3201 = vmatpush1.bf16.msra.mxu0 0
    %3202 = vmatprep.subr.bf16.mxu0 0
    %3203 = vmatpush1.bf16.msra.mxu0 0
    %3204 = vmatprep.subr.bf16.mxu0 0
    %3205 = vmatpush1.bf16.msra.mxu0 0
    %3206 = vmatprep.subr.bf16.mxu0 0
    %3207 = vmatpush1.bf16.msra.mxu0 0
    %3208 = vmatprep.mubr.bf16.mxu0 0
    %3209 = vmatmul.mubr.bf16.gmra.mrb[0].mxu0 %v3171
    %v3210 = vpop.f32.mrb[0].mxu0
    %v3211 = vadd.f32 0.0, %v3210
    %v3212 = vpop.f32.mrb[0].mxu0
    %v3213 = vpop.f32.mrb[0].mxu0
    %v3214 = vpop.f32.mrb[0].mxu0
    %3215 = vdwg.mxu0
    %3216 = vrot.lane.b32.xlu0 %v452, 64
    %v3217 = vpop.permute.xlu0 %3216
    %v3219 = vsel %vm982, %v2879, 0
    %v3222 = vsel %vm1082, %v3217, 0
    %3224 = vmatprep.subr.bf16.mxu0 0
    %3225 = vmatpush1.bf16.msra.mxu0 %v3222
    %3226 = vmatprep.subr.bf16.mxu0 0
    %3227 = vmatpush1.bf16.msra.mxu0 0
    %3228 = vmatprep.subr.bf16.mxu0 0
    %3229 = vmatpush1.bf16.msra.mxu0 0
    %3230 = vmatprep.subr.bf16.mxu0 0
    %3231 = vmatpush1.bf16.msra.mxu0 0
    %3232 = vmatprep.subr.bf16.mxu0 0
    %3233 = vmatpush1.bf16.msra.mxu0 0
    %3234 = vmatprep.subr.bf16.mxu0 0
    %3235 = vmatpush1.bf16.msra.mxu0 0
    %3236 = vmatprep.subr.bf16.mxu0 0
    %3237 = vmatpush1.bf16.msra.mxu0 0
    %3238 = vmatprep.subr.bf16.mxu0 0
    %3239 = vmatpush1.bf16.msra.mxu0 0
    %3240 = vmatprep.subr.bf16.mxu0 0
    %3241 = vmatpush1.bf16.msra.mxu0 0
    %3242 = vmatprep.subr.bf16.mxu0 0
    %3243 = vmatpush1.bf16.msra.mxu0 0
    %3244 = vmatprep.subr.bf16.mxu0 0
    %3245 = vmatpush1.bf16.msra.mxu0 0
    %3246 = vmatprep.subr.bf16.mxu0 0
    %3247 = vmatpush1.bf16.msra.mxu0 0
    %3248 = vmatprep.subr.bf16.mxu0 0
    %3249 = vmatpush1.bf16.msra.mxu0 0
    %3250 = vmatprep.subr.bf16.mxu0 0
    %3251 = vmatpush1.bf16.msra.mxu0 0
    %3252 = vmatprep.subr.bf16.mxu0 0
    %3253 = vmatpush1.bf16.msra.mxu0 0
    %3254 = vmatprep.subr.bf16.mxu0 0
    %3255 = vmatpush1.bf16.msra.mxu0 0
    %3256 = vmatprep.mubr.bf16.mxu0 0
    %3257 = vmatmul.mubr.bf16.gmra.mrb[0].mxu0 %v3219
    %v3258 = vpop.f32.mrb[0].mxu0
    %v3259 = vadd.f32 0.0, %v3258
    %v3260 = vpop.f32.mrb[0].mxu0
    %v3261 = vpop.f32.mrb[0].mxu0
    %v3262 = vpop.f32.mrb[0].mxu0
    %3263 = vdwg.mxu0
    %3264 = vrot.lane.b32.xlu0 %v429, 32
    %v3265 = vpop.permute.xlu0 %3264
    %3266 = vrot.lane.b32.xlu0 %v437, 32
    %v3267 = vpop.permute.xlu0 %3266
    %v3269 = vsel %vm469, %v3265, 0
    %v3272 = vsel %vm469, %v3267, 0
    %3274 = vmatprep.subr.bf16.mxu0 0
    %3275 = vmatpush1.bf16.xpose.msra.mxu0 %v3272
    %3276 = vmatprep.subr.bf16.mxu0 0
    %3277 = vmatpush1.bf16.xpose.msra.mxu0 0
    %3278 = vmatprep.subr.bf16.mxu0 0
    %3279 = vmatpush1.bf16.xpose.msra.mxu0 0
    %3280 = vmatprep.subr.bf16.mxu0 0
    %3281 = vmatpush1.bf16.xpose.msra.mxu0 0
    %3282 = vmatprep.subr.bf16.mxu0 0
    %3283 = vmatpush1.bf16.xpose.msra.mxu0 0
    %3284 = vmatprep.subr.bf16.mxu0 0
    %3285 = vmatpush1.bf16.xpose.msra.mxu0 0
    %3286 = vmatprep.subr.bf16.mxu0 0
    %3287 = vmatpush1.bf16.xpose.msra.mxu0 0
    %3288 = vmatprep.subr.bf16.mxu0 0
    %3289 = vmatpush1.bf16.xpose.msra.mxu0 0
    %3290 = vmatprep.subr.bf16.mxu0 0
    %3291 = vmatpush1.bf16.xpose.msra.mxu0 0
    %3292 = vmatprep.subr.bf16.mxu0 0
    %3293 = vmatpush1.bf16.xpose.msra.mxu0 0
    %3294 = vmatprep.subr.bf16.mxu0 0
    %3295 = vmatpush1.bf16.xpose.msra.mxu0 0
    %3296 = vmatprep.subr.bf16.mxu0 0
    %3297 = vmatpush1.bf16.xpose.msra.mxu0 0
    %3298 = vmatprep.subr.bf16.mxu0 0
    %3299 = vmatpush1.bf16.xpose.msra.mxu0 0
    %3300 = vmatprep.subr.bf16.mxu0 0
    %3301 = vmatpush1.bf16.xpose.msra.mxu0 0
    %3302 = vmatprep.subr.bf16.mxu0 0
    %3303 = vmatpush1.bf16.xpose.msra.mxu0 0
    %3304 = vmatprep.subr.bf16.mxu0 0
    %3305 = vmatpush1.bf16.xpose.msra.mxu0 0
    %3306 = vmatprep.mubr.bf16.mxu0 0
    %3307 = vmatmul.mubr.bf16.gmra.mrb[0].mxu0 %v3269
    %v3308 = vpop.f32.mrb[0].mxu0
    %v3309 = vadd.f32 0.0, %v3308
    %v3310 = vpop.f32.mrb[0].mxu0
    %v3311 = vpop.f32.mrb[0].mxu0
    %v3312 = vpop.f32.mrb[0].mxu0
    %3313 = vdwg.mxu0
    %3314 = vrot.lane.b32.xlu0 %v430, 32
    %v3315 = vpop.permute.xlu0 %3314
    %3316 = vrot.lane.b32.xlu0 %v438, 32
    %v3317 = vpop.permute.xlu0 %3316
    %v3319 = vsel %vm469, %v3315, 0
    %v3322 = vsel %vm469, %v3317, 0
    %3324 = vmatprep.subr.bf16.mxu0 0
    %3325 = vmatpush1.bf16.xpose.msra.mxu0 %v3322
    %3326 = vmatprep.subr.bf16.mxu0 0
    %3327 = vmatpush1.bf16.xpose.msra.mxu0 0
    %3328 = vmatprep.subr.bf16.mxu0 0
    %3329 = vmatpush1.bf16.xpose.msra.mxu0 0
    %3330 = vmatprep.subr.bf16.mxu0 0
    %3331 = vmatpush1.bf16.xpose.msra.mxu0 0
    %3332 = vmatprep.subr.bf16.mxu0 0
    %3333 = vmatpush1.bf16.xpose.msra.mxu0 0
    %3334 = vmatprep.subr.bf16.mxu0 0
    %3335 = vmatpush1.bf16.xpose.msra.mxu0 0
    %3336 = vmatprep.subr.bf16.mxu0 0
    %3337 = vmatpush1.bf16.xpose.msra.mxu0 0
    %3338 = vmatprep.subr.bf16.mxu0 0
    %3339 = vmatpush1.bf16.xpose.msra.mxu0 0
    %3340 = vmatprep.subr.bf16.mxu0 0
    %3341 = vmatpush1.bf16.xpose.msra.mxu0 0
    %3342 = vmatprep.subr.bf16.mxu0 0
    %3343 = vmatpush1.bf16.xpose.msra.mxu0 0
    %3344 = vmatprep.subr.bf16.mxu0 0
    %3345 = vmatpush1.bf16.xpose.msra.mxu0 0
    %3346 = vmatprep.subr.bf16.mxu0 0
    %3347 = vmatpush1.bf16.xpose.msra.mxu0 0
    %3348 = vmatprep.subr.bf16.mxu0 0
    %3349 = vmatpush1.bf16.xpose.msra.mxu0 0
    %3350 = vmatprep.subr.bf16.mxu0 0
    %3351 = vmatpush1.bf16.xpose.msra.mxu0 0
    %3352 = vmatprep.subr.bf16.mxu0 0
    %3353 = vmatpush1.bf16.xpose.msra.mxu0 0
    %3354 = vmatprep.subr.bf16.mxu0 0
    %3355 = vmatpush1.bf16.xpose.msra.mxu0 0
    %3356 = vmatprep.mubr.bf16.mxu0 0
    %3357 = vmatmul.mubr.bf16.gmra.mrb[0].mxu0 %v3319
    %v3358 = vpop.f32.mrb[0].mxu0
    %v3359 = vadd.f32 0.0, %v3358
    %v3360 = vpop.f32.mrb[0].mxu0
    %v3361 = vpop.f32.mrb[0].mxu0
    %v3362 = vpop.f32.mrb[0].mxu0
    %3363 = vdwg.mxu0
    %3364 = vrot.lane.b32.xlu0 %v431, 32
    %v3365 = vpop.permute.xlu0 %3364
    %3366 = vrot.lane.b32.xlu0 %v439, 32
    %v3367 = vpop.permute.xlu0 %3366
    %v3369 = vsel %vm469, %v3365, 0
    %v3372 = vsel %vm469, %v3367, 0
    %3374 = vmatprep.subr.bf16.mxu0 0
    %3375 = vmatpush1.bf16.xpose.msra.mxu0 %v3372
    %3376 = vmatprep.subr.bf16.mxu0 0
    %3377 = vmatpush1.bf16.xpose.msra.mxu0 0
    %3378 = vmatprep.subr.bf16.mxu0 0
    %3379 = vmatpush1.bf16.xpose.msra.mxu0 0
    %3380 = vmatprep.subr.bf16.mxu0 0
    %3381 = vmatpush1.bf16.xpose.msra.mxu0 0
    %3382 = vmatprep.subr.bf16.mxu0 0
    %3383 = vmatpush1.bf16.xpose.msra.mxu0 0
    %3384 = vmatprep.subr.bf16.mxu0 0
    %3385 = vmatpush1.bf16.xpose.msra.mxu0 0
    %3386 = vmatprep.subr.bf16.mxu0 0
    %3387 = vmatpush1.bf16.xpose.msra.mxu0 0
    %3388 = vmatprep.subr.bf16.mxu0 0
    %3389 = vmatpush1.bf16.xpose.msra.mxu0 0
    %3390 = vmatprep.subr.bf16.mxu0 0
    %3391 = vmatpush1.bf16.xpose.msra.mxu0 0
    %3392 = vmatprep.subr.bf16.mxu0 0
    %3393 = vmatpush1.bf16.xpose.msra.mxu0 0
    %3394 = vmatprep.subr.bf16.mxu0 0
    %3395 = vmatpush1.bf16.xpose.msra.mxu0 0
    %3396 = vmatprep.subr.bf16.mxu0 0
    %3397 = vmatpush1.bf16.xpose.msra.mxu0 0
    %3398 = vmatprep.subr.bf16.mxu0 0
    %3399 = vmatpush1.bf16.xpose.msra.mxu0 0
    %3400 = vmatprep.subr.bf16.mxu0 0
    %3401 = vmatpush1.bf16.xpose.msra.mxu0 0
    %3402 = vmatprep.subr.bf16.mxu0 0
    %3403 = vmatpush1.bf16.xpose.msra.mxu0 0
    %3404 = vmatprep.subr.bf16.mxu0 0
    %3405 = vmatpush1.bf16.xpose.msra.mxu0 0
    %3406 = vmatprep.mubr.bf16.mxu0 0
    %3407 = vmatmul.mubr.bf16.gmra.mrb[0].mxu0 %v3369
    %v3408 = vpop.f32.mrb[0].mxu0
    %v3409 = vadd.f32 0.0, %v3408
    %v3410 = vpop.f32.mrb[0].mxu0
    %v3411 = vpop.f32.mrb[0].mxu0
    %v3412 = vpop.f32.mrb[0].mxu0
    %3413 = vdwg.mxu0
    %3414 = vrot.lane.b32.xlu0 %v432, 32
    %v3415 = vpop.permute.xlu0 %3414
    %3416 = vrot.lane.b32.xlu0 %v440, 32
    %v3417 = vpop.permute.xlu0 %3416
    %v3419 = vsel %vm469, %v3415, 0
    %v3422 = vsel %vm469, %v3417, 0
    %3424 = vmatprep.subr.bf16.mxu0 0
    %3425 = vmatpush1.bf16.xpose.msra.mxu0 %v3422
    %3426 = vmatprep.subr.bf16.mxu0 0
    %3427 = vmatpush1.bf16.xpose.msra.mxu0 0
    %3428 = vmatprep.subr.bf16.mxu0 0
    %3429 = vmatpush1.bf16.xpose.msra.mxu0 0
    %3430 = vmatprep.subr.bf16.mxu0 0
    %3431 = vmatpush1.bf16.xpose.msra.mxu0 0
    %3432 = vmatprep.subr.bf16.mxu0 0
    %3433 = vmatpush1.bf16.xpose.msra.mxu0 0
    %3434 = vmatprep.subr.bf16.mxu0 0
    %3435 = vmatpush1.bf16.xpose.msra.mxu0 0
    %3436 = vmatprep.subr.bf16.mxu0 0
    %3437 = vmatpush1.bf16.xpose.msra.mxu0 0
    %3438 = vmatprep.subr.bf16.mxu0 0
    %3439 = vmatpush1.bf16.xpose.msra.mxu0 0
    %3440 = vmatprep.subr.bf16.mxu0 0
    %3441 = vmatpush1.bf16.xpose.msra.mxu0 0
    %3442 = vmatprep.subr.bf16.mxu0 0
    %3443 = vmatpush1.bf16.xpose.msra.mxu0 0
    %3444 = vmatprep.subr.bf16.mxu0 0
    %3445 = vmatpush1.bf16.xpose.msra.mxu0 0
    %3446 = vmatprep.subr.bf16.mxu0 0
    %3447 = vmatpush1.bf16.xpose.msra.mxu0 0
    %3448 = vmatprep.subr.bf16.mxu0 0
    %3449 = vmatpush1.bf16.xpose.msra.mxu0 0
    %3450 = vmatprep.subr.bf16.mxu0 0
    %3451 = vmatpush1.bf16.xpose.msra.mxu0 0
    %3452 = vmatprep.subr.bf16.mxu0 0
    %3453 = vmatpush1.bf16.xpose.msra.mxu0 0
    %3454 = vmatprep.subr.bf16.mxu0 0
    %3455 = vmatpush1.bf16.xpose.msra.mxu0 0
    %3456 = vmatprep.mubr.bf16.mxu0 0
    %3457 = vmatmul.mubr.bf16.gmra.mrb[0].mxu0 %v3419
    %v3458 = vpop.f32.mrb[0].mxu0
    %v3459 = vadd.f32 0.0, %v3458
    %v3460 = vpop.f32.mrb[0].mxu0
    %v3461 = vpop.f32.mrb[0].mxu0
    %v3462 = vpop.f32.mrb[0].mxu0
    %3463 = vdwg.mxu0
    %3464 = vrot.lane.b32.xlu0 %v433, 32
    %v3465 = vpop.permute.xlu0 %3464
    %3466 = vrot.lane.b32.xlu0 %v441, 32
    %v3467 = vpop.permute.xlu0 %3466
    %v3469 = vsel %vm469, %v3465, 0
    %v3472 = vsel %vm469, %v3467, 0
    %3474 = vmatprep.subr.bf16.mxu0 0
    %3475 = vmatpush1.bf16.xpose.msra.mxu0 %v3472
    %3476 = vmatprep.subr.bf16.mxu0 0
    %3477 = vmatpush1.bf16.xpose.msra.mxu0 0
    %3478 = vmatprep.subr.bf16.mxu0 0
    %3479 = vmatpush1.bf16.xpose.msra.mxu0 0
    %3480 = vmatprep.subr.bf16.mxu0 0
    %3481 = vmatpush1.bf16.xpose.msra.mxu0 0
    %3482 = vmatprep.subr.bf16.mxu0 0
    %3483 = vmatpush1.bf16.xpose.msra.mxu0 0
    %3484 = vmatprep.subr.bf16.mxu0 0
    %3485 = vmatpush1.bf16.xpose.msra.mxu0 0
    %3486 = vmatprep.subr.bf16.mxu0 0
    %3487 = vmatpush1.bf16.xpose.msra.mxu0 0
    %3488 = vmatprep.subr.bf16.mxu0 0
    %3489 = vmatpush1.bf16.xpose.msra.mxu0 0
    %3490 = vmatprep.subr.bf16.mxu0 0
    %3491 = vmatpush1.bf16.xpose.msra.mxu0 0
    %3492 = vmatprep.subr.bf16.mxu0 0
    %3493 = vmatpush1.bf16.xpose.msra.mxu0 0
    %3494 = vmatprep.subr.bf16.mxu0 0
    %3495 = vmatpush1.bf16.xpose.msra.mxu0 0
    %3496 = vmatprep.subr.bf16.mxu0 0
    %3497 = vmatpush1.bf16.xpose.msra.mxu0 0
    %3498 = vmatprep.subr.bf16.mxu0 0
    %3499 = vmatpush1.bf16.xpose.msra.mxu0 0
    %3500 = vmatprep.subr.bf16.mxu0 0
    %3501 = vmatpush1.bf16.xpose.msra.mxu0 0
    %3502 = vmatprep.subr.bf16.mxu0 0
    %3503 = vmatpush1.bf16.xpose.msra.mxu0 0
    %3504 = vmatprep.subr.bf16.mxu0 0
    %3505 = vmatpush1.bf16.xpose.msra.mxu0 0
    %3506 = vmatprep.mubr.bf16.mxu0 0
    %3507 = vmatmul.mubr.bf16.gmra.mrb[0].mxu0 %v3469
    %v3508 = vpop.f32.mrb[0].mxu0
    %v3509 = vadd.f32 0.0, %v3508
    %v3510 = vpop.f32.mrb[0].mxu0
    %v3511 = vpop.f32.mrb[0].mxu0
    %v3512 = vpop.f32.mrb[0].mxu0
    %3513 = vdwg.mxu0
    %3514 = vrot.lane.b32.xlu0 %v434, 32
    %v3515 = vpop.permute.xlu0 %3514
    %3516 = vrot.lane.b32.xlu0 %v442, 32
    %v3517 = vpop.permute.xlu0 %3516
    %v3519 = vsel %vm469, %v3515, 0
    %v3522 = vsel %vm469, %v3517, 0
    %3524 = vmatprep.subr.bf16.mxu0 0
    %3525 = vmatpush1.bf16.xpose.msra.mxu0 %v3522
    %3526 = vmatprep.subr.bf16.mxu0 0
    %3527 = vmatpush1.bf16.xpose.msra.mxu0 0
    %3528 = vmatprep.subr.bf16.mxu0 0
    %3529 = vmatpush1.bf16.xpose.msra.mxu0 0
    %3530 = vmatprep.subr.bf16.mxu0 0
    %3531 = vmatpush1.bf16.xpose.msra.mxu0 0
    %3532 = vmatprep.subr.bf16.mxu0 0
    %3533 = vmatpush1.bf16.xpose.msra.mxu0 0
    %3534 = vmatprep.subr.bf16.mxu0 0
    %3535 = vmatpush1.bf16.xpose.msra.mxu0 0
    %3536 = vmatprep.subr.bf16.mxu0 0
    %3537 = vmatpush1.bf16.xpose.msra.mxu0 0
    %3538 = vmatprep.subr.bf16.mxu0 0
    %3539 = vmatpush1.bf16.xpose.msra.mxu0 0
    %3540 = vmatprep.subr.bf16.mxu0 0
    %3541 = vmatpush1.bf16.xpose.msra.mxu0 0
    %3542 = vmatprep.subr.bf16.mxu0 0
    %3543 = vmatpush1.bf16.xpose.msra.mxu0 0
    %3544 = vmatprep.subr.bf16.mxu0 0
    %3545 = vmatpush1.bf16.xpose.msra.mxu0 0
    %3546 = vmatprep.subr.bf16.mxu0 0
    %3547 = vmatpush1.bf16.xpose.msra.mxu0 0
    %3548 = vmatprep.subr.bf16.mxu0 0
    %3549 = vmatpush1.bf16.xpose.msra.mxu0 0
    %3550 = vmatprep.subr.bf16.mxu0 0
    %3551 = vmatpush1.bf16.xpose.msra.mxu0 0
    %3552 = vmatprep.subr.bf16.mxu0 0
    %3553 = vmatpush1.bf16.xpose.msra.mxu0 0
    %3554 = vmatprep.subr.bf16.mxu0 0
    %3555 = vmatpush1.bf16.xpose.msra.mxu0 0
    %3556 = vmatprep.mubr.bf16.mxu0 0
    %3557 = vmatmul.mubr.bf16.gmra.mrb[0].mxu0 %v3519
    %v3558 = vpop.f32.mrb[0].mxu0
    %v3559 = vadd.f32 0.0, %v3558
    %v3560 = vpop.f32.mrb[0].mxu0
    %v3561 = vpop.f32.mrb[0].mxu0
    %v3562 = vpop.f32.mrb[0].mxu0
    %3563 = vdwg.mxu0
    %3564 = vrot.lane.b32.xlu0 %v435, 32
    %v3565 = vpop.permute.xlu0 %3564
    %3566 = vrot.lane.b32.xlu0 %v443, 32
    %v3567 = vpop.permute.xlu0 %3566
    %v3569 = vsel %vm469, %v3565, 0
    %v3572 = vsel %vm469, %v3567, 0
    %3574 = vmatprep.subr.bf16.mxu0 0
    %3575 = vmatpush1.bf16.xpose.msra.mxu0 %v3572
    %3576 = vmatprep.subr.bf16.mxu0 0
    %3577 = vmatpush1.bf16.xpose.msra.mxu0 0
    %3578 = vmatprep.subr.bf16.mxu0 0
    %3579 = vmatpush1.bf16.xpose.msra.mxu0 0
    %3580 = vmatprep.subr.bf16.mxu0 0
    %3581 = vmatpush1.bf16.xpose.msra.mxu0 0
    %3582 = vmatprep.subr.bf16.mxu0 0
    %3583 = vmatpush1.bf16.xpose.msra.mxu0 0
    %3584 = vmatprep.subr.bf16.mxu0 0
    %3585 = vmatpush1.bf16.xpose.msra.mxu0 0
    %3586 = vmatprep.subr.bf16.mxu0 0
    %3587 = vmatpush1.bf16.xpose.msra.mxu0 0
    %3588 = vmatprep.subr.bf16.mxu0 0
    %3589 = vmatpush1.bf16.xpose.msra.mxu0 0
    %3590 = vmatprep.subr.bf16.mxu0 0
    %3591 = vmatpush1.bf16.xpose.msra.mxu0 0
    %3592 = vmatprep.subr.bf16.mxu0 0
    %3593 = vmatpush1.bf16.xpose.msra.mxu0 0
    %3594 = vmatprep.subr.bf16.mxu0 0
    %3595 = vmatpush1.bf16.xpose.msra.mxu0 0
    %3596 = vmatprep.subr.bf16.mxu0 0
    %3597 = vmatpush1.bf16.xpose.msra.mxu0 0
    %3598 = vmatprep.subr.bf16.mxu0 0
    %3599 = vmatpush1.bf16.xpose.msra.mxu0 0
    %3600 = vmatprep.subr.bf16.mxu0 0
    %3601 = vmatpush1.bf16.xpose.msra.mxu0 0
    %3602 = vmatprep.subr.bf16.mxu0 0
    %3603 = vmatpush1.bf16.xpose.msra.mxu0 0
    %3604 = vmatprep.subr.bf16.mxu0 0
    %3605 = vmatpush1.bf16.xpose.msra.mxu0 0
    %3606 = vmatprep.mubr.bf16.mxu0 0
    %3607 = vmatmul.mubr.bf16.gmra.mrb[0].mxu0 %v3569
    %v3608 = vpop.f32.mrb[0].mxu0
    %v3609 = vadd.f32 0.0, %v3608
    %v3610 = vpop.f32.mrb[0].mxu0
    %v3611 = vpop.f32.mrb[0].mxu0
    %v3612 = vpop.f32.mrb[0].mxu0
    %3613 = vdwg.mxu0
    %3614 = vrot.lane.b32.xlu0 %v436, 32
    %v3615 = vpop.permute.xlu0 %3614
    %3616 = vrot.lane.b32.xlu0 %v444, 32
    %v3617 = vpop.permute.xlu0 %3616
    %v3619 = vsel %vm469, %v3615, 0
    %v3622 = vsel %vm469, %v3617, 0
    %3624 = vmatprep.subr.bf16.mxu0 0
    %3625 = vmatpush1.bf16.xpose.msra.mxu0 %v3622
    %3626 = vmatprep.subr.bf16.mxu0 0
    %3627 = vmatpush1.bf16.xpose.msra.mxu0 0
    %3628 = vmatprep.subr.bf16.mxu0 0
    %3629 = vmatpush1.bf16.xpose.msra.mxu0 0
    %3630 = vmatprep.subr.bf16.mxu0 0
    %3631 = vmatpush1.bf16.xpose.msra.mxu0 0
    %3632 = vmatprep.subr.bf16.mxu0 0
    %3633 = vmatpush1.bf16.xpose.msra.mxu0 0
    %3634 = vmatprep.subr.bf16.mxu0 0
    %3635 = vmatpush1.bf16.xpose.msra.mxu0 0
    %3636 = vmatprep.subr.bf16.mxu0 0
    %3637 = vmatpush1.bf16.xpose.msra.mxu0 0
    %3638 = vmatprep.subr.bf16.mxu0 0
    %3639 = vmatpush1.bf16.xpose.msra.mxu0 0
    %3640 = vmatprep.subr.bf16.mxu0 0
    %3641 = vmatpush1.bf16.xpose.msra.mxu0 0
    %3642 = vmatprep.subr.bf16.mxu0 0
    %3643 = vmatpush1.bf16.xpose.msra.mxu0 0
    %3644 = vmatprep.subr.bf16.mxu0 0
    %3645 = vmatpush1.bf16.xpose.msra.mxu0 0
    %3646 = vmatprep.subr.bf16.mxu0 0
    %3647 = vmatpush1.bf16.xpose.msra.mxu0 0
    %3648 = vmatprep.subr.bf16.mxu0 0
    %3649 = vmatpush1.bf16.xpose.msra.mxu0 0
    %3650 = vmatprep.subr.bf16.mxu0 0
    %3651 = vmatpush1.bf16.xpose.msra.mxu0 0
    %3652 = vmatprep.subr.bf16.mxu0 0
    %3653 = vmatpush1.bf16.xpose.msra.mxu0 0
    %3654 = vmatprep.subr.bf16.mxu0 0
    %3655 = vmatpush1.bf16.xpose.msra.mxu0 0
    %3656 = vmatprep.mubr.bf16.mxu0 0
    %3657 = vmatmul.mubr.bf16.gmra.mrb[0].mxu0 %v3619
    %v3658 = vpop.f32.mrb[0].mxu0
    %v3659 = vadd.f32 0.0, %v3658
    %v3660 = vpop.f32.mrb[0].mxu0
    %v3661 = vpop.f32.mrb[0].mxu0
    %v3662 = vpop.f32.mrb[0].mxu0
    %3663 = vdwg.mxu0
    %v3664 = vmul.f32 %v3309, 0.17677669
    %v3665 = vmul.f32 %v3359, 0.17677669
    %v3666 = vmul.f32 %v3409, 0.17677669
    %v3667 = vmul.f32 %v3459, 0.17677669
    %v3668 = vmul.f32 %v3509, 0.17677669
    %v3669 = vmul.f32 %v3559, 0.17677669
    %v3670 = vmul.f32 %v3609, 0.17677669
    %v3671 = vmul.f32 %v3659, 0.17677669
    %v3672 = vadd.f32 %v3664, %v923
    %v3673 = vadd.f32 %v3665, %v929
    %v3674 = vadd.f32 %v3666, %v935
    %v3675 = vadd.f32 %v3667, %v941
    %v3676 = vadd.f32 %v3668, %v947
    %v3677 = vadd.f32 %v3669, %v953
    %v3678 = vadd.f32 %v3670, %v959
    %v3679 = vadd.f32 %v3671, %v965
    %v3680 = vsel %vm982, %v3672, -inf
    %3681 = vmax.xlane.f32.xlu0 %v3680
    %v3682 = vpop.xlane.xlu0 %3681
    %v3683 = vsel %vm982, %v3673, -inf
    %3684 = vmax.xlane.f32.xlu0 %v3683
    %v3685 = vpop.xlane.xlu0 %3684
    %v3686 = vsel %vm982, %v3674, -inf
    %3687 = vmax.xlane.f32.xlu0 %v3686
    %v3688 = vpop.xlane.xlu0 %3687
    %v3689 = vsel %vm982, %v3675, -inf
    %3690 = vmax.xlane.f32.xlu0 %v3689
    %v3691 = vpop.xlane.xlu0 %3690
    %v3692 = vsel %vm982, %v3676, -inf
    %3693 = vmax.xlane.f32.xlu0 %v3692
    %v3694 = vpop.xlane.xlu0 %3693
    %v3695 = vsel %vm982, %v3677, -inf
    %3696 = vmax.xlane.f32.xlu0 %v3695
    %v3697 = vpop.xlane.xlu0 %3696
    %v3698 = vsel %vm982, %v3678, -inf
    %3699 = vmax.xlane.f32.xlu0 %v3698
    %v3700 = vpop.xlane.xlu0 %3699
    %v3701 = vsel %vm982, %v3679, -inf
    %3702 = vmax.xlane.f32.xlu0 %v3701
    %v3703 = vpop.xlane.xlu0 %3702
    %v3704 = vsub.f32 %v3672, %v3682
    %v3705 = vsub.f32 %v3673, %v3685
    %v3706 = vsub.f32 %v3674, %v3688
    %v3707 = vsub.f32 %v3675, %v3691
    %v3708 = vsub.f32 %v3676, %v3694
    %v3709 = vsub.f32 %v3677, %v3697
    %v3710 = vsub.f32 %v3678, %v3700
    %v3711 = vsub.f32 %v3679, %v3703
    %v3712 = vmul.f32 %v3704, 1.442695
    %v3713 = vpow.pop %v3712
    %v3714 = vmul.f32 %v3705, 1.442695
    %v3715 = vpow.pop %v3714
    %v3716 = vmul.f32 %v3706, 1.442695
    %v3717 = vpow.pop %v3716
    %v3718 = vmul.f32 %v3707, 1.442695
    %v3719 = vpow.pop %v3718
    %v3720 = vmul.f32 %v3708, 1.442695
    %v3721 = vpow.pop %v3720
    %v3722 = vmul.f32 %v3709, 1.442695
    %v3723 = vpow.pop %v3722
    %v3724 = vmul.f32 %v3710, 1.442695
    %v3725 = vpow.pop %v3724
    %v3726 = vmul.f32 %v3711, 1.442695
    %v3727 = vpow.pop %v3726
    %v3728 = vsel %vm982, %v3713, 0.0
    %3729 = vadd.xlane.f32.xlu0 %v3728
    %v3730 = vpop.xlane.xlu0 %3729
    %v3731 = vsel %vm982, %v3715, 0.0
    %3732 = vadd.xlane.f32.xlu0 %v3731
    %v3733 = vpop.xlane.xlu0 %3732
    %v3734 = vsel %vm982, %v3717, 0.0
    %3735 = vadd.xlane.f32.xlu0 %v3734
    %v3736 = vpop.xlane.xlu0 %3735
    %v3737 = vsel %vm982, %v3719, 0.0
    %3738 = vadd.xlane.f32.xlu0 %v3737
    %v3739 = vpop.xlane.xlu0 %3738
    %v3740 = vsel %vm982, %v3721, 0.0
    %3741 = vadd.xlane.f32.xlu0 %v3740
    %v3742 = vpop.xlane.xlu0 %3741
    %v3743 = vsel %vm982, %v3723, 0.0
    %3744 = vadd.xlane.f32.xlu0 %v3743
    %v3745 = vpop.xlane.xlu0 %3744
    %v3746 = vsel %vm982, %v3725, 0.0
    %3747 = vadd.xlane.f32.xlu0 %v3746
    %v3748 = vpop.xlane.xlu0 %3747
    %v3749 = vsel %vm982, %v3727, 0.0
    %3750 = vadd.xlane.f32.xlu0 %v3749
    %v3751 = vpop.xlane.xlu0 %3750
    %v3752 = vrcp.pop %v3730
    %v3753 = vrcp.pop %v3733
    %v3754 = vrcp.pop %v3736
    %v3755 = vrcp.pop %v3739
    %v3756 = vrcp.pop %v3742
    %v3757 = vrcp.pop %v3745
    %v3758 = vrcp.pop %v3748
    %v3759 = vrcp.pop %v3751
    %v3760 = vmul.f32 %v3713, %v3752
    %v3761 = vmul.f32 %v3715, %v3753
    %v3762 = vmul.f32 %v3717, %v3754
    %v3763 = vmul.f32 %v3719, %v3755
    %v3764 = vmul.f32 %v3721, %v3756
    %v3765 = vmul.f32 %v3723, %v3757
    %v3766 = vmul.f32 %v3725, %v3758
    %v3767 = vmul.f32 %v3727, %v3759
    %v3768 = vpack.c.bf16 %v3760, %v3760
    %v3769 = vpack.c.bf16 %v3761, %v3761
    %v3770 = vpack.c.bf16 %v3762, %v3762
    %v3771 = vpack.c.bf16 %v3763, %v3763
    %v3772 = vpack.c.bf16 %v3764, %v3764
    %v3773 = vpack.c.bf16 %v3765, %v3765
    %v3774 = vpack.c.bf16 %v3766, %v3766
    %v3775 = vpack.c.bf16 %v3767, %v3767
    %3776 = vrot.lane.b32.xlu0 %v445, 32
    %v3777 = vpop.permute.xlu0 %3776
    %v3779 = vsel %vm982, %v3768, 0
    %v3782 = vsel %vm1082, %v3777, 0
    %3784 = vmatprep.subr.bf16.mxu0 0
    %3785 = vmatpush1.bf16.msra.mxu0 %v3782
    %3786 = vmatprep.subr.bf16.mxu0 0
    %3787 = vmatpush1.bf16.msra.mxu0 0
    %3788 = vmatprep.subr.bf16.mxu0 0
    %3789 = vmatpush1.bf16.msra.mxu0 0
    %3790 = vmatprep.subr.bf16.mxu0 0
    %3791 = vmatpush1.bf16.msra.mxu0 0
    %3792 = vmatprep.subr.bf16.mxu0 0
    %3793 = vmatpush1.bf16.msra.mxu0 0
    %3794 = vmatprep.subr.bf16.mxu0 0
    %3795 = vmatpush1.bf16.msra.mxu0 0
    %3796 = vmatprep.subr.bf16.mxu0 0
    %3797 = vmatpush1.bf16.msra.mxu0 0
    %3798 = vmatprep.subr.bf16.mxu0 0
    %3799 = vmatpush1.bf16.msra.mxu0 0
    %3800 = vmatprep.subr.bf16.mxu0 0
    %3801 = vmatpush1.bf16.msra.mxu0 0
    %3802 = vmatprep.subr.bf16.mxu0 0
    %3803 = vmatpush1.bf16.msra.mxu0 0
    %3804 = vmatprep.subr.bf16.mxu0 0
    %3805 = vmatpush1.bf16.msra.mxu0 0
    %3806 = vmatprep.subr.bf16.mxu0 0
    %3807 = vmatpush1.bf16.msra.mxu0 0
    %3808 = vmatprep.subr.bf16.mxu0 0
    %3809 = vmatpush1.bf16.msra.mxu0 0
    %3810 = vmatprep.subr.bf16.mxu0 0
    %3811 = vmatpush1.bf16.msra.mxu0 0
    %3812 = vmatprep.subr.bf16.mxu0 0
    %3813 = vmatpush1.bf16.msra.mxu0 0
    %3814 = vmatprep.subr.bf16.mxu0 0
    %3815 = vmatpush1.bf16.msra.mxu0 0
    %3816 = vmatprep.mubr.bf16.mxu0 0
    %3817 = vmatmul.mubr.bf16.gmra.mrb[0].mxu0 %v3779
    %v3818 = vpop.f32.mrb[0].mxu0
    %v3819 = vadd.f32 0.0, %v3818
    %v3820 = vpop.f32.mrb[0].mxu0
    %v3821 = vpop.f32.mrb[0].mxu0
    %v3822 = vpop.f32.mrb[0].mxu0
    %3823 = vdwg.mxu0
    %3824 = vrot.lane.b32.xlu0 %v446, 32
    %v3825 = vpop.permute.xlu0 %3824
    %v3827 = vsel %vm982, %v3769, 0
    %v3830 = vsel %vm1082, %v3825, 0
    %3832 = vmatprep.subr.bf16.mxu0 0
    %3833 = vmatpush1.bf16.msra.mxu0 %v3830
    %3834 = vmatprep.subr.bf16.mxu0 0
    %3835 = vmatpush1.bf16.msra.mxu0 0
    %3836 = vmatprep.subr.bf16.mxu0 0
    %3837 = vmatpush1.bf16.msra.mxu0 0
    %3838 = vmatprep.subr.bf16.mxu0 0
    %3839 = vmatpush1.bf16.msra.mxu0 0
    %3840 = vmatprep.subr.bf16.mxu0 0
    %3841 = vmatpush1.bf16.msra.mxu0 0
    %3842 = vmatprep.subr.bf16.mxu0 0
    %3843 = vmatpush1.bf16.msra.mxu0 0
    %3844 = vmatprep.subr.bf16.mxu0 0
    %3845 = vmatpush1.bf16.msra.mxu0 0
    %3846 = vmatprep.subr.bf16.mxu0 0
    %3847 = vmatpush1.bf16.msra.mxu0 0
    %3848 = vmatprep.subr.bf16.mxu0 0
    %3849 = vmatpush1.bf16.msra.mxu0 0
    %3850 = vmatprep.subr.bf16.mxu0 0
    %3851 = vmatpush1.bf16.msra.mxu0 0
    %3852 = vmatprep.subr.bf16.mxu0 0
    %3853 = vmatpush1.bf16.msra.mxu0 0
    %3854 = vmatprep.subr.bf16.mxu0 0
    %3855 = vmatpush1.bf16.msra.mxu0 0
    %3856 = vmatprep.subr.bf16.mxu0 0
    %3857 = vmatpush1.bf16.msra.mxu0 0
    %3858 = vmatprep.subr.bf16.mxu0 0
    %3859 = vmatpush1.bf16.msra.mxu0 0
    %3860 = vmatprep.subr.bf16.mxu0 0
    %3861 = vmatpush1.bf16.msra.mxu0 0
    %3862 = vmatprep.subr.bf16.mxu0 0
    %3863 = vmatpush1.bf16.msra.mxu0 0
    %3864 = vmatprep.mubr.bf16.mxu0 0
    %3865 = vmatmul.mubr.bf16.gmra.mrb[0].mxu0 %v3827
    %v3866 = vpop.f32.mrb[0].mxu0
    %v3867 = vadd.f32 0.0, %v3866
    %v3868 = vpop.f32.mrb[0].mxu0
    %v3869 = vpop.f32.mrb[0].mxu0
    %v3870 = vpop.f32.mrb[0].mxu0
    %3871 = vdwg.mxu0
    %3872 = vrot.lane.b32.xlu0 %v447, 32
    %v3873 = vpop.permute.xlu0 %3872
    %v3875 = vsel %vm982, %v3770, 0
    %v3878 = vsel %vm1082, %v3873, 0
    %3880 = vmatprep.subr.bf16.mxu0 0
    %3881 = vmatpush1.bf16.msra.mxu0 %v3878
    %3882 = vmatprep.subr.bf16.mxu0 0
    %3883 = vmatpush1.bf16.msra.mxu0 0
    %3884 = vmatprep.subr.bf16.mxu0 0
    %3885 = vmatpush1.bf16.msra.mxu0 0
    %3886 = vmatprep.subr.bf16.mxu0 0
    %3887 = vmatpush1.bf16.msra.mxu0 0
    %3888 = vmatprep.subr.bf16.mxu0 0
    %3889 = vmatpush1.bf16.msra.mxu0 0
    %3890 = vmatprep.subr.bf16.mxu0 0
    %3891 = vmatpush1.bf16.msra.mxu0 0
    %3892 = vmatprep.subr.bf16.mxu0 0
    %3893 = vmatpush1.bf16.msra.mxu0 0
    %3894 = vmatprep.subr.bf16.mxu0 0
    %3895 = vmatpush1.bf16.msra.mxu0 0
    %3896 = vmatprep.subr.bf16.mxu0 0
    %3897 = vmatpush1.bf16.msra.mxu0 0
    %3898 = vmatprep.subr.bf16.mxu0 0
    %3899 = vmatpush1.bf16.msra.mxu0 0
    %3900 = vmatprep.subr.bf16.mxu0 0
    %3901 = vmatpush1.bf16.msra.mxu0 0
    %3902 = vmatprep.subr.bf16.mxu0 0
    %3903 = vmatpush1.bf16.msra.mxu0 0
    %3904 = vmatprep.subr.bf16.mxu0 0
    %3905 = vmatpush1.bf16.msra.mxu0 0
    %3906 = vmatprep.subr.bf16.mxu0 0
    %3907 = vmatpush1.bf16.msra.mxu0 0
    %3908 = vmatprep.subr.bf16.mxu0 0
    %3909 = vmatpush1.bf16.msra.mxu0 0
    %3910 = vmatprep.subr.bf16.mxu0 0
    %3911 = vmatpush1.bf16.msra.mxu0 0
    %3912 = vmatprep.mubr.bf16.mxu0 0
    %3913 = vmatmul.mubr.bf16.gmra.mrb[0].mxu0 %v3875
    %v3914 = vpop.f32.mrb[0].mxu0
    %v3915 = vadd.f32 0.0, %v3914
    %v3916 = vpop.f32.mrb[0].mxu0
    %v3917 = vpop.f32.mrb[0].mxu0
    %v3918 = vpop.f32.mrb[0].mxu0
    %3919 = vdwg.mxu0
    %3920 = vrot.lane.b32.xlu0 %v448, 32
    %v3921 = vpop.permute.xlu0 %3920
    %v3923 = vsel %vm982, %v3771, 0
    %v3926 = vsel %vm1082, %v3921, 0
    %3928 = vmatprep.subr.bf16.mxu0 0
    %3929 = vmatpush1.bf16.msra.mxu0 %v3926
    %3930 = vmatprep.subr.bf16.mxu0 0
    %3931 = vmatpush1.bf16.msra.mxu0 0
    %3932 = vmatprep.subr.bf16.mxu0 0
    %3933 = vmatpush1.bf16.msra.mxu0 0
    %3934 = vmatprep.subr.bf16.mxu0 0
    %3935 = vmatpush1.bf16.msra.mxu0 0
    %3936 = vmatprep.subr.bf16.mxu0 0
    %3937 = vmatpush1.bf16.msra.mxu0 0
    %3938 = vmatprep.subr.bf16.mxu0 0
    %3939 = vmatpush1.bf16.msra.mxu0 0
    %3940 = vmatprep.subr.bf16.mxu0 0
    %3941 = vmatpush1.bf16.msra.mxu0 0
    %3942 = vmatprep.subr.bf16.mxu0 0
    %3943 = vmatpush1.bf16.msra.mxu0 0
    %3944 = vmatprep.subr.bf16.mxu0 0
    %3945 = vmatpush1.bf16.msra.mxu0 0
    %3946 = vmatprep.subr.bf16.mxu0 0
    %3947 = vmatpush1.bf16.msra.mxu0 0
    %3948 = vmatprep.subr.bf16.mxu0 0
    %3949 = vmatpush1.bf16.msra.mxu0 0
    %3950 = vmatprep.subr.bf16.mxu0 0
    %3951 = vmatpush1.bf16.msra.mxu0 0
    %3952 = vmatprep.subr.bf16.mxu0 0
    %3953 = vmatpush1.bf16.msra.mxu0 0
    %3954 = vmatprep.subr.bf16.mxu0 0
    %3955 = vmatpush1.bf16.msra.mxu0 0
    %3956 = vmatprep.subr.bf16.mxu0 0
    %3957 = vmatpush1.bf16.msra.mxu0 0
    %3958 = vmatprep.subr.bf16.mxu0 0
    %3959 = vmatpush1.bf16.msra.mxu0 0
    %3960 = vmatprep.mubr.bf16.mxu0 0
    %3961 = vmatmul.mubr.bf16.gmra.mrb[0].mxu0 %v3923
    %v3962 = vpop.f32.mrb[0].mxu0
    %v3963 = vadd.f32 0.0, %v3962
    %v3964 = vpop.f32.mrb[0].mxu0
    %v3965 = vpop.f32.mrb[0].mxu0
    %v3966 = vpop.f32.mrb[0].mxu0
    %3967 = vdwg.mxu0
    %3968 = vrot.lane.b32.xlu0 %v449, 32
    %v3969 = vpop.permute.xlu0 %3968
    %v3971 = vsel %vm982, %v3772, 0
    %v3974 = vsel %vm1082, %v3969, 0
    %3976 = vmatprep.subr.bf16.mxu0 0
    %3977 = vmatpush1.bf16.msra.mxu0 %v3974
    %3978 = vmatprep.subr.bf16.mxu0 0
    %3979 = vmatpush1.bf16.msra.mxu0 0
    %3980 = vmatprep.subr.bf16.mxu0 0
    %3981 = vmatpush1.bf16.msra.mxu0 0
    %3982 = vmatprep.subr.bf16.mxu0 0
    %3983 = vmatpush1.bf16.msra.mxu0 0
    %3984 = vmatprep.subr.bf16.mxu0 0
    %3985 = vmatpush1.bf16.msra.mxu0 0
    %3986 = vmatprep.subr.bf16.mxu0 0
    %3987 = vmatpush1.bf16.msra.mxu0 0
    %3988 = vmatprep.subr.bf16.mxu0 0
    %3989 = vmatpush1.bf16.msra.mxu0 0
    %3990 = vmatprep.subr.bf16.mxu0 0
    %3991 = vmatpush1.bf16.msra.mxu0 0
    %3992 = vmatprep.subr.bf16.mxu0 0
    %3993 = vmatpush1.bf16.msra.mxu0 0
    %3994 = vmatprep.subr.bf16.mxu0 0
    %3995 = vmatpush1.bf16.msra.mxu0 0
    %3996 = vmatprep.subr.bf16.mxu0 0
    %3997 = vmatpush1.bf16.msra.mxu0 0
    %3998 = vmatprep.subr.bf16.mxu0 0
    %3999 = vmatpush1.bf16.msra.mxu0 0
    %4000 = vmatprep.subr.bf16.mxu0 0
    %4001 = vmatpush1.bf16.msra.mxu0 0
    %4002 = vmatprep.subr.bf16.mxu0 0
    %4003 = vmatpush1.bf16.msra.mxu0 0
    %4004 = vmatprep.subr.bf16.mxu0 0
    %4005 = vmatpush1.bf16.msra.mxu0 0
    %4006 = vmatprep.subr.bf16.mxu0 0
    %4007 = vmatpush1.bf16.msra.mxu0 0
    %4008 = vmatprep.mubr.bf16.mxu0 0
    %4009 = vmatmul.mubr.bf16.gmra.mrb[0].mxu0 %v3971
    %v4010 = vpop.f32.mrb[0].mxu0
    %v4011 = vadd.f32 0.0, %v4010
    %v4012 = vpop.f32.mrb[0].mxu0
    %v4013 = vpop.f32.mrb[0].mxu0
    %v4014 = vpop.f32.mrb[0].mxu0
    %4015 = vdwg.mxu0
    %4016 = vrot.lane.b32.xlu0 %v450, 32
    %v4017 = vpop.permute.xlu0 %4016
    %v4019 = vsel %vm982, %v3773, 0
    %v4022 = vsel %vm1082, %v4017, 0
    %4024 = vmatprep.subr.bf16.mxu0 0
    %4025 = vmatpush1.bf16.msra.mxu0 %v4022
    %4026 = vmatprep.subr.bf16.mxu0 0
    %4027 = vmatpush1.bf16.msra.mxu0 0
    %4028 = vmatprep.subr.bf16.mxu0 0
    %4029 = vmatpush1.bf16.msra.mxu0 0
    %4030 = vmatprep.subr.bf16.mxu0 0
    %4031 = vmatpush1.bf16.msra.mxu0 0
    %4032 = vmatprep.subr.bf16.mxu0 0
    %4033 = vmatpush1.bf16.msra.mxu0 0
    %4034 = vmatprep.subr.bf16.mxu0 0
    %4035 = vmatpush1.bf16.msra.mxu0 0
    %4036 = vmatprep.subr.bf16.mxu0 0
    %4037 = vmatpush1.bf16.msra.mxu0 0
    %4038 = vmatprep.subr.bf16.mxu0 0
    %4039 = vmatpush1.bf16.msra.mxu0 0
    %4040 = vmatprep.subr.bf16.mxu0 0
    %4041 = vmatpush1.bf16.msra.mxu0 0
    %4042 = vmatprep.subr.bf16.mxu0 0
    %4043 = vmatpush1.bf16.msra.mxu0 0
    %4044 = vmatprep.subr.bf16.mxu0 0
    %4045 = vmatpush1.bf16.msra.mxu0 0
    %4046 = vmatprep.subr.bf16.mxu0 0
    %4047 = vmatpush1.bf16.msra.mxu0 0
    %4048 = vmatprep.subr.bf16.mxu0 0
    %4049 = vmatpush1.bf16.msra.mxu0 0
    %4050 = vmatprep.subr.bf16.mxu0 0
    %4051 = vmatpush1.bf16.msra.mxu0 0
    %4052 = vmatprep.subr.bf16.mxu0 0
    %4053 = vmatpush1.bf16.msra.mxu0 0
    %4054 = vmatprep.subr.bf16.mxu0 0
    %4055 = vmatpush1.bf16.msra.mxu0 0
    %4056 = vmatprep.mubr.bf16.mxu0 0
    %4057 = vmatmul.mubr.bf16.gmra.mrb[0].mxu0 %v4019
    %v4058 = vpop.f32.mrb[0].mxu0
    %v4059 = vadd.f32 0.0, %v4058
    %v4060 = vpop.f32.mrb[0].mxu0
    %v4061 = vpop.f32.mrb[0].mxu0
    %v4062 = vpop.f32.mrb[0].mxu0
    %4063 = vdwg.mxu0
    %4064 = vrot.lane.b32.xlu0 %v451, 32
    %v4065 = vpop.permute.xlu0 %4064
    %v4067 = vsel %vm982, %v3774, 0
    %v4070 = vsel %vm1082, %v4065, 0
    %4072 = vmatprep.subr.bf16.mxu0 0
    %4073 = vmatpush1.bf16.msra.mxu0 %v4070
    %4074 = vmatprep.subr.bf16.mxu0 0
    %4075 = vmatpush1.bf16.msra.mxu0 0
    %4076 = vmatprep.subr.bf16.mxu0 0
    %4077 = vmatpush1.bf16.msra.mxu0 0
    %4078 = vmatprep.subr.bf16.mxu0 0
    %4079 = vmatpush1.bf16.msra.mxu0 0
    %4080 = vmatprep.subr.bf16.mxu0 0
    %4081 = vmatpush1.bf16.msra.mxu0 0
    %4082 = vmatprep.subr.bf16.mxu0 0
    %4083 = vmatpush1.bf16.msra.mxu0 0
    %4084 = vmatprep.subr.bf16.mxu0 0
    %4085 = vmatpush1.bf16.msra.mxu0 0
    %4086 = vmatprep.subr.bf16.mxu0 0
    %4087 = vmatpush1.bf16.msra.mxu0 0
    %4088 = vmatprep.subr.bf16.mxu0 0
    %4089 = vmatpush1.bf16.msra.mxu0 0
    %4090 = vmatprep.subr.bf16.mxu0 0
    %4091 = vmatpush1.bf16.msra.mxu0 0
    %4092 = vmatprep.subr.bf16.mxu0 0
    %4093 = vmatpush1.bf16.msra.mxu0 0
    %4094 = vmatprep.subr.bf16.mxu0 0
    %4095 = vmatpush1.bf16.msra.mxu0 0
    %4096 = vmatprep.subr.bf16.mxu0 0
    %4097 = vmatpush1.bf16.msra.mxu0 0
    %4098 = vmatprep.subr.bf16.mxu0 0
    %4099 = vmatpush1.bf16.msra.mxu0 0
    %4100 = vmatprep.subr.bf16.mxu0 0
    %4101 = vmatpush1.bf16.msra.mxu0 0
    %4102 = vmatprep.subr.bf16.mxu0 0
    %4103 = vmatpush1.bf16.msra.mxu0 0
    %4104 = vmatprep.mubr.bf16.mxu0 0
    %4105 = vmatmul.mubr.bf16.gmra.mrb[0].mxu0 %v4067
    %v4106 = vpop.f32.mrb[0].mxu0
    %v4107 = vadd.f32 0.0, %v4106
    %v4108 = vpop.f32.mrb[0].mxu0
    %v4109 = vpop.f32.mrb[0].mxu0
    %v4110 = vpop.f32.mrb[0].mxu0
    %4111 = vdwg.mxu0
    %4112 = vrot.lane.b32.xlu0 %v452, 32
    %v4113 = vpop.permute.xlu0 %4112
    %v4115 = vsel %vm982, %v3775, 0
    %v4118 = vsel %vm1082, %v4113, 0
    %4120 = vmatprep.subr.bf16.mxu0 0
    %4121 = vmatpush1.bf16.msra.mxu0 %v4118
    %4122 = vmatprep.subr.bf16.mxu0 0
    %4123 = vmatpush1.bf16.msra.mxu0 0
    %4124 = vmatprep.subr.bf16.mxu0 0
    %4125 = vmatpush1.bf16.msra.mxu0 0
    %4126 = vmatprep.subr.bf16.mxu0 0
    %4127 = vmatpush1.bf16.msra.mxu0 0
    %4128 = vmatprep.subr.bf16.mxu0 0
    %4129 = vmatpush1.bf16.msra.mxu0 0
    %4130 = vmatprep.subr.bf16.mxu0 0
    %4131 = vmatpush1.bf16.msra.mxu0 0
    %4132 = vmatprep.subr.bf16.mxu0 0
    %4133 = vmatpush1.bf16.msra.mxu0 0
    %4134 = vmatprep.subr.bf16.mxu0 0
    %4135 = vmatpush1.bf16.msra.mxu0 0
    %4136 = vmatprep.subr.bf16.mxu0 0
    %4137 = vmatpush1.bf16.msra.mxu0 0
    %4138 = vmatprep.subr.bf16.mxu0 0
    %4139 = vmatpush1.bf16.msra.mxu0 0
    %4140 = vmatprep.subr.bf16.mxu0 0
    %4141 = vmatpush1.bf16.msra.mxu0 0
    %4142 = vmatprep.subr.bf16.mxu0 0
    %4143 = vmatpush1.bf16.msra.mxu0 0
    %4144 = vmatprep.subr.bf16.mxu0 0
    %4145 = vmatpush1.bf16.msra.mxu0 0
    %4146 = vmatprep.subr.bf16.mxu0 0
    %4147 = vmatpush1.bf16.msra.mxu0 0
    %4148 = vmatprep.subr.bf16.mxu0 0
    %4149 = vmatpush1.bf16.msra.mxu0 0
    %4150 = vmatprep.subr.bf16.mxu0 0
    %4151 = vmatpush1.bf16.msra.mxu0 0
    %4152 = vmatprep.mubr.bf16.mxu0 0
    %4153 = vmatmul.mubr.bf16.gmra.mrb[0].mxu0 %v4115
    %v4154 = vpop.f32.mrb[0].mxu0
    %v4155 = vadd.f32 0.0, %v4154
    %v4156 = vpop.f32.mrb[0].mxu0
    %v4157 = vpop.f32.mrb[0].mxu0
    %v4158 = vpop.f32.mrb[0].mxu0
    %4159 = vdwg.mxu0
    %vm4160 = vcmask 60416
    %4161 = vst.msk [vmem:[#allocation11] sm:$0xf] %vm4160, %v1071
    %4162 = vst.msk [vmem:[#allocation11 + $0x4] sm:$0xf] %vm4160, %v1968
    %4163 = vst.msk [vmem:[#allocation11 + $0x8] sm:$0xf] %vm4160, %v2872
    %4164 = vst.msk [vmem:[#allocation11 + $0xc] sm:$0xf] %vm4160, %v3768
    %4165 = vst.msk [vmem:[#allocation11 + $0x10] sm:$0xf] %vm4160, %v1072
    %4166 = vst.msk [vmem:[#allocation11 + $0x14] sm:$0xf] %vm4160, %v1969
    %4167 = vst.msk [vmem:[#allocation11 + $0x18] sm:$0xf] %vm4160, %v2873
    %4168 = vst.msk [vmem:[#allocation11 + $0x1c] sm:$0xf] %vm4160, %v3769
    %4169 = vst.msk [vmem:[#allocation11 + $0x20] sm:$0xf] %vm4160, %v1073
    %4170 = vst.msk [vmem:[#allocation11 + $0x24] sm:$0xf] %vm4160, %v1970
    %4171 = vst.msk [vmem:[#allocation11 + $0x28] sm:$0xf] %vm4160, %v2874
    %4172 = vst.msk [vmem:[#allocation11 + $0x2c] sm:$0xf] %vm4160, %v3770
    %4173 = vst.msk [vmem:[#allocation11 + $0x30] sm:$0xf] %vm4160, %v1074
    %4174 = vst.msk [vmem:[#allocation11 + $0x34] sm:$0xf] %vm4160, %v1971
    %4175 = vst.msk [vmem:[#allocation11 + $0x38] sm:$0xf] %vm4160, %v2875
    %4176 = vst.msk [vmem:[#allocation11 + $0x3c] sm:$0xf] %vm4160, %v3771
    %4177 = vst.msk [vmem:[#allocation11 + $0x40] sm:$0xf] %vm4160, %v1075
    %4178 = vst.msk [vmem:[#allocation11 + $0x44] sm:$0xf] %vm4160, %v1972
    %4179 = vst.msk [vmem:[#allocation11 + $0x48] sm:$0xf] %vm4160, %v2876
    %4180 = vst.msk [vmem:[#allocation11 + $0x4c] sm:$0xf] %vm4160, %v3772
    %4181 = vst.msk [vmem:[#allocation11 + $0x50] sm:$0xf] %vm4160, %v1076
    %4182 = vst.msk [vmem:[#allocation11 + $0x54] sm:$0xf] %vm4160, %v1973
    %4183 = vst.msk [vmem:[#allocation11 + $0x58] sm:$0xf] %vm4160, %v2877
    %4184 = vst.msk [vmem:[#allocation11 + $0x5c] sm:$0xf] %vm4160, %v3773
    %4185 = vst.msk [vmem:[#allocation11 + $0x60] sm:$0xf] %vm4160, %v1077
    %4186 = vst.msk [vmem:[#allocation11 + $0x64] sm:$0xf] %vm4160, %v1974
    %4187 = vst.msk [vmem:[#allocation11 + $0x68] sm:$0xf] %vm4160, %v2878
    %4188 = vst.msk [vmem:[#allocation11 + $0x6c] sm:$0xf] %vm4160, %v3774
    %4189 = vst.msk [vmem:[#allocation11 + $0x70] sm:$0xf] %vm4160, %v1078
    %4190 = vst.msk [vmem:[#allocation11 + $0x74] sm:$0xf] %vm4160, %v1975
    %4191 = vst.msk [vmem:[#allocation11 + $0x78] sm:$0xf] %vm4160, %v2879
    %4192 = vst.msk [vmem:[#allocation11 + $0x7c] sm:$0xf] %vm4160, %v3775
    %4201 = vrot.lane.b32.xlu0 %v2020, 32
    %v4202 = vpop.permute.xlu0 %4201
    %4203 = vrot.lane.b32.xlu0 %v2069, 32
    %v4204 = vpop.permute.xlu0 %4203
    %4205 = vrot.lane.b32.xlu0 %v2118, 32
    %v4206 = vpop.permute.xlu0 %4205
    %4207 = vrot.lane.b32.xlu0 %v2167, 32
    %v4208 = vpop.permute.xlu0 %4207
    %4209 = vrot.lane.b32.xlu0 %v2216, 32
    %v4210 = vpop.permute.xlu0 %4209
    %4211 = vrot.lane.b32.xlu0 %v2265, 32
    %v4212 = vpop.permute.xlu0 %4211
    %4213 = vrot.lane.b32.xlu0 %v2314, 32
    %v4214 = vpop.permute.xlu0 %4213
    %4215 = vrot.lane.b32.xlu0 %v2363, 32
    %v4216 = vpop.permute.xlu0 %4215
    %4233 = vrot.lane.b32.xlu0 %v2923, 64
    %v4234 = vpop.permute.xlu0 %4233
    %4235 = vrot.lane.b32.xlu0 %v2971, 64
    %v4236 = vpop.permute.xlu0 %4235
    %4237 = vrot.lane.b32.xlu0 %v3019, 64
    %v4238 = vpop.permute.xlu0 %4237
    %4239 = vrot.lane.b32.xlu0 %v3067, 64
    %v4240 = vpop.permute.xlu0 %4239
    %4241 = vrot.lane.b32.xlu0 %v3115, 64
    %v4242 = vpop.permute.xlu0 %4241
    %4243 = vrot.lane.b32.xlu0 %v3163, 64
    %v4244 = vpop.permute.xlu0 %4243
    %4245 = vrot.lane.b32.xlu0 %v3211, 64
    %v4246 = vpop.permute.xlu0 %4245
    %4247 = vrot.lane.b32.xlu0 %v3259, 64
    %v4248 = vpop.permute.xlu0 %4247
    %4265 = vrot.lane.b32.xlu0 %v3819, 96
    %v4266 = vpop.permute.xlu0 %4265
    %4267 = vrot.lane.b32.xlu0 %v3867, 96
    %v4268 = vpop.permute.xlu0 %4267
    %4269 = vrot.lane.b32.xlu0 %v3915, 96
    %v4270 = vpop.permute.xlu0 %4269
    %4271 = vrot.lane.b32.xlu0 %v3963, 96
    %v4272 = vpop.permute.xlu0 %4271
    %4273 = vrot.lane.b32.xlu0 %v4011, 96
    %v4274 = vpop.permute.xlu0 %4273
    %4275 = vrot.lane.b32.xlu0 %v4059, 96
    %v4276 = vpop.permute.xlu0 %4275
    %4277 = vrot.lane.b32.xlu0 %v4107, 96
    %v4278 = vpop.permute.xlu0 %4277
    %4279 = vrot.lane.b32.xlu0 %v4155, 96
    %v4280 = vpop.permute.xlu0 %4279
    %v4289 = vsel %vm469, %v1121, %v4202
    %v4290 = vsel %vm469, %v1167, %v4204
    %v4291 = vsel %vm469, %v1213, %v4206
    %v4292 = vsel %vm469, %v1259, %v4208
    %v4293 = vsel %vm469, %v1305, %v4210
    %v4294 = vsel %vm469, %v1351, %v4212
    %v4295 = vsel %vm469, %v1397, %v4214
    %v4296 = vsel %vm469, %v1443, %v4216
    %vm4297 = vcmask 523264
    %v4298 = vsel %vm4297, %v4289, %v4234
    %v4299 = vsel %vm4297, %v4290, %v4236
    %v4300 = vsel %vm4297, %v4291, %v4238
    %v4301 = vsel %vm4297, %v4292, %v4240
    %v4302 = vsel %vm4297, %v4293, %v4242
    %v4303 = vsel %vm4297, %v4294, %v4244
    %v4304 = vsel %vm4297, %v4295, %v4246
    %v4305 = vsel %vm4297, %v4296, %v4248
    %vm4306 = vcmask 785408
    %v4307 = vsel %vm4306, %v4298, %v4266
    %v4308 = vsel %vm4306, %v4299, %v4268
    %v4309 = vsel %vm4306, %v4300, %v4270
    %v4310 = vsel %vm4306, %v4301, %v4272
    %v4311 = vsel %vm4306, %v4302, %v4274
    %v4312 = vsel %vm4306, %v4303, %v4276
    %v4313 = vsel %vm4306, %v4304, %v4278
    %v4314 = vsel %vm4306, %v4305, %v4280
    %v4315 = vpack.c.bf16 %v4308, %v4307
    %v4316 = vpack.c.bf16 %v4310, %v4309
    %v4317 = vpack.c.bf16 %v4312, %v4311
    %v4318 = vpack.c.bf16 %v4314, %v4313
    %v4319 = vld [vmem:[#allocation5] sm:$0xf]
    %v4320 = vld [vmem:[#allocation5 + $0x4] sm:$0xf]
    %v4321 = vld [vmem:[#allocation5 + $0x8] sm:$0xf]
    %v4322 = vld [vmem:[#allocation5 + $0xc] sm:$0xf]
    %v4323 = vld [vmem:[#allocation5 + $0x10] sm:$0xf]
    %v4324 = vld [vmem:[#allocation5 + $0x14] sm:$0xf]
    %v4325 = vld [vmem:[#allocation5 + $0x18] sm:$0xf]
    %v4326 = vld [vmem:[#allocation5 + $0x1c] sm:$0xf]
    %v4327 = vld [vmem:[#allocation5 + $0x20] sm:$0xf]
    %v4328 = vld [vmem:[#allocation5 + $0x24] sm:$0xf]
    %v4329 = vld [vmem:[#allocation5 + $0x28] sm:$0xf]
    %v4330 = vld [vmem:[#allocation5 + $0x2c] sm:$0xf]
    %v4331 = vld [vmem:[#allocation5 + $0x30] sm:$0xf]
    %v4332 = vld [vmem:[#allocation5 + $0x34] sm:$0xf]
    %v4333 = vld [vmem:[#allocation5 + $0x38] sm:$0xf]
    %v4334 = vld [vmem:[#allocation5 + $0x3c] sm:$0xf]
    %v4351 = vunpack.c.l.b16 %v4319
    %v4352 = vunpack.c.l.b16 %v4320
    %v4353 = vunpack.c.l.b16 %v4321
    %v4354 = vunpack.c.l.b16 %v4322
    %v4355 = vunpack.c.l.b16 %v4323
    %v4356 = vunpack.c.l.b16 %v4324
    %v4357 = vunpack.c.l.b16 %v4325
    %v4358 = vunpack.c.l.b16 %v4326
    %v4359 = vunpack.c.l.b16 %v4327
    %v4360 = vunpack.c.l.b16 %v4328
    %v4361 = vunpack.c.l.b16 %v4329
    %v4362 = vunpack.c.l.b16 %v4330
    %v4363 = vunpack.c.l.b16 %v4331
    %v4364 = vunpack.c.l.b16 %v4332
    %v4365 = vunpack.c.l.b16 %v4333
    %v4366 = vunpack.c.l.b16 %v4334
    %v4367 = vpack.c.b16 %v4352, %v4351
    %v4368 = vpack.c.b16 %v4354, %v4353
    %v4369 = vpack.c.b16 %v4356, %v4355
    %v4370 = vpack.c.b16 %v4358, %v4357
    %v4371 = vpack.c.b16 %v4360, %v4359
    %v4372 = vpack.c.b16 %v4362, %v4361
    %v4373 = vpack.c.b16 %v4364, %v4363
    %v4374 = vpack.c.b16 %v4366, %v4365
    %4383 = vmatprep.subr.bf16.mxu0 0
    %4384 = vmatpush1.bf16.msra.mxu0 %v4367
    %4385 = vmatprep.subr.bf16.mxu0 0
    %4386 = vmatpush1.bf16.msra.mxu0 %v4368
    %4387 = vmatprep.subr.bf16.mxu0 0
    %4388 = vmatpush1.bf16.msra.mxu0 %v4369
    %4389 = vmatprep.subr.bf16.mxu0 0
    %4390 = vmatpush1.bf16.msra.mxu0 %v4370
    %4391 = vmatprep.subr.bf16.mxu0 0
    %4392 = vmatpush1.bf16.msra.mxu0 %v4371
    %4393 = vmatprep.subr.bf16.mxu0 0
    %4394 = vmatpush1.bf16.msra.mxu0 %v4372
    %4395 = vmatprep.subr.bf16.mxu0 0
    %4396 = vmatpush1.bf16.msra.mxu0 %v4373
    %4397 = vmatprep.subr.bf16.mxu0 0
    %4398 = vmatpush1.bf16.msra.mxu0 %v4374
    %4399 = vmatprep.subr.bf16.mxu0 0
    %4400 = vmatpush1.bf16.msra.mxu0 0
    %4401 = vmatprep.subr.bf16.mxu0 0
    %4402 = vmatpush1.bf16.msra.mxu0 0
    %4403 = vmatprep.subr.bf16.mxu0 0
    %4404 = vmatpush1.bf16.msra.mxu0 0
    %4405 = vmatprep.subr.bf16.mxu0 0
    %4406 = vmatpush1.bf16.msra.mxu0 0
    %4407 = vmatprep.subr.bf16.mxu0 0
    %4408 = vmatpush1.bf16.msra.mxu0 0
    %4409 = vmatprep.subr.bf16.mxu0 0
    %4410 = vmatpush1.bf16.msra.mxu0 0
    %4411 = vmatprep.subr.bf16.mxu0 0
    %4412 = vmatpush1.bf16.msra.mxu0 0
    %4413 = vmatprep.subr.bf16.mxu0 0
    %4414 = vmatpush1.bf16.msra.mxu0 0
    %4415 = vmatprep.mubr.bf16.mxu0 0
    %4416 = vmatmul.mubr.bf16.gmra.mrb[0].mxu0 %v4315
    %v4417 = vpop.f32.mrb[0].mxu0
    %v4418 = vadd.f32 %v103, %v4417
    %v4419 = vpop.f32.mrb[0].mxu0
    %v4420 = vpop.f32.mrb[0].mxu0
    %v4421 = vadd.f32 %v103, %v4420
    %v4422 = vpop.f32.mrb[0].mxu0
    %4423 = vmatprep.mubr.bf16.mxu0 0
    %4424 = vmatmul.mubr.bf16.gmra.mrb[0].mxu0 %v4316
    %v4425 = vpop.f32.mrb[0].mxu0
    %v4426 = vadd.f32 %v103, %v4425
    %v4427 = vpop.f32.mrb[0].mxu0
    %v4428 = vpop.f32.mrb[0].mxu0
    %v4429 = vadd.f32 %v103, %v4428
    %v4430 = vpop.f32.mrb[0].mxu0
    %4431 = vmatprep.mubr.bf16.mxu0 0
    %4432 = vmatmul.mubr.bf16.gmra.mrb[0].mxu0 %v4317
    %v4433 = vpop.f32.mrb[0].mxu0
    %v4434 = vadd.f32 %v103, %v4433
    %v4435 = vpop.f32.mrb[0].mxu0
    %v4436 = vpop.f32.mrb[0].mxu0
    %v4437 = vadd.f32 %v103, %v4436
    %v4438 = vpop.f32.mrb[0].mxu0
    %4439 = vmatprep.mubr.bf16.mxu0 0
    %4440 = vmatmul.mubr.bf16.gmra.mrb[0].mxu0 %v4318
    %v4441 = vpop.f32.mrb[0].mxu0
    %v4442 = vadd.f32 %v103, %v4441
    %v4443 = vpop.f32.mrb[0].mxu0
    %v4444 = vpop.f32.mrb[0].mxu0
    %v4445 = vadd.f32 %v103, %v4444
    %v4446 = vpop.f32.mrb[0].mxu0
    %4447 = vdwg.mxu0
    %v4448 = vadd.f32 %v4418, %v86
    %v4449 = vadd.f32 %v4421, %v87
    %v4450 = vadd.f32 %v4426, %v88
    %v4451 = vadd.f32 %v4429, %v89
    %v4452 = vadd.f32 %v4434, %v90
    %v4453 = vadd.f32 %v4437, %v91
    %v4454 = vadd.f32 %v4442, %v92
    %v4455 = vadd.f32 %v4445, %v93
    %4456 = vadd.xlane.f32.xlu0 %v4448
    %v4457 = vpop.xlane.xlu0 %4456
    %4458 = vadd.xlane.f32.xlu0 %v4449
    %v4459 = vpop.xlane.xlu0 %4458
    %4460 = vadd.xlane.f32.xlu0 %v4450
    %v4461 = vpop.xlane.xlu0 %4460
    %4462 = vadd.xlane.f32.xlu0 %v4451
    %v4463 = vpop.xlane.xlu0 %4462
    %4464 = vadd.xlane.f32.xlu0 %v4452
    %v4465 = vpop.xlane.xlu0 %4464
    %4466 = vadd.xlane.f32.xlu0 %v4453
    %v4467 = vpop.xlane.xlu0 %4466
    %4468 = vadd.xlane.f32.xlu0 %v4454
    %v4469 = vpop.xlane.xlu0 %4468
    %4470 = vadd.xlane.f32.xlu0 %v4455
    %v4471 = vpop.xlane.xlu0 %4470
    %v4472 = vrcp.pop 128.0
    %v4473 = vmul.f32 %v4457, %v4472
    %v4474 = vmul.f32 %v4459, %v4472
    %v4475 = vmul.f32 %v4461, %v4472
    %v4476 = vmul.f32 %v4463, %v4472
    %v4477 = vmul.f32 %v4465, %v4472
    %v4478 = vmul.f32 %v4467, %v4472
    %v4479 = vmul.f32 %v4469, %v4472
    %v4480 = vmul.f32 %v4471, %v4472
    %v4481 = vsub.f32 %v4448, %v4473
    %v4482 = vsub.f32 %v4449, %v4474
    %v4483 = vsub.f32 %v4450, %v4475
    %v4484 = vsub.f32 %v4451, %v4476
    %v4485 = vsub.f32 %v4452, %v4477
    %v4486 = vsub.f32 %v4453, %v4478
    %v4487 = vsub.f32 %v4454, %v4479
    %v4488 = vsub.f32 %v4455, %v4480
    %v4489 = vmul.f32 %v4481, %v4481
    %v4490 = vmul.f32 %v4482, %v4482
    %v4491 = vmul.f32 %v4483, %v4483
    %v4492 = vmul.f32 %v4484, %v4484
    %v4493 = vmul.f32 %v4485, %v4485
    %v4494 = vmul.f32 %v4486, %v4486
    %v4495 = vmul.f32 %v4487, %v4487
    %v4496 = vmul.f32 %v4488, %v4488
    %4497 = vadd.xlane.f32.xlu0 %v4489
    %v4498 = vpop.xlane.xlu0 %4497
    %4499 = vadd.xlane.f32.xlu0 %v4490
    %v4500 = vpop.xlane.xlu0 %4499
    %4501 = vadd.xlane.f32.xlu0 %v4491
    %v4502 = vpop.xlane.xlu0 %4501
    %4503 = vadd.xlane.f32.xlu0 %v4492
    %v4504 = vpop.xlane.xlu0 %4503
    %4505 = vadd.xlane.f32.xlu0 %v4493
    %v4506 = vpop.xlane.xlu0 %4505
    %4507 = vadd.xlane.f32.xlu0 %v4494
    %v4508 = vpop.xlane.xlu0 %4507
    %4509 = vadd.xlane.f32.xlu0 %v4495
    %v4510 = vpop.xlane.xlu0 %4509
    %4511 = vadd.xlane.f32.xlu0 %v4496
    %v4512 = vpop.xlane.xlu0 %4511
    %v4513 = vmul.f32 %v4498, %v4472
    %v4514 = vmul.f32 %v4500, %v4472
    %v4515 = vmul.f32 %v4502, %v4472
    %v4516 = vmul.f32 %v4504, %v4472
    %v4517 = vmul.f32 %v4506, %v4472
    %v4518 = vmul.f32 %v4508, %v4472
    %v4519 = vmul.f32 %v4510, %v4472
    %v4520 = vmul.f32 %v4512, %v4472
    %v4521 = vadd.f32 %v4513, 1e-05
    %v4522 = vadd.f32 %v4514, 1e-05
    %v4523 = vadd.f32 %v4515, 1e-05
    %v4524 = vadd.f32 %v4516, 1e-05
    %v4525 = vadd.f32 %v4517, 1e-05
    %v4526 = vadd.f32 %v4518, 1e-05
    %v4527 = vadd.f32 %v4519, 1e-05
    %v4528 = vadd.f32 %v4520, 1e-05
    %v4529 = vrsqrt.pop %v4521
    %v4530 = vrsqrt.pop %v4522
    %v4531 = vrsqrt.pop %v4523
    %v4532 = vrsqrt.pop %v4524
    %v4533 = vrsqrt.pop %v4525
    %v4534 = vrsqrt.pop %v4526
    %v4535 = vrsqrt.pop %v4527
    %v4536 = vrsqrt.pop %v4528
    %v4537 = vmul.f32 %v4481, %v4529
    %v4538 = vmul.f32 %v4482, %v4530
    %v4539 = vmul.f32 %v4483, %v4531
    %v4540 = vmul.f32 %v4484, %v4532
    %v4541 = vmul.f32 %v4485, %v4533
    %v4542 = vmul.f32 %v4486, %v4534
    %v4543 = vmul.f32 %v4487, %v4535
    %v4544 = vmul.f32 %v4488, %v4536
    %v4545 = vmul.f32 %v4537, %v104
    %v4546 = vmul.f32 %v4538, %v104
    %v4547 = vmul.f32 %v4539, %v104
    %v4548 = vmul.f32 %v4540, %v104
    %v4549 = vmul.f32 %v4541, %v104
    %v4550 = vmul.f32 %v4542, %v104
    %v4551 = vmul.f32 %v4543, %v104
    %v4552 = vmul.f32 %v4544, %v104
    %v4553 = vadd.f32 %v4545, %v105
    %v4554 = vadd.f32 %v4546, %v105
    %v4555 = vadd.f32 %v4547, %v105
    %v4556 = vadd.f32 %v4548, %v105
    %v4557 = vadd.f32 %v4549, %v105
    %v4558 = vadd.f32 %v4550, %v105
    %v4559 = vadd.f32 %v4551, %v105
    %v4560 = vadd.f32 %v4552, %v105
    %4562 = vset.pattern.permute.xlu0 0
    %4563 = vperm.xlu0 %4562, %v94
    %v4564 = vpop.permute.xlu0 %4563
    %4567 = vset.pattern.permute.xlu0 0
    %4568 = vperm.xlu0 %4567, %v95
    %v4569 = vpop.permute.xlu0 %4568
    %4572 = vset.pattern.permute.xlu0 0
    %4573 = vperm.xlu0 %4572, %v96
    %v4574 = vpop.permute.xlu0 %4573
    %4577 = vset.pattern.permute.xlu0 0
    %4578 = vperm.xlu0 %4577, %v97
    %v4579 = vpop.permute.xlu0 %4578
    %4582 = vset.pattern.permute.xlu0 0
    %4583 = vperm.xlu0 %4582, %v98
    %v4584 = vpop.permute.xlu0 %4583
    %4587 = vset.pattern.permute.xlu0 0
    %4588 = vperm.xlu0 %4587, %v99
    %v4589 = vpop.permute.xlu0 %4588
    %4592 = vset.pattern.permute.xlu0 0
    %4593 = vperm.xlu0 %4592, %v100
    %v4594 = vpop.permute.xlu0 %4593
    %4597 = vset.pattern.permute.xlu0 0
    %4598 = vperm.xlu0 %4597, %v101
    %v4599 = vpop.permute.xlu0 %4598
    %v4601 = vmul.f32 %v4553, %v4564
    %v4602 = vmul.f32 %v4554, %v4569
    %v4603 = vmul.f32 %v4555, %v4574
    %v4604 = vmul.f32 %v4556, %v4579
    %v4605 = vmul.f32 %v4557, %v4584
    %v4606 = vmul.f32 %v4558, %v4589
    %v4607 = vmul.f32 %v4559, %v4594
    %v4608 = vmul.f32 %v4560, %v4599
    %v4609 = vpack.c.bf16 %v4602, %v4601
    %v4610 = vpack.c.bf16 %v4604, %v4603
    %v4611 = vpack.c.bf16 %v4606, %v4605
    %v4612 = vpack.c.bf16 %v4608, %v4607
    %v4613 = vld [vmem:[#allocation7] sm:$0xff]
    %v4614 = vld [vmem:[#allocation7 + $0x8] sm:$0xff]
    %v4615 = vld [vmem:[#allocation7 + $0x10] sm:$0xff]
    %v4616 = vld [vmem:[#allocation7 + $0x18] sm:$0xff]
    %v4617 = vld [vmem:[#allocation7 + $0x20] sm:$0xff]
    %v4618 = vld [vmem:[#allocation7 + $0x28] sm:$0xff]
    %v4619 = vld [vmem:[#allocation7 + $0x30] sm:$0xff]
    %v4620 = vld [vmem:[#allocation7 + $0x38] sm:$0xff]
    %v4621 = vld [vmem:[#allocation7 + $0x40] sm:$0xff]
    %v4622 = vld [vmem:[#allocation7 + $0x48] sm:$0xff]
    %v4623 = vld [vmem:[#allocation7 + $0x50] sm:$0xff]
    %v4624 = vld [vmem:[#allocation7 + $0x58] sm:$0xff]
    %v4625 = vld [vmem:[#allocation7 + $0x60] sm:$0xff]
    %v4626 = vld [vmem:[#allocation7 + $0x68] sm:$0xff]
    %v4627 = vld [vmem:[#allocation7 + $0x70] sm:$0xff]
    %v4628 = vld [vmem:[#allocation7 + $0x78] sm:$0xff]
    %v4630 = vlaneseq
    %v4631 = vshrl.u32 %v4630, 7
    %v4632 = vsub.s32 0, %v4631
    %v4633 = vrot.slane %v107, %v4632
    %v4634 = vlaneseq
    %v4635 = vshrl.u32 %v4634, 7
    %v4636 = vsub.s32 1, %v4635
    %v4637 = vrot.slane %v107, %v4636
    %v4656 = vunpack.c.l.b16 %v4613
    %v4657 = vunpack.c.h.b16 %v4613
    %v4658 = vunpack.c.l.b16 %v4614
    %v4659 = vunpack.c.h.b16 %v4614
    %v4660 = vunpack.c.l.b16 %v4615
    %v4661 = vunpack.c.h.b16 %v4615
    %v4662 = vunpack.c.l.b16 %v4616
    %v4663 = vunpack.c.h.b16 %v4616
    %v4664 = vunpack.c.l.b16 %v4617
    %v4665 = vunpack.c.h.b16 %v4617
    %v4666 = vunpack.c.l.b16 %v4618
    %v4667 = vunpack.c.h.b16 %v4618
    %v4668 = vunpack.c.l.b16 %v4619
    %v4669 = vunpack.c.h.b16 %v4619
    %v4670 = vunpack.c.l.b16 %v4620
    %v4671 = vunpack.c.h.b16 %v4620
    %v4672 = vunpack.c.l.b16 %v4621
    %v4673 = vunpack.c.h.b16 %v4621
    %v4674 = vunpack.c.l.b16 %v4622
    %v4675 = vunpack.c.h.b16 %v4622
    %v4676 = vunpack.c.l.b16 %v4623
    %v4677 = vunpack.c.h.b16 %v4623
    %v4678 = vunpack.c.l.b16 %v4624
    %v4679 = vunpack.c.h.b16 %v4624
    %v4680 = vunpack.c.l.b16 %v4625
    %v4681 = vunpack.c.h.b16 %v4625
    %v4682 = vunpack.c.l.b16 %v4626
    %v4683 = vunpack.c.h.b16 %v4626
    %v4684 = vunpack.c.l.b16 %v4627
    %v4685 = vunpack.c.h.b16 %v4627
    %v4686 = vunpack.c.l.b16 %v4628
    %v4687 = vunpack.c.h.b16 %v4628
    %v4688 = vpack.c.b16 %v4658, %v4656
    %v4689 = vpack.c.b16 %v4659, %v4657
    %v4690 = vpack.c.b16 %v4662, %v4660
    %v4691 = vpack.c.b16 %v4663, %v4661
    %v4692 = vpack.c.b16 %v4666, %v4664
    %v4693 = vpack.c.b16 %v4667, %v4665
    %v4694 = vpack.c.b16 %v4670, %v4668
    %v4695 = vpack.c.b16 %v4671, %v4669
    %v4696 = vpack.c.b16 %v4674, %v4672
    %v4697 = vpack.c.b16 %v4675, %v4673
    %v4698 = vpack.c.b16 %v4678, %v4676
    %v4699 = vpack.c.b16 %v4679, %v4677
    %v4700 = vpack.c.b16 %v4682, %v4680
    %v4701 = vpack.c.b16 %v4683, %v4681
    %v4702 = vpack.c.b16 %v4686, %v4684
    %v4703 = vpack.c.b16 %v4687, %v4685
    %4720 = vmatprep.subr.bf16.mxu0 %v4689
    %4721 = vmatpush1.bf16.msra.mxu0 %v4688
    %4722 = vmatprep.subr.bf16.mxu0 %v4691
    %4723 = vmatpush1.bf16.msra.mxu0 %v4690
    %4724 = vmatprep.subr.bf16.mxu0 %v4693
    %4725 = vmatpush1.bf16.msra.mxu0 %v4692
    %4726 = vmatprep.subr.bf16.mxu0 %v4695
    %4727 = vmatpush1.bf16.msra.mxu0 %v4694
    %4728 = vmatprep.subr.bf16.mxu0 %v4697
    %4729 = vmatpush1.bf16.msra.mxu0 %v4696
    %4730 = vmatprep.subr.bf16.mxu0 %v4699
    %4731 = vmatpush1.bf16.msra.mxu0 %v4698
    %4732 = vmatprep.subr.bf16.mxu0 %v4701
    %4733 = vmatpush1.bf16.msra.mxu0 %v4700
    %4734 = vmatprep.subr.bf16.mxu0 %v4703
    %4735 = vmatpush1.bf16.msra.mxu0 %v4702
    %4736 = vmatprep.subr.bf16.mxu0 0
    %4737 = vmatpush1.bf16.msra.mxu0 0
    %4738 = vmatprep.subr.bf16.mxu0 0
    %4739 = vmatpush1.bf16.msra.mxu0 0
    %4740 = vmatprep.subr.bf16.mxu0 0
    %4741 = vmatpush1.bf16.msra.mxu0 0
    %4742 = vmatprep.subr.bf16.mxu0 0
    %4743 = vmatpush1.bf16.msra.mxu0 0
    %4744 = vmatprep.subr.bf16.mxu0 0
    %4745 = vmatpush1.bf16.msra.mxu0 0
    %4746 = vmatprep.subr.bf16.mxu0 0
    %4747 = vmatpush1.bf16.msra.mxu0 0
    %4748 = vmatprep.subr.bf16.mxu0 0
    %4749 = vmatpush1.bf16.msra.mxu0 0
    %4750 = vmatprep.subr.bf16.mxu0 0
    %4751 = vmatpush1.bf16.msra.mxu0 0
    %4752 = vmatprep.mubr.bf16.mxu0 0
    %4753 = vmatmul.mubr.bf16.gmra.mrb[0].mxu0 %v4609
    %v4754 = vpop.f32.mrb[0].mxu0
    %v4755 = vadd.f32 %v4633, %v4754
    %v4756 = vpop.f32.mrb[0].mxu0
    %v4757 = vadd.f32 %v4637, %v4756
    %v4758 = vpop.f32.mrb[0].mxu0
    %v4759 = vadd.f32 %v4633, %v4758
    %v4760 = vpop.f32.mrb[0].mxu0
    %v4761 = vadd.f32 %v4637, %v4760
    %4762 = vmatprep.mubr.bf16.mxu0 0
    %4763 = vmatmul.mubr.bf16.gmra.mrb[0].mxu0 %v4610
    %v4764 = vpop.f32.mrb[0].mxu0
    %v4765 = vadd.f32 %v4633, %v4764
    %v4766 = vpop.f32.mrb[0].mxu0
    %v4767 = vadd.f32 %v4637, %v4766
    %v4768 = vpop.f32.mrb[0].mxu0
    %v4769 = vadd.f32 %v4633, %v4768
    %v4770 = vpop.f32.mrb[0].mxu0
    %v4771 = vadd.f32 %v4637, %v4770
    %4772 = vmatprep.mubr.bf16.mxu0 0
    %4773 = vmatmul.mubr.bf16.gmra.mrb[0].mxu0 %v4611
    %v4774 = vpop.f32.mrb[0].mxu0
    %v4775 = vadd.f32 %v4633, %v4774
    %v4776 = vpop.f32.mrb[0].mxu0
    %v4777 = vadd.f32 %v4637, %v4776
    %v4778 = vpop.f32.mrb[0].mxu0
    %v4779 = vadd.f32 %v4633, %v4778
    %v4780 = vpop.f32.mrb[0].mxu0
    %v4781 = vadd.f32 %v4637, %v4780
    %4782 = vmatprep.mubr.bf16.mxu0 0
    %4783 = vmatmul.mubr.bf16.gmra.mrb[0].mxu0 %v4612
    %v4784 = vpop.f32.mrb[0].mxu0
    %v4785 = vadd.f32 %v4633, %v4784
    %v4786 = vpop.f32.mrb[0].mxu0
    %v4787 = vadd.f32 %v4637, %v4786
    %v4788 = vpop.f32.mrb[0].mxu0
    %v4789 = vadd.f32 %v4633, %v4788
    %v4790 = vpop.f32.mrb[0].mxu0
    %v4791 = vadd.f32 %v4637, %v4790
    %4792 = vdwg.mxu0
    %v4793 = vmax.f32 %v4755, 0.0
    %v4794 = vmax.f32 %v4757, 0.0
    %v4795 = vmax.f32 %v4759, 0.0
    %v4796 = vmax.f32 %v4761, 0.0
    %v4797 = vmax.f32 %v4765, 0.0
    %v4798 = vmax.f32 %v4767, 0.0
    %v4799 = vmax.f32 %v4769, 0.0
    %v4800 = vmax.f32 %v4771, 0.0
    %v4801 = vmax.f32 %v4775, 0.0
    %v4802 = vmax.f32 %v4777, 0.0
    %v4803 = vmax.f32 %v4779, 0.0
    %v4804 = vmax.f32 %v4781, 0.0
    %v4805 = vmax.f32 %v4785, 0.0
    %v4806 = vmax.f32 %v4787, 0.0
    %v4807 = vmax.f32 %v4789, 0.0
    %v4808 = vmax.f32 %v4791, 0.0
    %v4809 = vpack.c.bf16 %v4795, %v4793
    %v4810 = vpack.c.bf16 %v4796, %v4794
    %v4811 = vpack.c.bf16 %v4799, %v4797
    %v4812 = vpack.c.bf16 %v4800, %v4798
    %v4813 = vpack.c.bf16 %v4803, %v4801
    %v4814 = vpack.c.bf16 %v4804, %v4802
    %v4815 = vpack.c.bf16 %v4807, %v4805
    %v4816 = vpack.c.bf16 %v4808, %v4806
    %v4817 = vld [vmem:[#allocation8] sm:$0xf]
    %v4818 = vld [vmem:[#allocation8 + $0x4] sm:$0xf]
    %v4819 = vld [vmem:[#allocation8 + $0x8] sm:$0xf]
    %v4820 = vld [vmem:[#allocation8 + $0xc] sm:$0xf]
    %v4821 = vld [vmem:[#allocation8 + $0x10] sm:$0xf]
    %v4822 = vld [vmem:[#allocation8 + $0x14] sm:$0xf]
    %v4823 = vld [vmem:[#allocation8 + $0x18] sm:$0xf]
    %v4824 = vld [vmem:[#allocation8 + $0x1c] sm:$0xf]
    %v4825 = vld [vmem:[#allocation8 + $0x20] sm:$0xf]
    %v4826 = vld [vmem:[#allocation8 + $0x24] sm:$0xf]
    %v4827 = vld [vmem:[#allocation8 + $0x28] sm:$0xf]
    %v4828 = vld [vmem:[#allocation8 + $0x2c] sm:$0xf]
    %v4829 = vld [vmem:[#allocation8 + $0x30] sm:$0xf]
    %v4830 = vld [vmem:[#allocation8 + $0x34] sm:$0xf]
    %v4831 = vld [vmem:[#allocation8 + $0x38] sm:$0xf]
    %v4832 = vld [vmem:[#allocation8 + $0x3c] sm:$0xf]
    %v4833 = vld [vmem:[#allocation8 + $0x40] sm:$0xf]
    %v4834 = vld [vmem:[#allocation8 + $0x44] sm:$0xf]
    %v4835 = vld [vmem:[#allocation8 + $0x48] sm:$0xf]
    %v4836 = vld [vmem:[#allocation8 + $0x4c] sm:$0xf]
    %v4837 = vld [vmem:[#allocation8 + $0x50] sm:$0xf]
    %v4838 = vld [vmem:[#allocation8 + $0x54] sm:$0xf]
    %v4839 = vld [vmem:[#allocation8 + $0x58] sm:$0xf]
    %v4840 = vld [vmem:[#allocation8 + $0x5c] sm:$0xf]
    %v4841 = vld [vmem:[#allocation8 + $0x60] sm:$0xf]
    %v4842 = vld [vmem:[#allocation8 + $0x64] sm:$0xf]
    %v4843 = vld [vmem:[#allocation8 + $0x68] sm:$0xf]
    %v4844 = vld [vmem:[#allocation8 + $0x6c] sm:$0xf]
    %v4845 = vld [vmem:[#allocation8 + $0x70] sm:$0xf]
    %v4846 = vld [vmem:[#allocation8 + $0x74] sm:$0xf]
    %v4847 = vld [vmem:[#allocation8 + $0x78] sm:$0xf]
    %v4848 = vld [vmem:[#allocation8 + $0x7c] sm:$0xf]
    %v4881 = vunpack.c.l.b16 %v4817
    %v4882 = vunpack.c.l.b16 %v4818
    %v4883 = vunpack.c.l.b16 %v4819
    %v4884 = vunpack.c.l.b16 %v4820
    %v4885 = vunpack.c.l.b16 %v4821
    %v4886 = vunpack.c.l.b16 %v4822
    %v4887 = vunpack.c.l.b16 %v4823
    %v4888 = vunpack.c.l.b16 %v4824
    %v4889 = vunpack.c.l.b16 %v4825
    %v4890 = vunpack.c.l.b16 %v4826
    %v4891 = vunpack.c.l.b16 %v4827
    %v4892 = vunpack.c.l.b16 %v4828
    %v4893 = vunpack.c.l.b16 %v4829
    %v4894 = vunpack.c.l.b16 %v4830
    %v4895 = vunpack.c.l.b16 %v4831
    %v4896 = vunpack.c.l.b16 %v4832
    %v4897 = vunpack.c.l.b16 %v4833
    %v4898 = vunpack.c.l.b16 %v4834
    %v4899 = vunpack.c.l.b16 %v4835
    %v4900 = vunpack.c.l.b16 %v4836
    %v4901 = vunpack.c.l.b16 %v4837
    %v4902 = vunpack.c.l.b16 %v4838
    %v4903 = vunpack.c.l.b16 %v4839
    %v4904 = vunpack.c.l.b16 %v4840
    %v4905 = vunpack.c.l.b16 %v4841
    %v4906 = vunpack.c.l.b16 %v4842
    %v4907 = vunpack.c.l.b16 %v4843
    %v4908 = vunpack.c.l.b16 %v4844
    %v4909 = vunpack.c.l.b16 %v4845
    %v4910 = vunpack.c.l.b16 %v4846
    %v4911 = vunpack.c.l.b16 %v4847
    %v4912 = vunpack.c.l.b16 %v4848
    %v4913 = vpack.c.b16 %v4882, %v4881
    %v4914 = vpack.c.b16 %v4884, %v4883
    %v4915 = vpack.c.b16 %v4886, %v4885
    %v4916 = vpack.c.b16 %v4888, %v4887
    %v4917 = vpack.c.b16 %v4890, %v4889
    %v4918 = vpack.c.b16 %v4892, %v4891
    %v4919 = vpack.c.b16 %v4894, %v4893
    %v4920 = vpack.c.b16 %v4896, %v4895
    %v4921 = vpack.c.b16 %v4898, %v4897
    %v4922 = vpack.c.b16 %v4900, %v4899
    %v4923 = vpack.c.b16 %v4902, %v4901
    %v4924 = vpack.c.b16 %v4904, %v4903
    %v4925 = vpack.c.b16 %v4906, %v4905
    %v4926 = vpack.c.b16 %v4908, %v4907
    %v4927 = vpack.c.b16 %v4910, %v4909
    %v4928 = vpack.c.b16 %v4912, %v4911
    %4945 = vmatprep.subr.bf16.mxu0 0
    %4946 = vmatpush1.bf16.msra.mxu0 %v4913
    %4947 = vmatprep.subr.bf16.mxu0 0
    %4948 = vmatpush1.bf16.msra.mxu0 %v4914
    %4949 = vmatprep.subr.bf16.mxu0 0
    %4950 = vmatpush1.bf16.msra.mxu0 %v4915
    %4951 = vmatprep.subr.bf16.mxu0 0
    %4952 = vmatpush1.bf16.msra.mxu0 %v4916
    %4953 = vmatprep.subr.bf16.mxu0 0
    %4954 = vmatpush1.bf16.msra.mxu0 %v4917
    %4955 = vmatprep.subr.bf16.mxu0 0
    %4956 = vmatpush1.bf16.msra.mxu0 %v4918
    %4957 = vmatprep.subr.bf16.mxu0 0
    %4958 = vmatpush1.bf16.msra.mxu0 %v4919
    %4959 = vmatprep.subr.bf16.mxu0 0
    %4960 = vmatpush1.bf16.msra.mxu0 %v4920
    %4961 = vmatprep.subr.bf16.mxu0 0
    %4962 = vmatpush1.bf16.msra.mxu0 %v4921
    %4963 = vmatprep.subr.bf16.mxu0 0
    %4964 = vmatpush1.bf16.msra.mxu0 %v4922
    %4965 = vmatprep.subr.bf16.mxu0 0
    %4966 = vmatpush1.bf16.msra.mxu0 %v4923
    %4967 = vmatprep.subr.bf16.mxu0 0
    %4968 = vmatpush1.bf16.msra.mxu0 %v4924
    %4969 = vmatprep.subr.bf16.mxu0 0
    %4970 = vmatpush1.bf16.msra.mxu0 %v4925
    %4971 = vmatprep.subr.bf16.mxu0 0
    %4972 = vmatpush1.bf16.msra.mxu0 %v4926
    %4973 = vmatprep.subr.bf16.mxu0 0
    %4974 = vmatpush1.bf16.msra.mxu0 %v4927
    %4975 = vmatprep.subr.bf16.mxu0 0
    %4976 = vmatpush1.bf16.msra.mxu0 %v4928
    %4977 = vmatprep.mubr.bf16.mxu0 %v4810
    %4978 = vmatmul.mubr.bf16.gmra.mrb[0].mxu0 %v4809
    %v4979 = vpop.f32.mrb[0].mxu0
    %v4980 = vadd.f32 %v108, %v4979
    %v4981 = vpop.f32.mrb[0].mxu0
    %v4982 = vpop.f32.mrb[0].mxu0
    %v4983 = vadd.f32 %v108, %v4982
    %v4984 = vpop.f32.mrb[0].mxu0
    %4985 = vmatprep.mubr.bf16.mxu0 %v4812
    %4986 = vmatmul.mubr.bf16.gmra.mrb[0].mxu0 %v4811
    %v4987 = vpop.f32.mrb[0].mxu0
    %v4988 = vadd.f32 %v108, %v4987
    %v4989 = vpop.f32.mrb[0].mxu0
    %v4990 = vpop.f32.mrb[0].mxu0
    %v4991 = vadd.f32 %v108, %v4990
    %v4992 = vpop.f32.mrb[0].mxu0
    %4993 = vmatprep.mubr.bf16.mxu0 %v4814
    %4994 = vmatmul.mubr.bf16.gmra.mrb[0].mxu0 %v4813
    %v4995 = vpop.f32.mrb[0].mxu0
    %v4996 = vadd.f32 %v108, %v4995
    %v4997 = vpop.f32.mrb[0].mxu0
    %v4998 = vpop.f32.mrb[0].mxu0
    %v4999 = vadd.f32 %v108, %v4998
    %v5000 = vpop.f32.mrb[0].mxu0
    %5001 = vmatprep.mubr.bf16.mxu0 %v4816
    %5002 = vmatmul.mubr.bf16.gmra.mrb[0].mxu0 %v4815
    %v5003 = vpop.f32.mrb[0].mxu0
    %v5004 = vadd.f32 %v108, %v5003
    %v5005 = vpop.f32.mrb[0].mxu0
    %v5006 = vpop.f32.mrb[0].mxu0
    %v5007 = vadd.f32 %v108, %v5006
    %v5008 = vpop.f32.mrb[0].mxu0
    %5009 = vdwg.mxu0
    %v5010 = vadd.f32 %v4980, %v4601
    %v5011 = vadd.f32 %v4983, %v4602
    %v5012 = vadd.f32 %v4988, %v4603
    %v5013 = vadd.f32 %v4991, %v4604
    %v5014 = vadd.f32 %v4996, %v4605
    %v5015 = vadd.f32 %v4999, %v4606
    %v5016 = vadd.f32 %v5004, %v4607
    %v5017 = vadd.f32 %v5007, %v4608
    %5018 = vadd.xlane.f32.xlu0 %v5010
    %v5019 = vpop.xlane.xlu0 %5018
    %5020 = vadd.xlane.f32.xlu0 %v5011
    %v5021 = vpop.xlane.xlu0 %5020
    %5022 = vadd.xlane.f32.xlu0 %v5012
    %v5023 = vpop.xlane.xlu0 %5022
    %5024 = vadd.xlane.f32.xlu0 %v5013
    %v5025 = vpop.xlane.xlu0 %5024
    %5026 = vadd.xlane.f32.xlu0 %v5014
    %v5027 = vpop.xlane.xlu0 %5026
    %5028 = vadd.xlane.f32.xlu0 %v5015
    %v5029 = vpop.xlane.xlu0 %5028
    %5030 = vadd.xlane.f32.xlu0 %v5016
    %v5031 = vpop.xlane.xlu0 %5030
    %5032 = vadd.xlane.f32.xlu0 %v5017
    %v5033 = vpop.xlane.xlu0 %5032
    %v5034 = vmul.f32 %v5019, %v4472
    %v5035 = vmul.f32 %v5021, %v4472
    %v5036 = vmul.f32 %v5023, %v4472
    %v5037 = vmul.f32 %v5025, %v4472
    %v5038 = vmul.f32 %v5027, %v4472
    %v5039 = vmul.f32 %v5029, %v4472
    %v5040 = vmul.f32 %v5031, %v4472
    %v5041 = vmul.f32 %v5033, %v4472
    %v5042 = vsub.f32 %v5010, %v5034
    %v5043 = vsub.f32 %v5011, %v5035
    %v5044 = vsub.f32 %v5012, %v5036
    %v5045 = vsub.f32 %v5013, %v5037
    %v5046 = vsub.f32 %v5014, %v5038
    %v5047 = vsub.f32 %v5015, %v5039
    %v5048 = vsub.f32 %v5016, %v5040
    %v5049 = vsub.f32 %v5017, %v5041
    %v5050 = vmul.f32 %v5042, %v5042
    %v5051 = vmul.f32 %v5043, %v5043
    %v5052 = vmul.f32 %v5044, %v5044
    %v5053 = vmul.f32 %v5045, %v5045
    %v5054 = vmul.f32 %v5046, %v5046
    %v5055 = vmul.f32 %v5047, %v5047
    %v5056 = vmul.f32 %v5048, %v5048
    %v5057 = vmul.f32 %v5049, %v5049
    %5058 = vadd.xlane.f32.xlu0 %v5050
    %v5059 = vpop.xlane.xlu0 %5058
    %5060 = vadd.xlane.f32.xlu0 %v5051
    %v5061 = vpop.xlane.xlu0 %5060
    %5062 = vadd.xlane.f32.xlu0 %v5052
    %v5063 = vpop.xlane.xlu0 %5062
    %5064 = vadd.xlane.f32.xlu0 %v5053
    %v5065 = vpop.xlane.xlu0 %5064
    %5066 = vadd.xlane.f32.xlu0 %v5054
    %v5067 = vpop.xlane.xlu0 %5066
    %5068 = vadd.xlane.f32.xlu0 %v5055
    %v5069 = vpop.xlane.xlu0 %5068
    %5070 = vadd.xlane.f32.xlu0 %v5056
    %v5071 = vpop.xlane.xlu0 %5070
    %5072 = vadd.xlane.f32.xlu0 %v5057
    %v5073 = vpop.xlane.xlu0 %5072
    %v5074 = vmul.f32 %v5059, %v4472
    %v5075 = vmul.f32 %v5061, %v4472
    %v5076 = vmul.f32 %v5063, %v4472
    %v5077 = vmul.f32 %v5065, %v4472
    %v5078 = vmul.f32 %v5067, %v4472
    %v5079 = vmul.f32 %v5069, %v4472
    %v5080 = vmul.f32 %v5071, %v4472
    %v5081 = vmul.f32 %v5073, %v4472
    %v5082 = vadd.f32 %v5074, 1e-05
    %v5083 = vadd.f32 %v5075, 1e-05
    %v5084 = vadd.f32 %v5076, 1e-05
    %v5085 = vadd.f32 %v5077, 1e-05
    %v5086 = vadd.f32 %v5078, 1e-05
    %v5087 = vadd.f32 %v5079, 1e-05
    %v5088 = vadd.f32 %v5080, 1e-05
    %v5089 = vadd.f32 %v5081, 1e-05
    %v5090 = vrsqrt.pop %v5082
    %v5091 = vrsqrt.pop %v5083
    %v5092 = vrsqrt.pop %v5084
    %v5093 = vrsqrt.pop %v5085
    %v5094 = vrsqrt.pop %v5086
    %v5095 = vrsqrt.pop %v5087
    %v5096 = vrsqrt.pop %v5088
    %v5097 = vrsqrt.pop %v5089
    %v5098 = vmul.f32 %v5042, %v5090
    %v5099 = vmul.f32 %v5043, %v5091
    %v5100 = vmul.f32 %v5044, %v5092
    %v5101 = vmul.f32 %v5045, %v5093
    %v5102 = vmul.f32 %v5046, %v5094
    %v5103 = vmul.f32 %v5047, %v5095
    %v5104 = vmul.f32 %v5048, %v5096
    %v5105 = vmul.f32 %v5049, %v5097
    %v5106 = vmul.f32 %v5098, %v109
    %v5107 = vmul.f32 %v5099, %v109
    %v5108 = vmul.f32 %v5100, %v109
    %v5109 = vmul.f32 %v5101, %v109
    %v5110 = vmul.f32 %v5102, %v109
    %v5111 = vmul.f32 %v5103, %v109
    %v5112 = vmul.f32 %v5104, %v109
    %v5113 = vmul.f32 %v5105, %v109
    %v5114 = vadd.f32 %v5106, %v110
    %v5115 = vadd.f32 %v5107, %v110
    %v5116 = vadd.f32 %v5108, %v110
    %v5117 = vadd.f32 %v5109, %v110
    %v5118 = vadd.f32 %v5110, %v110
    %v5119 = vadd.f32 %v5111, %v110
    %v5120 = vadd.f32 %v5112, %v110
    %v5121 = vadd.f32 %v5113, %v110
    %v5122 = vmul.f32 %v5114, %v4564
    %v5123 = vmul.f32 %v5115, %v4569
    %v5124 = vmul.f32 %v5116, %v4574
    %v5125 = vmul.f32 %v5117, %v4579
    %v5126 = vmul.f32 %v5118, %v4584
    %v5127 = vmul.f32 %v5119, %v4589
    %v5128 = vmul.f32 %v5120, %v4594
    %v5129 = vmul.f32 %v5121, %v4599
    %5130 = vst [vmem:[#allocation10] sm:$0xff] %v5122
    %5131 = vst [vmem:[#allocation10 + $0x8] sm:$0xff] %v5123
    %5132 = vst [vmem:[#allocation10 + $0x10] sm:$0xff] %v5124
    %5133 = vst [vmem:[#allocation10 + $0x18] sm:$0xff] %v5125
    %5134 = vst [vmem:[#allocation10 + $0x20] sm:$0xff] %v5126
    %5135 = vst [vmem:[#allocation10 + $0x28] sm:$0xff] %v5127
    %5136 = vst [vmem:[#allocation10 + $0x30] sm:$0xff] %v5128
    %5137 = vst [vmem:[#allocation10 + $0x38] sm:$0xff] %v5129
    // Predicated region
    $region46: #{tpu_custom_call.1} parent=1 // pred_check
      _
    $region47: #{tpu_custom_call.1} parent=1 // pred_check_branch
      %5139 = sbr.rel (0) target = $region49
    $region48: #{tpu_custom_call.1} parent=1 // pred_region
      %s5141 = ssub.s32 1024, 1024
      %5142 = vsyncadd [#allocation4], %s5141
      %s5143 = sshll.u32 [#allocation10], 4
      %s5144 = int_to_ptr.vmem [resolvable:$true] %s5143
      %5149 = dma.vmem_to_hbm [thread:$0]  %s5144, 1024, %s7, [#allocation4], 128, 128, 8
    $region49: #{tpu_custom_call.1} parent=1 // pred_fallthru
      _
    // Predicated region
    $region50: #{tpu_custom_call.1} parent=1 // pred_check
      _
    $region51: #{tpu_custom_call.1} parent=1 // pred_check_branch
      %5151 = sbr.rel (0) target = $region53
    $region52: #{tpu_custom_call.1} parent=1 // pred_region
      %s5153 = ssub.s32 2048, 2048
      %5154 = vsyncadd [#allocation12], %s5153
      %s5155 = sshll.u32 [#allocation11], 4
      %s5156 = int_to_ptr.vmem [resolvable:$true] %s5155
      %5161 = dma.vmem_to_hbm [thread:$0]  %s5156, 2048, %s8, [#allocation12], 64, 64, 4
    $region53: #{tpu_custom_call.1} parent=1 // pred_fallthru
      _
    // Predicated region
    $region54: #{tpu_custom_call.1} parent=1 // pred_check
      _
    $region55: #{tpu_custom_call.1} parent=1 // pred_check_branch
      %5163 = sbr.rel (0) target = $region57
    $region56: #{tpu_custom_call.1} parent=1 // pred_region
      %5164 = dma.done [#allocation4], 1024
    $region57: #{tpu_custom_call.1} parent=1 // pred_fallthru
      _
    // Predicated region
    $region58: #{tpu_custom_call.1} parent=1 // pred_check
      _
    $region59: #{tpu_custom_call.1} parent=1 // pred_check_branch
      %5166 = sbr.rel (0) target = $region61
    $region60: #{tpu_custom_call.1} parent=1 // pred_region
      %5167 = dma.done [#allocation12], 2048
    $region61: #{tpu_custom_call.1} parent=1 // pred_fallthru
      _
    %5168 = vsyncpa [#allocation3], 1
    %5169 = vsyncpa [#allocation6], 1
    %5170 = vsyncpa [#allocation9], 1
    %5171 = vsyncpa [#allocation4], 1
    %5172 = vsyncpa [#allocation12], 1

</llo_original>
